<compile_context>
chip_gen: v6e
topology: v6e:2x2x1
jax: 0.10.0
libtpu: 0.0.40
codegen_flags: <defaults>
</compile_context>

<pallas_src>
import functools

import jax
import jax.numpy as jnp
from jax.experimental import pallas as pl
from jax.experimental.pallas import tpu as pltpu

C_OUT = 128      # Conv2d out_channels
K_H = 5          # Conv2d kernel height
K_W = 1024       # Conv2d kernel width (== input width, so conv W_out == 1)
H_IN = 100       # input height (== MaxPool kernel height, so pooled H == 1)
LSTM_IN = 12     # nn.LSTM input_size
HIDDEN = 128     # nn.LSTM hidden_size
N_CLS = 2        # f_fc out_features
EPS = 1e-5       # BatchNorm2d eps
HALO = 8         # per-sample halo rows (>= K_H//2, multiple of 8 -> aligned f32 stores)


# ------------------------------- Pallas kernel -------------------------------

def debd_kernel(x_ref, cw_ref, g_ref, b_ref,
                y_ref, wih_ref, whh_ref, lb_ref,
                wmix_ref, fcw_ref, fcb_ref, o_ref, hal_ref,
                *, n, h_out, k_h):
    co = g_ref.shape[-1]
    hid = whh_ref.shape[0]
    pad = k_h // 2

    # ---------------- CNN branch ----------------
    # Conv2d(1, co, (k_h, W)) with W == input width: one stacked all-taps MXU
    # matmul over the whole unpadded (n*h_out, W) slab -> (n*h_out, k_h*co) f32.
    xb = x_ref[...].astype(jnp.bfloat16)
    y_taps = jnp.dot(xb, cw_ref[...], preferred_element_type=jnp.float32)

    # Stage per-sample bands into a zero-filled halo scratch (sublane-aligned
    # 640-lane f32 stores at offset HALO). The halo zeros reproduce the conv's
    # padding=(pad, 0), so every tap window below is a plain full-height slice.
    hal_ref[...] = jnp.zeros(hal_ref.shape, jnp.float32)
    for ni in range(n):
        hal_ref[ni, HALO:HALO + h_out, :] = y_taps[ni * h_out:(ni + 1) * h_out, :]

    # Shifted-tap accumulation on the 128-lane f32 outputs + one-pass
    # sufficient statistics (BN batch stats and per-sample pool max/min).
    # Only (n, co)-sized tensors survive this loop.
    sum_c = jnp.zeros((1, co), jnp.float32)
    ssq_c = jnp.zeros((1, co), jnp.float32)
    mx_rows, mn_rows = [], []
    for ni in range(n):
        a = None
        for k in range(k_h):
            r0 = HALO + k - pad
            part = hal_ref[ni, r0:r0 + h_out, k * co:(k + 1) * co]
            a = part if a is None else a + part            # conv out, sample ni
        sum_c = sum_c + jnp.sum(a, axis=0, keepdims=True)
        ssq_c = ssq_c + jnp.sum(a * a, axis=0, keepdims=True)
        mx_rows.append(jnp.max(a, axis=0, keepdims=True))
        mn_rows.append(jnp.min(a, axis=0, keepdims=True))
    mx = jnp.concatenate(mx_rows, axis=0)                  # (n, co)
    mn = jnp.concatenate(mn_rows, axis=0)                  # (n, co)

    # BatchNorm2d (training-mode batch statistics, biased var) folded to a
    # per-channel (scale, shift); the conv bias is exactly cancelled by the
    # batch mean so it is never added.  BN + ReLU are applied only to the
    # pooled rows: max_r(relu(bn(x))) == relu((scale>=0 ? max : min)*scale+shift).
    cnt = float(n * h_out)
    mean = sum_c * (1.0 / cnt)
    var = jnp.maximum(ssq_c * (1.0 / cnt) - mean * mean, 0.0)
    scale = g_ref[...] * jax.lax.rsqrt(var + EPS)
    shift = b_ref[...] - mean * scale
    cnn = jnp.maximum(jnp.where(scale >= 0.0, mx, mn) * scale + shift, 0.0)  # (n, co)

    # ---------------- LSTM branch ----------------
    # Whole recurrence stays in VMEM; gate slices are 128-lane aligned (hid==128).
    t_len = y_ref.shape[1]
    h = jnp.zeros((n, hid), jnp.float32)
    c = jnp.zeros((n, hid), jnp.float32)
    for t in range(t_len):   # static & tiny: the spec's reshape forces T == 1
        gates = (jnp.dot(y_ref[:, t, :], wih_ref[...], preferred_element_type=jnp.float32)
                 + jnp.dot(h, whh_ref[...], preferred_element_type=jnp.float32)
                 + lb_ref[...])
        i_g = jax.nn.sigmoid(gates[:, 0 * hid:1 * hid])
        f_g = jax.nn.sigmoid(gates[:, 1 * hid:2 * hid])
        g_g = jnp.tanh(gates[:, 2 * hid:3 * hid])
        o_g = jax.nn.sigmoid(gates[:, 3 * hid:4 * hid])
        c = f_g * c + i_g * g_g
        h = o_g * jnp.tanh(c)

    # ---------------- learned softmax mix + final FC ----------------
    e = jnp.exp(wmix_ref[...])                             # (1, 2)
    s = jnp.sum(e, axis=1, keepdims=True)                  # (1, 1)
    mix = cnn * (e[:, 0:1] / s) + h * (e[:, 1:2] / s)      # (n, co); co == hid
    o_ref[...] = (jnp.dot(mix, fcw_ref[...], preferred_element_type=jnp.float32)
                  + fcb_ref[...])


# ------------------------------- wrapper --------------------------------------

@jax.jit
def debd_forward(x, y, params):
    """x: (N, 1, H, W) NCHW conv input; y: (N, T, LSTM_IN) batch-first LSTM input."""
    n, cin, h, w = x.shape
    k_h = params["conv_w"].shape[1] // C_OUT
    assert cin == 1 and w == params["conv_w"].shape[0] and h == H_IN
    # One jitted dispatch total: the reshape is layout-trivial and there is no
    # wrapper-side pad / cast / im2col (the bf16 cast happens inside the kernel).
    x2d = x.reshape(n * h, w)

    kernel = functools.partial(debd_kernel, n=n, h_out=h, k_h=k_h)
    return pl.pallas_call(
        kernel,
        out_shape=jax.ShapeDtypeStruct((n, N_CLS), jnp.float32),
        scratch_shapes=[pltpu.VMEM((n, h + 2 * HALO, k_h * C_OUT), jnp.float32)],
        compiler_params=pltpu.CompilerParams(vmem_limit_bytes=32 * 1024 * 1024),
    )(x2d,
      params["conv_w"],                                    # (W, k_h*C_OUT) bf16
      params["bn_g"].reshape(1, C_OUT),
      params["bn_b"].reshape(1, C_OUT),
      y,
      params["wih"],                                       # W_ih^T (IN, 4*HID)
      params["whh"],                                       # W_hh^T (HID, 4*HID)
      params["lstm_b"].reshape(1, 4 * HIDDEN),             # b_ih + b_hh
      params["w_mix"].reshape(1, 2),
      params["fc_w"],                                      # (HID, N_CLS) == W^T
      params["fc_b"].reshape(1, N_CLS))


# ------------------------------- parameters -----------------------------------

def init_params(key):
    ks = jax.random.split(key, 8)

    def rnd(k, shape, scale):
        return (scale * jax.random.normal(k, shape)).astype(jnp.float32)

    # Conv2d(1, 128, (5, 1024)): PyTorch weight (128, 1, 5, 1024) stored as
    # (K_W, K_H*C_OUT) bf16 with wcat[kw, kh*C_OUT + co] = W_pt[co, 0, kh, kw]
    # (i.e. W_pt.squeeze(1).permute(2, 1, 0).reshape(K_W, K_H*C_OUT)).
    conv_w = rnd(ks[0], (K_W, K_H, C_OUT), 0.05).reshape(K_W, K_H * C_OUT)
    return {
        "conv_w": conv_w.astype(jnp.bfloat16),
        # Conv bias: with training-mode BatchNorm (module default) a per-channel
        # pre-BN bias is exactly cancelled by the batch mean, so the kernel
        # never consumes it.  Kept only for parameter-set fidelity.
        "conv_b": rnd(ks[1], (C_OUT,), 0.05),
        "bn_g": jnp.ones((C_OUT,), jnp.float32),           # BatchNorm2d default init
        "bn_b": jnp.zeros((C_OUT,), jnp.float32),
        # LSTM(12, 128): W_ih^T, W_hh^T, combined bias (b_ih + b_hh); gate order i,f,g,o.
        "wih": rnd(ks[2], (LSTM_IN, 4 * HIDDEN), 0.1),
        "whh": rnd(ks[3], (HIDDEN, 4 * HIDDEN), 0.1),
        "lstm_b": rnd(ks[4], (4 * HIDDEN,), 0.1),
        "w_mix": jnp.ones((2,), jnp.float32),              # nn.Parameter(torch.ones(2))
        # Linear(128, 2): weight (2, 128) stored transposed.
        "fc_w": rnd(ks[5], (HIDDEN, N_CLS), 0.1),
        "fc_b": rnd(ks[6], (N_CLS,), 0.1),
    }


if __name__ == "__main__":
    key = jax.random.PRNGKey(0)
    k_p, k_x, k_y = jax.random.split(key, 3)

    # Shapes implied by the forward pass: the reshape to (batch, 128) forces
    # W == 1024 and pooled H == 1 (H == 100); the LSTM reshape forces T == 1.
    N = 2
    params = init_params(k_p)
    x = jax.random.normal(k_x, (N, 1, H_IN, K_W), dtype=jnp.float32)
    y = jax.random.normal(k_y, (N, 1, LSTM_IN), dtype=jnp.float32)

    out = debd_forward(x, y, params)
    out = jax.block_until_ready(out)
    assert out.shape == (N, N_CLS) and bool(jnp.all(jnp.isfinite(out)))
    print("KERNEL_OK")
</pallas_src>

<mosaic_0001>
module attributes {stable_mosaic.version = 11 : i64} {
  func.func @debd_kernel(%arg0: memref<200x1024xf32, #tpu.memory_space<vmem>>, %arg1: memref<1024x640xbf16, #tpu.memory_space<vmem>>, %arg2: memref<1x128xf32, #tpu.memory_space<vmem>>, %arg3: memref<1x128xf32, #tpu.memory_space<vmem>>, %arg4: memref<2x1x12xf32, #tpu.memory_space<vmem>>, %arg5: memref<12x512xf32, #tpu.memory_space<vmem>>, %arg6: memref<128x512xf32, #tpu.memory_space<vmem>>, %arg7: memref<1x512xf32, #tpu.memory_space<vmem>>, %arg8: memref<1x2xf32, #tpu.memory_space<vmem>>, %arg9: memref<128x2xf32, #tpu.memory_space<vmem>>, %arg10: memref<1x2xf32, #tpu.memory_space<vmem>>, %arg11: memref<2x2xf32, #tpu.memory_space<vmem>>, %arg12: memref<2x116x640xf32, #tpu.memory_space<vmem>>) attributes {dimension_semantics = [], scalar_prefetch = 0 : i64, scratch_operands = 1 : i64, tpu.core_type = #tpu.core_type<tc>} {
    %c0 = arith.constant 0 : index
    %c0_0 = arith.constant 0 : index
    %0 = vector.load %arg0[%c0, %c0_0] : memref<200x1024xf32, #tpu.memory_space<vmem>>, vector<200x1024xf32>
    %1 = arith.truncf %0 : vector<200x1024xf32> to vector<200x1024xbf16>
    %c0_1 = arith.constant 0 : index
    %c0_2 = arith.constant 0 : index
    %2 = vector.load %arg1[%c0_1, %c0_2] : memref<1024x640xbf16, #tpu.memory_space<vmem>>, vector<1024x640xbf16>
    %cst = arith.constant dense<0.000000e+00> : vector<200x640xf32>
    %3 = tpu.matmul %1, %2, %cst {dimension_numbers = #tpu.dot_dimension_numbers<[1], [0], [0], [1], [0, 0, 1, 1], [], []>} : vector<200x1024xbf16>, vector<1024x640xbf16>, vector<200x640xf32> -> vector<200x640xf32>
    %cst_3 = arith.constant 0.000000e+00 : f32
    %4 = vector.broadcast %cst_3 : f32 to vector<2x116x640xf32>
    %c0_4 = arith.constant 0 : index
    %c0_5 = arith.constant 0 : index
    %c0_6 = arith.constant 0 : index
    %5 = vector.load %arg12[%c0_4, %c0_5, %c0_6] : memref<2x116x640xf32, #tpu.memory_space<vmem>>, vector<2x116x640xf32>
    tpu.vector_store %arg12[%c0_4, %c0_5, %c0_6], %4 {strides = array<i32>} : memref<2x116x640xf32, #tpu.memory_space<vmem>>, vector<2x116x640xf32>,
    %6 = vector.extract_strided_slice %3 {offsets = [0, 0], sizes = [100, 640], strides = [1, 1]} : vector<200x640xf32> to vector<100x640xf32>
    %c0_7 = arith.constant 0 : index
    %c8 = arith.constant 8 : index
    %c0_8 = arith.constant 0 : index
    %7 = vector.load %arg12[%c0_7, %c8, %c0_8] : memref<2x116x640xf32, #tpu.memory_space<vmem>>, vector<1x100x640xf32>
    %8 = vector.shape_cast %7 : vector<1x100x640xf32> to vector<100x640xf32>
    %9 = vector.shape_cast %6 : vector<100x640xf32> to vector<1x100x640xf32>
    tpu.vector_store %arg12[%c0_7, %c8, %c0_8], %9 {strides = array<i32>} : memref<2x116x640xf32, #tpu.memory_space<vmem>>, vector<1x100x640xf32>,
    %10 = vector.extract_strided_slice %3 {offsets = [100, 0], sizes = [100, 640], strides = [1, 1]} : vector<200x640xf32> to vector<100x640xf32>
    %c1 = arith.constant 1 : index
    %c8_9 = arith.constant 8 : index
    %c0_10 = arith.constant 0 : index
    %11 = vector.load %arg12[%c1, %c8_9, %c0_10] : memref<2x116x640xf32, #tpu.memory_space<vmem>>, vector<1x100x640xf32>
    %12 = vector.shape_cast %11 : vector<1x100x640xf32> to vector<100x640xf32>
    %13 = vector.shape_cast %10 : vector<100x640xf32> to vector<1x100x640xf32>
    tpu.vector_store %arg12[%c1, %c8_9, %c0_10], %13 {strides = array<i32>} : memref<2x116x640xf32, #tpu.memory_space<vmem>>, vector<1x100x640xf32>,
    %cst_11 = arith.constant 0.000000e+00 : f32
    %14 = vector.broadcast %cst_11 : f32 to vector<1x128xf32>
    %cst_12 = arith.constant 0.000000e+00 : f32
    %15 = vector.broadcast %cst_12 : f32 to vector<1x128xf32>
    %c0_13 = arith.constant 0 : index
    %c6 = arith.constant 6 : index
    %c0_14 = arith.constant 0 : index
    %16 = vector.load %arg12[%c0_13, %c6, %c0_14] : memref<2x116x640xf32, #tpu.memory_space<vmem>>, vector<1x100x128xf32>
    %17 = vector.shape_cast %16 : vector<1x100x128xf32> to vector<100x128xf32>
    %c0_15 = arith.constant 0 : index
    %c7 = arith.constant 7 : index
    %c128 = arith.constant 128 : index
    %18 = vector.load %arg12[%c0_15, %c7, %c128] : memref<2x116x640xf32, #tpu.memory_space<vmem>>, vector<1x100x128xf32>
    %19 = vector.shape_cast %18 : vector<1x100x128xf32> to vector<100x128xf32>
    %20 = arith.addf %17, %19 : vector<100x128xf32>
    %c0_16 = arith.constant 0 : index
    %c8_17 = arith.constant 8 : index
    %c256 = arith.constant 256 : index
    %21 = vector.load %arg12[%c0_16, %c8_17, %c256] : memref<2x116x640xf32, #tpu.memory_space<vmem>>, vector<1x100x128xf32>
    %22 = vector.shape_cast %21 : vector<1x100x128xf32> to vector<100x128xf32>
    %23 = arith.addf %20, %22 : vector<100x128xf32>
    %c0_18 = arith.constant 0 : index
    %c9 = arith.constant 9 : index
    %c384 = arith.constant 384 : index
    %24 = vector.load %arg12[%c0_18, %c9, %c384] : memref<2x116x640xf32, #tpu.memory_space<vmem>>, vector<1x100x128xf32>
    %25 = vector.shape_cast %24 : vector<1x100x128xf32> to vector<100x128xf32>
    %26 = arith.addf %23, %25 : vector<100x128xf32>
    %c0_19 = arith.constant 0 : index
    %c10 = arith.constant 10 : index
    %c512 = arith.constant 512 : index
    %27 = vector.load %arg12[%c0_19, %c10, %c512] : memref<2x116x640xf32, #tpu.memory_space<vmem>>, vector<1x100x128xf32>
    %28 = vector.shape_cast %27 : vector<1x100x128xf32> to vector<100x128xf32>
    %29 = arith.addf %26, %28 : vector<100x128xf32>
    %cst_20 = arith.constant dense<0.000000e+00> : vector<128xf32>
    %30 = vector.multi_reduction <add>, %29, %cst_20 [0] : vector<100x128xf32> to vector<128xf32>
    %31 = vector.shape_cast %30 : vector<128xf32> to vector<1x128xf32>
    %32 = arith.addf %14, %31 : vector<1x128xf32>
    %33 = arith.mulf %29, %29 : vector<100x128xf32>
    %cst_21 = arith.constant dense<0.000000e+00> : vector<128xf32>
    %34 = vector.multi_reduction <add>, %33, %cst_21 [0] : vector<100x128xf32> to vector<128xf32>
    %35 = vector.shape_cast %34 : vector<128xf32> to vector<1x128xf32>
    %36 = arith.addf %15, %35 : vector<1x128xf32>
    %cst_22 = arith.constant dense<0xFF800000> : vector<128xf32>
    %37 = vector.multi_reduction <maximumf>, %29, %cst_22 [0] : vector<100x128xf32> to vector<128xf32>
    %38 = vector.shape_cast %37 : vector<128xf32> to vector<1x128xf32>
    %cst_23 = arith.constant dense<0x7F800000> : vector<128xf32>
    %39 = vector.multi_reduction <minimumf>, %29, %cst_23 [0] : vector<100x128xf32> to vector<128xf32>
    %40 = vector.shape_cast %39 : vector<128xf32> to vector<1x128xf32>
    %c1_24 = arith.constant 1 : index
    %c6_25 = arith.constant 6 : index
    %c0_26 = arith.constant 0 : index
    %41 = vector.load %arg12[%c1_24, %c6_25, %c0_26] : memref<2x116x640xf32, #tpu.memory_space<vmem>>, vector<1x100x128xf32>
    %42 = vector.shape_cast %41 : vector<1x100x128xf32> to vector<100x128xf32>
    %c1_27 = arith.constant 1 : index
    %c7_28 = arith.constant 7 : index
    %c128_29 = arith.constant 128 : index
    %43 = vector.load %arg12[%c1_27, %c7_28, %c128_29] : memref<2x116x640xf32, #tpu.memory_space<vmem>>, vector<1x100x128xf32>
    %44 = vector.shape_cast %43 : vector<1x100x128xf32> to vector<100x128xf32>
    %45 = arith.addf %42, %44 : vector<100x128xf32>
    %c1_30 = arith.constant 1 : index
    %c8_31 = arith.constant 8 : index
    %c256_32 = arith.constant 256 : index
    %46 = vector.load %arg12[%c1_30, %c8_31, %c256_32] : memref<2x116x640xf32, #tpu.memory_space<vmem>>, vector<1x100x128xf32>
    %47 = vector.shape_cast %46 : vector<1x100x128xf32> to vector<100x128xf32>
    %48 = arith.addf %45, %47 : vector<100x128xf32>
    %c1_33 = arith.constant 1 : index
    %c9_34 = arith.constant 9 : index
    %c384_35 = arith.constant 384 : index
    %49 = vector.load %arg12[%c1_33, %c9_34, %c384_35] : memref<2x116x640xf32, #tpu.memory_space<vmem>>, vector<1x100x128xf32>
    %50 = vector.shape_cast %49 : vector<1x100x128xf32> to vector<100x128xf32>
    %51 = arith.addf %48, %50 : vector<100x128xf32>
    %c1_36 = arith.constant 1 : index
    %c10_37 = arith.constant 10 : index
    %c512_38 = arith.constant 512 : index
    %52 = vector.load %arg12[%c1_36, %c10_37, %c512_38] : memref<2x116x640xf32, #tpu.memory_space<vmem>>, vector<1x100x128xf32>
    %53 = vector.shape_cast %52 : vector<1x100x128xf32> to vector<100x128xf32>
    %54 = arith.addf %51, %53 : vector<100x128xf32>
    %cst_39 = arith.constant dense<0.000000e+00> : vector<128xf32>
    %55 = vector.multi_reduction <add>, %54, %cst_39 [0] : vector<100x128xf32> to vector<128xf32>
    %56 = vector.shape_cast %55 : vector<128xf32> to vector<1x128xf32>
    %57 = arith.addf %32, %56 : vector<1x128xf32>
    %58 = arith.mulf %54, %54 : vector<100x128xf32>
    %cst_40 = arith.constant dense<0.000000e+00> : vector<128xf32>
    %59 = vector.multi_reduction <add>, %58, %cst_40 [0] : vector<100x128xf32> to vector<128xf32>
    %60 = vector.shape_cast %59 : vector<128xf32> to vector<1x128xf32>
    %61 = arith.addf %36, %60 : vector<1x128xf32>
    %cst_41 = arith.constant dense<0xFF800000> : vector<128xf32>
    %62 = vector.multi_reduction <maximumf>, %54, %cst_41 [0] : vector<100x128xf32> to vector<128xf32>
    %63 = vector.shape_cast %62 : vector<128xf32> to vector<1x128xf32>
    %cst_42 = arith.constant dense<0x7F800000> : vector<128xf32>
    %64 = vector.multi_reduction <minimumf>, %54, %cst_42 [0] : vector<100x128xf32> to vector<128xf32>
    %65 = vector.shape_cast %64 : vector<128xf32> to vector<1x128xf32>
    %66 = tpu.concatenate %38, %63 in 0 : vector<1x128xf32>, vector<1x128xf32> -> vector<2x128xf32>
    %67 = tpu.concatenate %40, %65 in 0 : vector<1x128xf32>, vector<1x128xf32> -> vector<2x128xf32>
    %cst_43 = arith.constant 5.000000e-03 : f32
    %68 = vector.broadcast %cst_43 : f32 to vector<1x128xf32>
    %69 = arith.mulf %57, %68 : vector<1x128xf32>
    %cst_44 = arith.constant 5.000000e-03 : f32
    %70 = vector.broadcast %cst_44 : f32 to vector<1x128xf32>
    %71 = arith.mulf %61, %70 : vector<1x128xf32>
    %72 = arith.mulf %69, %69 : vector<1x128xf32>
    %73 = arith.subf %71, %72 : vector<1x128xf32>
    %cst_45 = arith.constant 0.000000e+00 : f32
    %74 = vector.broadcast %cst_45 : f32 to vector<1x128xf32>
    %75 = arith.maximumf %73, %74 : vector<1x128xf32>
    %c0_46 = arith.constant 0 : index
    %c0_47 = arith.constant 0 : index
    %76 = vector.load %arg2[%c0_46, %c0_47] : memref<1x128xf32, #tpu.memory_space<vmem>>, vector<1x128xf32>
    %cst_48 = arith.constant 9.99999974E-6 : f32
    %77 = vector.broadcast %cst_48 : f32 to vector<1x128xf32>
    %78 = arith.addf %75, %77 : vector<1x128xf32>
    %79 = math.rsqrt %78 : vector<1x128xf32>
    %80 = arith.mulf %76, %79 : vector<1x128xf32>
    %c0_49 = arith.constant 0 : index
    %c0_50 = arith.constant 0 : index
    %81 = vector.load %arg3[%c0_49, %c0_50] : memref<1x128xf32, #tpu.memory_space<vmem>>, vector<1x128xf32>
    %82 = arith.mulf %69, %80 : vector<1x128xf32>
    %83 = arith.subf %81, %82 : vector<1x128xf32>
    %cst_51 = arith.constant 0.000000e+00 : f32
    %84 = vector.broadcast %cst_51 : f32 to vector<1x128xf32>
    %85 = arith.cmpf oge, %80, %84 : vector<1x128xf32>
    %86 = vector.shape_cast %85 : vector<1x128xi1> to vector<1x128xi1>
    %87 = vector.broadcast %86 : vector<1x128xi1> to vector<2x128xi1>
    %88 = arith.select %87, %66, %67 : vector<2x128xi1>, vector<2x128xf32>
    %89 = vector.broadcast %80 : vector<1x128xf32> to vector<2x128xf32>
    %90 = arith.mulf %88, %89 : vector<2x128xf32>
    %91 = vector.broadcast %83 : vector<1x128xf32> to vector<2x128xf32>
    %92 = arith.addf %90, %91 : vector<2x128xf32>
    %cst_52 = arith.constant 0.000000e+00 : f32
    %93 = vector.broadcast %cst_52 : f32 to vector<2x128xf32>
    %94 = arith.maximumf %92, %93 : vector<2x128xf32>
    %cst_53 = arith.constant 0.000000e+00 : f32
    %95 = vector.broadcast %cst_53 : f32 to vector<2x128xf32>
    %cst_54 = arith.constant 0.000000e+00 : f32
    %96 = vector.broadcast %cst_54 : f32 to vector<2x128xf32>
    %c0_55 = arith.constant 0 : index
    %c0_56 = arith.constant 0 : index
    %c0_57 = arith.constant 0 : index
    %97 = vector.load %arg4[%c0_55, %c0_56, %c0_57] : memref<2x1x12xf32, #tpu.memory_space<vmem>>, vector<2x1x12xf32>
    %98 = vector.shape_cast %97 : vector<2x1x12xf32> to vector<2x12xf32>
    %c0_58 = arith.constant 0 : index
    %c0_59 = arith.constant 0 : index
    %99 = vector.load %arg5[%c0_58, %c0_59] : memref<12x512xf32, #tpu.memory_space<vmem>>, vector<12x512xf32>
    %cst_60 = arith.constant dense<0.000000e+00> : vector<2x512xf32>
    %100 = tpu.matmul %98, %99, %cst_60 {dimension_numbers = #tpu.dot_dimension_numbers<[1], [0], [0], [1], [0, 0, 1, 1], [], []>} : vector<2x12xf32>, vector<12x512xf32>, vector<2x512xf32> -> vector<2x512xf32>
    %c0_61 = arith.constant 0 : index
    %c0_62 = arith.constant 0 : index
    %101 = vector.load %arg6[%c0_61, %c0_62] : memref<128x512xf32, #tpu.memory_space<vmem>>, vector<128x512xf32>
    %cst_63 = arith.constant dense<0.000000e+00> : vector<2x512xf32>
    %102 = tpu.matmul %95, %101, %cst_63 {dimension_numbers = #tpu.dot_dimension_numbers<[1], [0], [0], [1], [0, 0, 1, 1], [], []>} : vector<2x128xf32>, vector<128x512xf32>, vector<2x512xf32> -> vector<2x512xf32>
    %103 = arith.addf %100, %102 : vector<2x512xf32>
    %c0_64 = arith.constant 0 : index
    %c0_65 = arith.constant 0 : index
    %104 = vector.load %arg7[%c0_64, %c0_65] : memref<1x512xf32, #tpu.memory_space<vmem>>, vector<1x512xf32>
    %105 = vector.broadcast %104 : vector<1x512xf32> to vector<2x512xf32>
    %106 = arith.addf %103, %105 : vector<2x512xf32>
    %107 = vector.extract_strided_slice %106 {offsets = [0, 0], sizes = [2, 128], strides = [1, 1]} : vector<2x512xf32> to vector<2x128xf32>
    %108 = arith.negf %107 : vector<2x128xf32>
    %109 = math.exp %108 : vector<2x128xf32>
    %cst_66 = arith.constant 1.000000e+00 : f32
    %110 = vector.broadcast %cst_66 : f32 to vector<2x128xf32>
    %111 = arith.addf %110, %109 : vector<2x128xf32>
    %112 = arith.divf %110, %111 : vector<2x128xf32>
    %113 = vector.extract_strided_slice %106 {offsets = [0, 128], sizes = [2, 128], strides = [1, 1]} : vector<2x512xf32> to vector<2x128xf32>
    %114 = arith.negf %113 : vector<2x128xf32>
    %115 = math.exp %114 : vector<2x128xf32>
    %cst_67 = arith.constant 1.000000e+00 : f32
    %116 = vector.broadcast %cst_67 : f32 to vector<2x128xf32>
    %117 = arith.addf %116, %115 : vector<2x128xf32>
    %118 = arith.divf %116, %117 : vector<2x128xf32>
    %119 = vector.extract_strided_slice %106 {offsets = [0, 256], sizes = [2, 128], strides = [1, 1]} : vector<2x512xf32> to vector<2x128xf32>
    %120 = math.tanh %119 : vector<2x128xf32>
    %121 = vector.extract_strided_slice %106 {offsets = [0, 384], sizes = [2, 128], strides = [1, 1]} : vector<2x512xf32> to vector<2x128xf32>
    %122 = arith.negf %121 : vector<2x128xf32>
    %123 = math.exp %122 : vector<2x128xf32>
    %cst_68 = arith.constant 1.000000e+00 : f32
    %124 = vector.broadcast %cst_68 : f32 to vector<2x128xf32>
    %125 = arith.addf %124, %123 : vector<2x128xf32>
    %126 = arith.divf %124, %125 : vector<2x128xf32>
    %127 = arith.mulf %118, %96 : vector<2x128xf32>
    %128 = arith.mulf %112, %120 : vector<2x128xf32>
    %129 = arith.addf %127, %128 : vector<2x128xf32>
    %130 = math.tanh %129 : vector<2x128xf32>
    %131 = arith.mulf %126, %130 : vector<2x128xf32>
    %c0_69 = arith.constant 0 : index
    %c0_70 = arith.constant 0 : index
    %132 = vector.load %arg8[%c0_69, %c0_70] : memref<1x2xf32, #tpu.memory_space<vmem>>, vector<1x2xf32>
    %133 = math.exp %132 : vector<1x2xf32>
    %cst_71 = arith.constant dense<0.000000e+00> : vector<1xf32>
    %134 = vector.multi_reduction <add>, %133, %cst_71 [1] : vector<1x2xf32> to vector<1xf32>
    %135 = vector.shape_cast %134 : vector<1xf32> to vector<1x1xf32>
    %136 = vector.extract_strided_slice %133 {offsets = [0, 0], sizes = [1, 1], strides = [1, 1]} : vector<1x2xf32> to vector<1x1xf32>
    %137 = arith.divf %136, %135 : vector<1x1xf32>
    %138 = vector.broadcast %137 : vector<1x1xf32> to vector<2x128xf32>
    %139 = arith.mulf %94, %138 : vector<2x128xf32>
    %140 = vector.extract_strided_slice %133 {offsets = [0, 1], sizes = [1, 1], strides = [1, 1]} : vector<1x2xf32> to vector<1x1xf32>
    %141 = arith.divf %140, %135 : vector<1x1xf32>
    %142 = vector.broadcast %141 : vector<1x1xf32> to vector<2x128xf32>
    %143 = arith.mulf %131, %142 : vector<2x128xf32>
    %144 = arith.addf %139, %143 : vector<2x128xf32>
    %c0_72 = arith.constant 0 : index
    %c0_73 = arith.constant 0 : index
    %145 = vector.load %arg9[%c0_72, %c0_73] : memref<128x2xf32, #tpu.memory_space<vmem>>, vector<128x2xf32>
    %cst_74 = arith.constant dense<0.000000e+00> : vector<2x2xf32>
    %146 = tpu.matmul %144, %145, %cst_74 {dimension_numbers = #tpu.dot_dimension_numbers<[1], [0], [0], [1], [0, 0, 1, 1], [], []>} : vector<2x128xf32>, vector<128x2xf32>, vector<2x2xf32> -> vector<2x2xf32>
    %c0_75 = arith.constant 0 : index
    %c0_76 = arith.constant 0 : index
    %147 = vector.load %arg10[%c0_75, %c0_76] : memref<1x2xf32, #tpu.memory_space<vmem>>, vector<1x2xf32>
    %148 = vector.broadcast %147 : vector<1x2xf32> to vector<2x2xf32>
    %149 = arith.addf %146, %148 : vector<2x2xf32>
    %c0_77 = arith.constant 0 : index
    %c0_78 = arith.constant 0 : index
    %150 = vector.load %arg11[%c0_77, %c0_78] : memref<2x2xf32, #tpu.memory_space<vmem>>, vector<2x2xf32>
    tpu.vector_store %arg11[%c0_77, %c0_78], %149 {strides = array<i32>} : memref<2x2xf32, #tpu.memory_space<vmem>>, vector<2x2xf32>,
    return
  }
}

</mosaic_0001>

<llo_original>
// kernel: debd_forward.1
$region0: #{debd_forward.1}
  #allocation0 [shape = 'u32[]', space=smem, size = 0x4, offset = 0x4, fixed_abs, tag = 'smem constant byte address 0x4 - core index']
  #allocation1 [shape = 'u32[144,128]{1,0:T(1,128)}', space=vmem, size = 0x12000, scoped, tag = 'internal scratch']
  #allocation2 [shape = 'f32[2,116,640]{2,1,0:T(8,128)}', space=vmem, size = 0x96000, scoped, tag = 'scratch operand']
  %s0 = inlined_call_operand.vmem [shape: f32[200,1024], index: 0, kind: input, shape index: {}]
  %s1 = inlined_call_operand.vmem [shape: bf16[1024,640], index: 1, kind: input, shape index: {}]
  %s2 = inlined_call_operand.vmem [shape: f32[1,128], index: 2, kind: input, shape index: {}]
  %s3 = inlined_call_operand.vmem [shape: f32[1,128], index: 3, kind: input, shape index: {}]
  %s4 = inlined_call_operand.vmem [shape: f32[2,1,12], index: 4, kind: input, shape index: {}]
  %s5 = inlined_call_operand.vmem [shape: f32[12,512], index: 5, kind: input, shape index: {}]
  %s6 = inlined_call_operand.vmem [shape: f32[128,512], index: 6, kind: input, shape index: {}]
  %s7 = inlined_call_operand.vmem [shape: f32[1,512], index: 7, kind: input, shape index: {}]
  %s8 = inlined_call_operand.vmem [shape: f32[1,2], index: 8, kind: input, shape index: {}]
  %s9 = inlined_call_operand.vmem [shape: f32[128,2], index: 9, kind: input, shape index: {}]
  %s10 = inlined_call_operand.vmem [shape: f32[1,2], index: 10, kind: input, shape index: {}]
  %s11 = inlined_call_operand.hbm [shape: f32[2,2], index: 11, kind: output, shape index: {}]
  %s12 = sld [smem:[#allocation0]]
  $region54: #{debd_forward.1} parent=0
    _
  %s14 = ssub.s32 1, %s12
  %s15 = scalar_select 0, %s14, %s12
  $region1: #{debd_forward.1} parent=0
    #allocation3 [shape = 'u8[1024]{0}', space=vmem, size = 0x400, scoped, tag = 'output window, operand 0, single buffered']
    #allocation4 [shape = 's32[1]{0}', space=sflag, size = 0x4, scoped, tag = 'scoped memory for debd_forward.1']
    %16 = vsyncpa [#allocation4], 0
    // Predicated region
    $region2: #{debd_forward.1} parent=1 // pred_check
      _
    $region3: #{debd_forward.1} parent=1 // pred_check_branch
      %18 = sbr.rel (0) target = $region5
    $region4: #{debd_forward.1} parent=1 // pred_region
      _
    $region5: #{debd_forward.1} parent=1 // pred_fallthru
      _
    // Predicated region
    $region6: #{debd_forward.1} parent=1 // pred_check
      _
    $region7: #{debd_forward.1} parent=1 // pred_check_branch
      %20 = sbr.rel (0) target = $region9
    $region8: #{debd_forward.1} parent=1 // pred_region
      _
    $region9: #{debd_forward.1} parent=1 // pred_fallthru
      _
    // Predicated region
    $region10: #{debd_forward.1} parent=1 // pred_check
      _
    $region11: #{debd_forward.1} parent=1 // pred_check_branch
      %22 = sbr.rel (0) target = $region13
    $region12: #{debd_forward.1} parent=1 // pred_region
      _
    $region13: #{debd_forward.1} parent=1 // pred_fallthru
      _
    // Predicated region
    $region14: #{debd_forward.1} parent=1 // pred_check
      _
    $region15: #{debd_forward.1} parent=1 // pred_check_branch
      %24 = sbr.rel (0) target = $region17
    $region16: #{debd_forward.1} parent=1 // pred_region
      _
    $region17: #{debd_forward.1} parent=1 // pred_fallthru
      _
    // Predicated region
    $region18: #{debd_forward.1} parent=1 // pred_check
      _
    $region19: #{debd_forward.1} parent=1 // pred_check_branch
      %26 = sbr.rel (0) target = $region21
    $region20: #{debd_forward.1} parent=1 // pred_region
      _
    $region21: #{debd_forward.1} parent=1 // pred_fallthru
      _
    // Predicated region
    $region22: #{debd_forward.1} parent=1 // pred_check
      _
    $region23: #{debd_forward.1} parent=1 // pred_check_branch
      %28 = sbr.rel (0) target = $region25
    $region24: #{debd_forward.1} parent=1 // pred_region
      _
    $region25: #{debd_forward.1} parent=1 // pred_fallthru
      _
    // Predicated region
    $region26: #{debd_forward.1} parent=1 // pred_check
      _
    $region27: #{debd_forward.1} parent=1 // pred_check_branch
      %30 = sbr.rel (0) target = $region29
    $region28: #{debd_forward.1} parent=1 // pred_region
      _
    $region29: #{debd_forward.1} parent=1 // pred_fallthru
      _
    // Predicated region
    $region30: #{debd_forward.1} parent=1 // pred_check
      _
    $region31: #{debd_forward.1} parent=1 // pred_check_branch
      %32 = sbr.rel (0) target = $region33
    $region32: #{debd_forward.1} parent=1 // pred_region
      _
    $region33: #{debd_forward.1} parent=1 // pred_fallthru
      _
    // Predicated region
    $region34: #{debd_forward.1} parent=1 // pred_check
      _
    $region35: #{debd_forward.1} parent=1 // pred_check_branch
      %34 = sbr.rel (0) target = $region37
    $region36: #{debd_forward.1} parent=1 // pred_region
      _
    $region37: #{debd_forward.1} parent=1 // pred_fallthru
      _
    // Predicated region
    $region38: #{debd_forward.1} parent=1 // pred_check
      _
    $region39: #{debd_forward.1} parent=1 // pred_check_branch
      %36 = sbr.rel (0) target = $region41
    $region40: #{debd_forward.1} parent=1 // pred_region
      _
    $region41: #{debd_forward.1} parent=1 // pred_fallthru
      _
    // Predicated region
    $region42: #{debd_forward.1} parent=1 // pred_check
      _
    $region43: #{debd_forward.1} parent=1 // pred_check_branch
      %38 = sbr.rel (0) target = $region45
    $region44: #{debd_forward.1} parent=1 // pred_region
      _
    $region45: #{debd_forward.1} parent=1 // pred_fallthru
      _
    %v40 = vld [vmem:[%s0] sm:$0xff]
    %v41 = vld [vmem:[%s0 + $0x8] sm:$0xff]
    %v42 = vld [vmem:[%s0 + $0x10] sm:$0xff]
    %v43 = vld [vmem:[%s0 + $0x18] sm:$0xff]
    %v44 = vld [vmem:[%s0 + $0x20] sm:$0xff]
    %v45 = vld [vmem:[%s0 + $0x28] sm:$0xff]
    %v46 = vld [vmem:[%s0 + $0x30] sm:$0xff]
    %v47 = vld [vmem:[%s0 + $0x38] sm:$0xff]
    %v48 = vld [vmem:[%s0 + $0x40] sm:$0xff]
    %v49 = vld [vmem:[%s0 + $0x48] sm:$0xff]
    %v50 = vld [vmem:[%s0 + $0x50] sm:$0xff]
    %v51 = vld [vmem:[%s0 + $0x58] sm:$0xff]
    %v52 = vld [vmem:[%s0 + $0x60] sm:$0xff]
    %v53 = vld [vmem:[%s0 + $0x68] sm:$0xff]
    %v54 = vld [vmem:[%s0 + $0x70] sm:$0xff]
    %v55 = vld [vmem:[%s0 + $0x78] sm:$0xff]
    %v56 = vld [vmem:[%s0 + $0x80] sm:$0xff]
    %v57 = vld [vmem:[%s0 + $0x88] sm:$0xff]
    %v58 = vld [vmem:[%s0 + $0x90] sm:$0xff]
    %v59 = vld [vmem:[%s0 + $0x98] sm:$0xff]
    %v60 = vld [vmem:[%s0 + $0xa0] sm:$0xff]
    %v61 = vld [vmem:[%s0 + $0xa8] sm:$0xff]
    %v62 = vld [vmem:[%s0 + $0xb0] sm:$0xff]
    %v63 = vld [vmem:[%s0 + $0xb8] sm:$0xff]
    %v64 = vld [vmem:[%s0 + $0xc0] sm:$0xff]
    %v65 = vld [vmem:[%s0 + $0xc8] sm:$0xff]
    %v66 = vld [vmem:[%s0 + $0xd0] sm:$0xff]
    %v67 = vld [vmem:[%s0 + $0xd8] sm:$0xff]
    %v68 = vld [vmem:[%s0 + $0xe0] sm:$0xff]
    %v69 = vld [vmem:[%s0 + $0xe8] sm:$0xff]
    %v70 = vld [vmem:[%s0 + $0xf0] sm:$0xff]
    %v71 = vld [vmem:[%s0 + $0xf8] sm:$0xff]
    %v72 = vld [vmem:[%s0 + $0x100] sm:$0xff]
    %v73 = vld [vmem:[%s0 + $0x108] sm:$0xff]
    %v74 = vld [vmem:[%s0 + $0x110] sm:$0xff]
    %v75 = vld [vmem:[%s0 + $0x118] sm:$0xff]
    %v76 = vld [vmem:[%s0 + $0x120] sm:$0xff]
    %v77 = vld [vmem:[%s0 + $0x128] sm:$0xff]
    %v78 = vld [vmem:[%s0 + $0x130] sm:$0xff]
    %v79 = vld [vmem:[%s0 + $0x138] sm:$0xff]
    %v80 = vld [vmem:[%s0 + $0x140] sm:$0xff]
    %v81 = vld [vmem:[%s0 + $0x148] sm:$0xff]
    %v82 = vld [vmem:[%s0 + $0x150] sm:$0xff]
    %v83 = vld [vmem:[%s0 + $0x158] sm:$0xff]
    %v84 = vld [vmem:[%s0 + $0x160] sm:$0xff]
    %v85 = vld [vmem:[%s0 + $0x168] sm:$0xff]
    %v86 = vld [vmem:[%s0 + $0x170] sm:$0xff]
    %v87 = vld [vmem:[%s0 + $0x178] sm:$0xff]
    %v88 = vld [vmem:[%s0 + $0x180] sm:$0xff]
    %v89 = vld [vmem:[%s0 + $0x188] sm:$0xff]
    %v90 = vld [vmem:[%s0 + $0x190] sm:$0xff]
    %v91 = vld [vmem:[%s0 + $0x198] sm:$0xff]
    %v92 = vld [vmem:[%s0 + $0x1a0] sm:$0xff]
    %v93 = vld [vmem:[%s0 + $0x1a8] sm:$0xff]
    %v94 = vld [vmem:[%s0 + $0x1b0] sm:$0xff]
    %v95 = vld [vmem:[%s0 + $0x1b8] sm:$0xff]
    %v96 = vld [vmem:[%s0 + $0x1c0] sm:$0xff]
    %v97 = vld [vmem:[%s0 + $0x1c8] sm:$0xff]
    %v98 = vld [vmem:[%s0 + $0x1d0] sm:$0xff]
    %v99 = vld [vmem:[%s0 + $0x1d8] sm:$0xff]
    %v100 = vld [vmem:[%s0 + $0x1e0] sm:$0xff]
    %v101 = vld [vmem:[%s0 + $0x1e8] sm:$0xff]
    %v102 = vld [vmem:[%s0 + $0x1f0] sm:$0xff]
    %v103 = vld [vmem:[%s0 + $0x1f8] sm:$0xff]
    %v104 = vld [vmem:[%s0 + $0x200] sm:$0xff]
    %v105 = vld [vmem:[%s0 + $0x208] sm:$0xff]
    %v106 = vld [vmem:[%s0 + $0x210] sm:$0xff]
    %v107 = vld [vmem:[%s0 + $0x218] sm:$0xff]
    %v108 = vld [vmem:[%s0 + $0x220] sm:$0xff]
    %v109 = vld [vmem:[%s0 + $0x228] sm:$0xff]
    %v110 = vld [vmem:[%s0 + $0x230] sm:$0xff]
    %v111 = vld [vmem:[%s0 + $0x238] sm:$0xff]
    %v112 = vld [vmem:[%s0 + $0x240] sm:$0xff]
    %v113 = vld [vmem:[%s0 + $0x248] sm:$0xff]
    %v114 = vld [vmem:[%s0 + $0x250] sm:$0xff]
    %v115 = vld [vmem:[%s0 + $0x258] sm:$0xff]
    %v116 = vld [vmem:[%s0 + $0x260] sm:$0xff]
    %v117 = vld [vmem:[%s0 + $0x268] sm:$0xff]
    %v118 = vld [vmem:[%s0 + $0x270] sm:$0xff]
    %v119 = vld [vmem:[%s0 + $0x278] sm:$0xff]
    %v120 = vld [vmem:[%s0 + $0x280] sm:$0xff]
    %v121 = vld [vmem:[%s0 + $0x288] sm:$0xff]
    %v122 = vld [vmem:[%s0 + $0x290] sm:$0xff]
    %v123 = vld [vmem:[%s0 + $0x298] sm:$0xff]
    %v124 = vld [vmem:[%s0 + $0x2a0] sm:$0xff]
    %v125 = vld [vmem:[%s0 + $0x2a8] sm:$0xff]
    %v126 = vld [vmem:[%s0 + $0x2b0] sm:$0xff]
    %v127 = vld [vmem:[%s0 + $0x2b8] sm:$0xff]
    %v128 = vld [vmem:[%s0 + $0x2c0] sm:$0xff]
    %v129 = vld [vmem:[%s0 + $0x2c8] sm:$0xff]
    %v130 = vld [vmem:[%s0 + $0x2d0] sm:$0xff]
    %v131 = vld [vmem:[%s0 + $0x2d8] sm:$0xff]
    %v132 = vld [vmem:[%s0 + $0x2e0] sm:$0xff]
    %v133 = vld [vmem:[%s0 + $0x2e8] sm:$0xff]
    %v134 = vld [vmem:[%s0 + $0x2f0] sm:$0xff]
    %v135 = vld [vmem:[%s0 + $0x2f8] sm:$0xff]
    %v136 = vld [vmem:[%s0 + $0x300] sm:$0xff]
    %v137 = vld [vmem:[%s0 + $0x308] sm:$0xff]
    %v138 = vld [vmem:[%s0 + $0x310] sm:$0xff]
    %v139 = vld [vmem:[%s0 + $0x318] sm:$0xff]
    %v140 = vld [vmem:[%s0 + $0x320] sm:$0xff]
    %v141 = vld [vmem:[%s0 + $0x328] sm:$0xff]
    %v142 = vld [vmem:[%s0 + $0x330] sm:$0xff]
    %v143 = vld [vmem:[%s0 + $0x338] sm:$0xff]
    %v144 = vld [vmem:[%s0 + $0x340] sm:$0xff]
    %v145 = vld [vmem:[%s0 + $0x348] sm:$0xff]
    %v146 = vld [vmem:[%s0 + $0x350] sm:$0xff]
    %v147 = vld [vmem:[%s0 + $0x358] sm:$0xff]
    %v148 = vld [vmem:[%s0 + $0x360] sm:$0xff]
    %v149 = vld [vmem:[%s0 + $0x368] sm:$0xff]
    %v150 = vld [vmem:[%s0 + $0x370] sm:$0xff]
    %v151 = vld [vmem:[%s0 + $0x378] sm:$0xff]
    %v152 = vld [vmem:[%s0 + $0x380] sm:$0xff]
    %v153 = vld [vmem:[%s0 + $0x388] sm:$0xff]
    %v154 = vld [vmem:[%s0 + $0x390] sm:$0xff]
    %v155 = vld [vmem:[%s0 + $0x398] sm:$0xff]
    %v156 = vld [vmem:[%s0 + $0x3a0] sm:$0xff]
    %v157 = vld [vmem:[%s0 + $0x3a8] sm:$0xff]
    %v158 = vld [vmem:[%s0 + $0x3b0] sm:$0xff]
    %v159 = vld [vmem:[%s0 + $0x3b8] sm:$0xff]
    %v160 = vld [vmem:[%s0 + $0x3c0] sm:$0xff]
    %v161 = vld [vmem:[%s0 + $0x3c8] sm:$0xff]
    %v162 = vld [vmem:[%s0 + $0x3d0] sm:$0xff]
    %v163 = vld [vmem:[%s0 + $0x3d8] sm:$0xff]
    %v164 = vld [vmem:[%s0 + $0x3e0] sm:$0xff]
    %v165 = vld [vmem:[%s0 + $0x3e8] sm:$0xff]
    %v166 = vld [vmem:[%s0 + $0x3f0] sm:$0xff]
    %v167 = vld [vmem:[%s0 + $0x3f8] sm:$0xff]
    %v168 = vld [vmem:[%s0 + $0x400] sm:$0xff]
    %v169 = vld [vmem:[%s0 + $0x408] sm:$0xff]
    %v170 = vld [vmem:[%s0 + $0x410] sm:$0xff]
    %v171 = vld [vmem:[%s0 + $0x418] sm:$0xff]
    %v172 = vld [vmem:[%s0 + $0x420] sm:$0xff]
    %v173 = vld [vmem:[%s0 + $0x428] sm:$0xff]
    %v174 = vld [vmem:[%s0 + $0x430] sm:$0xff]
    %v175 = vld [vmem:[%s0 + $0x438] sm:$0xff]
    %v176 = vld [vmem:[%s0 + $0x440] sm:$0xff]
    %v177 = vld [vmem:[%s0 + $0x448] sm:$0xff]
    %v178 = vld [vmem:[%s0 + $0x450] sm:$0xff]
    %v179 = vld [vmem:[%s0 + $0x458] sm:$0xff]
    %v180 = vld [vmem:[%s0 + $0x460] sm:$0xff]
    %v181 = vld [vmem:[%s0 + $0x468] sm:$0xff]
    %v182 = vld [vmem:[%s0 + $0x470] sm:$0xff]
    %v183 = vld [vmem:[%s0 + $0x478] sm:$0xff]
    %v184 = vld [vmem:[%s0 + $0x480] sm:$0xff]
    %v185 = vld [vmem:[%s0 + $0x488] sm:$0xff]
    %v186 = vld [vmem:[%s0 + $0x490] sm:$0xff]
    %v187 = vld [vmem:[%s0 + $0x498] sm:$0xff]
    %v188 = vld [vmem:[%s0 + $0x4a0] sm:$0xff]
    %v189 = vld [vmem:[%s0 + $0x4a8] sm:$0xff]
    %v190 = vld [vmem:[%s0 + $0x4b0] sm:$0xff]
    %v191 = vld [vmem:[%s0 + $0x4b8] sm:$0xff]
    %v192 = vld [vmem:[%s0 + $0x4c0] sm:$0xff]
    %v193 = vld [vmem:[%s0 + $0x4c8] sm:$0xff]
    %v194 = vld [vmem:[%s0 + $0x4d0] sm:$0xff]
    %v195 = vld [vmem:[%s0 + $0x4d8] sm:$0xff]
    %v196 = vld [vmem:[%s0 + $0x4e0] sm:$0xff]
    %v197 = vld [vmem:[%s0 + $0x4e8] sm:$0xff]
    %v198 = vld [vmem:[%s0 + $0x4f0] sm:$0xff]
    %v199 = vld [vmem:[%s0 + $0x4f8] sm:$0xff]
    %v200 = vld [vmem:[%s0 + $0x500] sm:$0xff]
    %v201 = vld [vmem:[%s0 + $0x508] sm:$0xff]
    %v202 = vld [vmem:[%s0 + $0x510] sm:$0xff]
    %v203 = vld [vmem:[%s0 + $0x518] sm:$0xff]
    %v204 = vld [vmem:[%s0 + $0x520] sm:$0xff]
    %v205 = vld [vmem:[%s0 + $0x528] sm:$0xff]
    %v206 = vld [vmem:[%s0 + $0x530] sm:$0xff]
    %v207 = vld [vmem:[%s0 + $0x538] sm:$0xff]
    %v208 = vld [vmem:[%s0 + $0x540] sm:$0xff]
    %v209 = vld [vmem:[%s0 + $0x548] sm:$0xff]
    %v210 = vld [vmem:[%s0 + $0x550] sm:$0xff]
    %v211 = vld [vmem:[%s0 + $0x558] sm:$0xff]
    %v212 = vld [vmem:[%s0 + $0x560] sm:$0xff]
    %v213 = vld [vmem:[%s0 + $0x568] sm:$0xff]
    %v214 = vld [vmem:[%s0 + $0x570] sm:$0xff]
    %v215 = vld [vmem:[%s0 + $0x578] sm:$0xff]
    %v216 = vld [vmem:[%s0 + $0x580] sm:$0xff]
    %v217 = vld [vmem:[%s0 + $0x588] sm:$0xff]
    %v218 = vld [vmem:[%s0 + $0x590] sm:$0xff]
    %v219 = vld [vmem:[%s0 + $0x598] sm:$0xff]
    %v220 = vld [vmem:[%s0 + $0x5a0] sm:$0xff]
    %v221 = vld [vmem:[%s0 + $0x5a8] sm:$0xff]
    %v222 = vld [vmem:[%s0 + $0x5b0] sm:$0xff]
    %v223 = vld [vmem:[%s0 + $0x5b8] sm:$0xff]
    %v224 = vld [vmem:[%s0 + $0x5c0] sm:$0xff]
    %v225 = vld [vmem:[%s0 + $0x5c8] sm:$0xff]
    %v226 = vld [vmem:[%s0 + $0x5d0] sm:$0xff]
    %v227 = vld [vmem:[%s0 + $0x5d8] sm:$0xff]
    %v228 = vld [vmem:[%s0 + $0x5e0] sm:$0xff]
    %v229 = vld [vmem:[%s0 + $0x5e8] sm:$0xff]
    %v230 = vld [vmem:[%s0 + $0x5f0] sm:$0xff]
    %v231 = vld [vmem:[%s0 + $0x5f8] sm:$0xff]
    %v232 = vld [vmem:[%s0 + $0x600] sm:$0xff]
    %v233 = vld [vmem:[%s0 + $0x608] sm:$0xff]
    %v234 = vld [vmem:[%s0 + $0x610] sm:$0xff]
    %v235 = vld [vmem:[%s0 + $0x618] sm:$0xff]
    %v236 = vld [vmem:[%s0 + $0x620] sm:$0xff]
    %v237 = vld [vmem:[%s0 + $0x628] sm:$0xff]
    %v238 = vld [vmem:[%s0 + $0x630] sm:$0xff]
    %v239 = vld [vmem:[%s0 + $0x638] sm:$0xff]
    %v240 = vpack.c.bf16 %v48, %v40
    %v241 = vpack.c.bf16 %v49, %v41
    %v242 = vpack.c.bf16 %v50, %v42
    %v243 = vpack.c.bf16 %v51, %v43
    %v244 = vpack.c.bf16 %v52, %v44
    %v245 = vpack.c.bf16 %v53, %v45
    %v246 = vpack.c.bf16 %v54, %v46
    %v247 = vpack.c.bf16 %v55, %v47
    %v248 = vpack.c.bf16 %v64, %v56
    %v249 = vpack.c.bf16 %v65, %v57
    %v250 = vpack.c.bf16 %v66, %v58
    %v251 = vpack.c.bf16 %v67, %v59
    %v252 = vpack.c.bf16 %v68, %v60
    %v253 = vpack.c.bf16 %v69, %v61
    %v254 = vpack.c.bf16 %v70, %v62
    %v255 = vpack.c.bf16 %v71, %v63
    %v256 = vpack.c.bf16 %v80, %v72
    %v257 = vpack.c.bf16 %v81, %v73
    %v258 = vpack.c.bf16 %v82, %v74
    %v259 = vpack.c.bf16 %v83, %v75
    %v260 = vpack.c.bf16 %v84, %v76
    %v261 = vpack.c.bf16 %v85, %v77
    %v262 = vpack.c.bf16 %v86, %v78
    %v263 = vpack.c.bf16 %v87, %v79
    %v264 = vpack.c.bf16 %v96, %v88
    %v265 = vpack.c.bf16 %v97, %v89
    %v266 = vpack.c.bf16 %v98, %v90
    %v267 = vpack.c.bf16 %v99, %v91
    %v268 = vpack.c.bf16 %v100, %v92
    %v269 = vpack.c.bf16 %v101, %v93
    %v270 = vpack.c.bf16 %v102, %v94
    %v271 = vpack.c.bf16 %v103, %v95
    %v272 = vpack.c.bf16 %v112, %v104
    %v273 = vpack.c.bf16 %v113, %v105
    %v274 = vpack.c.bf16 %v114, %v106
    %v275 = vpack.c.bf16 %v115, %v107
    %v276 = vpack.c.bf16 %v116, %v108
    %v277 = vpack.c.bf16 %v117, %v109
    %v278 = vpack.c.bf16 %v118, %v110
    %v279 = vpack.c.bf16 %v119, %v111
    %v280 = vpack.c.bf16 %v128, %v120
    %v281 = vpack.c.bf16 %v129, %v121
    %v282 = vpack.c.bf16 %v130, %v122
    %v283 = vpack.c.bf16 %v131, %v123
    %v284 = vpack.c.bf16 %v132, %v124
    %v285 = vpack.c.bf16 %v133, %v125
    %v286 = vpack.c.bf16 %v134, %v126
    %v287 = vpack.c.bf16 %v135, %v127
    %v288 = vpack.c.bf16 %v144, %v136
    %v289 = vpack.c.bf16 %v145, %v137
    %v290 = vpack.c.bf16 %v146, %v138
    %v291 = vpack.c.bf16 %v147, %v139
    %v292 = vpack.c.bf16 %v148, %v140
    %v293 = vpack.c.bf16 %v149, %v141
    %v294 = vpack.c.bf16 %v150, %v142
    %v295 = vpack.c.bf16 %v151, %v143
    %v296 = vpack.c.bf16 %v160, %v152
    %v297 = vpack.c.bf16 %v161, %v153
    %v298 = vpack.c.bf16 %v162, %v154
    %v299 = vpack.c.bf16 %v163, %v155
    %v300 = vpack.c.bf16 %v164, %v156
    %v301 = vpack.c.bf16 %v165, %v157
    %v302 = vpack.c.bf16 %v166, %v158
    %v303 = vpack.c.bf16 %v167, %v159
    %v304 = vpack.c.bf16 %v176, %v168
    %v305 = vpack.c.bf16 %v177, %v169
    %v306 = vpack.c.bf16 %v178, %v170
    %v307 = vpack.c.bf16 %v179, %v171
    %v308 = vpack.c.bf16 %v180, %v172
    %v309 = vpack.c.bf16 %v181, %v173
    %v310 = vpack.c.bf16 %v182, %v174
    %v311 = vpack.c.bf16 %v183, %v175
    %v312 = vpack.c.bf16 %v192, %v184
    %v313 = vpack.c.bf16 %v193, %v185
    %v314 = vpack.c.bf16 %v194, %v186
    %v315 = vpack.c.bf16 %v195, %v187
    %v316 = vpack.c.bf16 %v196, %v188
    %v317 = vpack.c.bf16 %v197, %v189
    %v318 = vpack.c.bf16 %v198, %v190
    %v319 = vpack.c.bf16 %v199, %v191
    %v320 = vpack.c.bf16 %v208, %v200
    %v321 = vpack.c.bf16 %v209, %v201
    %v322 = vpack.c.bf16 %v210, %v202
    %v323 = vpack.c.bf16 %v211, %v203
    %v324 = vpack.c.bf16 %v212, %v204
    %v325 = vpack.c.bf16 %v213, %v205
    %v326 = vpack.c.bf16 %v214, %v206
    %v327 = vpack.c.bf16 %v215, %v207
    %v328 = vpack.c.bf16 %v224, %v216
    %v329 = vpack.c.bf16 %v225, %v217
    %v330 = vpack.c.bf16 %v226, %v218
    %v331 = vpack.c.bf16 %v227, %v219
    %v332 = vpack.c.bf16 %v228, %v220
    %v333 = vpack.c.bf16 %v229, %v221
    %v334 = vpack.c.bf16 %v230, %v222
    %v335 = vpack.c.bf16 %v231, %v223
    %v336 = vpack.c.bf16 %v232, %v232
    %v337 = vpack.c.bf16 %v233, %v233
    %v338 = vpack.c.bf16 %v234, %v234
    %v339 = vpack.c.bf16 %v235, %v235
    %v340 = vpack.c.bf16 %v236, %v236
    %v341 = vpack.c.bf16 %v237, %v237
    %v342 = vpack.c.bf16 %v238, %v238
    %v343 = vpack.c.bf16 %v239, %v239
    %v344 = vld [vmem:[%s1] sm:$0xff]
    %v345 = vld [vmem:[%s1 + $0x8] sm:$0xff]
    %v346 = vld [vmem:[%s1 + $0x10] sm:$0xf]
    %v347 = vld [vmem:[%s1 + $0x14] sm:$0xff]
    %v348 = vld [vmem:[%s1 + $0x1c] sm:$0xff]
    %v349 = vld [vmem:[%s1 + $0x24] sm:$0xf]
    %v350 = vld [vmem:[%s1 + $0x28] sm:$0xff]
    %v351 = vld [vmem:[%s1 + $0x30] sm:$0xff]
    %v352 = vld [vmem:[%s1 + $0x38] sm:$0xf]
    %v353 = vld [vmem:[%s1 + $0x3c] sm:$0xff]
    %v354 = vld [vmem:[%s1 + $0x44] sm:$0xff]
    %v355 = vld [vmem:[%s1 + $0x4c] sm:$0xf]
    %v356 = vld [vmem:[%s1 + $0x50] sm:$0xff]
    %v357 = vld [vmem:[%s1 + $0x58] sm:$0xff]
    %v358 = vld [vmem:[%s1 + $0x60] sm:$0xf]
    %v359 = vld [vmem:[%s1 + $0x64] sm:$0xff]
    %v360 = vld [vmem:[%s1 + $0x6c] sm:$0xff]
    %v361 = vld [vmem:[%s1 + $0x74] sm:$0xf]
    %v362 = vld [vmem:[%s1 + $0x78] sm:$0xff]
    %v363 = vld [vmem:[%s1 + $0x80] sm:$0xff]
    %v364 = vld [vmem:[%s1 + $0x88] sm:$0xf]
    %v365 = vld [vmem:[%s1 + $0x8c] sm:$0xff]
    %v366 = vld [vmem:[%s1 + $0x94] sm:$0xff]
    %v367 = vld [vmem:[%s1 + $0x9c] sm:$0xf]
    %v368 = vld [vmem:[%s1 + $0xa0] sm:$0xff]
    %v369 = vld [vmem:[%s1 + $0xa8] sm:$0xff]
    %v370 = vld [vmem:[%s1 + $0xb0] sm:$0xf]
    %v371 = vld [vmem:[%s1 + $0xb4] sm:$0xff]
    %v372 = vld [vmem:[%s1 + $0xbc] sm:$0xff]
    %v373 = vld [vmem:[%s1 + $0xc4] sm:$0xf]
    %v374 = vld [vmem:[%s1 + $0xc8] sm:$0xff]
    %v375 = vld [vmem:[%s1 + $0xd0] sm:$0xff]
    %v376 = vld [vmem:[%s1 + $0xd8] sm:$0xf]
    %v377 = vld [vmem:[%s1 + $0xdc] sm:$0xff]
    %v378 = vld [vmem:[%s1 + $0xe4] sm:$0xff]
    %v379 = vld [vmem:[%s1 + $0xec] sm:$0xf]
    %v380 = vld [vmem:[%s1 + $0xf0] sm:$0xff]
    %v381 = vld [vmem:[%s1 + $0xf8] sm:$0xff]
    %v382 = vld [vmem:[%s1 + $0x100] sm:$0xf]
    %v383 = vld [vmem:[%s1 + $0x104] sm:$0xff]
    %v384 = vld [vmem:[%s1 + $0x10c] sm:$0xff]
    %v385 = vld [vmem:[%s1 + $0x114] sm:$0xf]
    %v386 = vld [vmem:[%s1 + $0x118] sm:$0xff]
    %v387 = vld [vmem:[%s1 + $0x120] sm:$0xff]
    %v388 = vld [vmem:[%s1 + $0x128] sm:$0xf]
    %v389 = vld [vmem:[%s1 + $0x12c] sm:$0xff]
    %v390 = vld [vmem:[%s1 + $0x134] sm:$0xff]
    %v391 = vld [vmem:[%s1 + $0x13c] sm:$0xf]
    %v392 = vld [vmem:[%s1 + $0x140] sm:$0xff]
    %v393 = vld [vmem:[%s1 + $0x148] sm:$0xff]
    %v394 = vld [vmem:[%s1 + $0x150] sm:$0xf]
    %v395 = vld [vmem:[%s1 + $0x154] sm:$0xff]
    %v396 = vld [vmem:[%s1 + $0x15c] sm:$0xff]
    %v397 = vld [vmem:[%s1 + $0x164] sm:$0xf]
    %v398 = vld [vmem:[%s1 + $0x168] sm:$0xff]
    %v399 = vld [vmem:[%s1 + $0x170] sm:$0xff]
    %v400 = vld [vmem:[%s1 + $0x178] sm:$0xf]
    %v401 = vld [vmem:[%s1 + $0x17c] sm:$0xff]
    %v402 = vld [vmem:[%s1 + $0x184] sm:$0xff]
    %v403 = vld [vmem:[%s1 + $0x18c] sm:$0xf]
    %v404 = vld [vmem:[%s1 + $0x190] sm:$0xff]
    %v405 = vld [vmem:[%s1 + $0x198] sm:$0xff]
    %v406 = vld [vmem:[%s1 + $0x1a0] sm:$0xf]
    %v407 = vld [vmem:[%s1 + $0x1a4] sm:$0xff]
    %v408 = vld [vmem:[%s1 + $0x1ac] sm:$0xff]
    %v409 = vld [vmem:[%s1 + $0x1b4] sm:$0xf]
    %v410 = vld [vmem:[%s1 + $0x1b8] sm:$0xff]
    %v411 = vld [vmem:[%s1 + $0x1c0] sm:$0xff]
    %v412 = vld [vmem:[%s1 + $0x1c8] sm:$0xf]
    %v413 = vld [vmem:[%s1 + $0x1cc] sm:$0xff]
    %v414 = vld [vmem:[%s1 + $0x1d4] sm:$0xff]
    %v415 = vld [vmem:[%s1 + $0x1dc] sm:$0xf]
    %v416 = vld [vmem:[%s1 + $0x1e0] sm:$0xff]
    %v417 = vld [vmem:[%s1 + $0x1e8] sm:$0xff]
    %v418 = vld [vmem:[%s1 + $0x1f0] sm:$0xf]
    %v419 = vld [vmem:[%s1 + $0x1f4] sm:$0xff]
    %v420 = vld [vmem:[%s1 + $0x1fc] sm:$0xff]
    %v421 = vld [vmem:[%s1 + $0x204] sm:$0xf]
    %v422 = vld [vmem:[%s1 + $0x208] sm:$0xff]
    %v423 = vld [vmem:[%s1 + $0x210] sm:$0xff]
    %v424 = vld [vmem:[%s1 + $0x218] sm:$0xf]
    %v425 = vld [vmem:[%s1 + $0x21c] sm:$0xff]
    %v426 = vld [vmem:[%s1 + $0x224] sm:$0xff]
    %v427 = vld [vmem:[%s1 + $0x22c] sm:$0xf]
    %v428 = vld [vmem:[%s1 + $0x230] sm:$0xff]
    %v429 = vld [vmem:[%s1 + $0x238] sm:$0xff]
    %v430 = vld [vmem:[%s1 + $0x240] sm:$0xf]
    %v431 = vld [vmem:[%s1 + $0x244] sm:$0xff]
    %v432 = vld [vmem:[%s1 + $0x24c] sm:$0xff]
    %v433 = vld [vmem:[%s1 + $0x254] sm:$0xf]
    %v434 = vld [vmem:[%s1 + $0x258] sm:$0xff]
    %v435 = vld [vmem:[%s1 + $0x260] sm:$0xff]
    %v436 = vld [vmem:[%s1 + $0x268] sm:$0xf]
    %v437 = vld [vmem:[%s1 + $0x26c] sm:$0xff]
    %v438 = vld [vmem:[%s1 + $0x274] sm:$0xff]
    %v439 = vld [vmem:[%s1 + $0x27c] sm:$0xf]
    %v440 = vld [vmem:[%s1 + $0x280] sm:$0xff]
    %v441 = vld [vmem:[%s1 + $0x288] sm:$0xff]
    %v442 = vld [vmem:[%s1 + $0x290] sm:$0xf]
    %v443 = vld [vmem:[%s1 + $0x294] sm:$0xff]
    %v444 = vld [vmem:[%s1 + $0x29c] sm:$0xff]
    %v445 = vld [vmem:[%s1 + $0x2a4] sm:$0xf]
    %v446 = vld [vmem:[%s1 + $0x2a8] sm:$0xff]
    %v447 = vld [vmem:[%s1 + $0x2b0] sm:$0xff]
    %v448 = vld [vmem:[%s1 + $0x2b8] sm:$0xf]
    %v449 = vld [vmem:[%s1 + $0x2bc] sm:$0xff]
    %v450 = vld [vmem:[%s1 + $0x2c4] sm:$0xff]
    %v451 = vld [vmem:[%s1 + $0x2cc] sm:$0xf]
    %v452 = vld [vmem:[%s1 + $0x2d0] sm:$0xff]
    %v453 = vld [vmem:[%s1 + $0x2d8] sm:$0xff]
    %v454 = vld [vmem:[%s1 + $0x2e0] sm:$0xf]
    %v455 = vld [vmem:[%s1 + $0x2e4] sm:$0xff]
    %v456 = vld [vmem:[%s1 + $0x2ec] sm:$0xff]
    %v457 = vld [vmem:[%s1 + $0x2f4] sm:$0xf]
    %v458 = vld [vmem:[%s1 + $0x2f8] sm:$0xff]
    %v459 = vld [vmem:[%s1 + $0x300] sm:$0xff]
    %v460 = vld [vmem:[%s1 + $0x308] sm:$0xf]
    %v461 = vld [vmem:[%s1 + $0x30c] sm:$0xff]
    %v462 = vld [vmem:[%s1 + $0x314] sm:$0xff]
    %v463 = vld [vmem:[%s1 + $0x31c] sm:$0xf]
    %v464 = vld [vmem:[%s1 + $0x320] sm:$0xff]
    %v465 = vld [vmem:[%s1 + $0x328] sm:$0xff]
    %v466 = vld [vmem:[%s1 + $0x330] sm:$0xf]
    %v467 = vld [vmem:[%s1 + $0x334] sm:$0xff]
    %v468 = vld [vmem:[%s1 + $0x33c] sm:$0xff]
    %v469 = vld [vmem:[%s1 + $0x344] sm:$0xf]
    %v470 = vld [vmem:[%s1 + $0x348] sm:$0xff]
    %v471 = vld [vmem:[%s1 + $0x350] sm:$0xff]
    %v472 = vld [vmem:[%s1 + $0x358] sm:$0xf]
    %v473 = vld [vmem:[%s1 + $0x35c] sm:$0xff]
    %v474 = vld [vmem:[%s1 + $0x364] sm:$0xff]
    %v475 = vld [vmem:[%s1 + $0x36c] sm:$0xf]
    %v476 = vld [vmem:[%s1 + $0x370] sm:$0xff]
    %v477 = vld [vmem:[%s1 + $0x378] sm:$0xff]
    %v478 = vld [vmem:[%s1 + $0x380] sm:$0xf]
    %v479 = vld [vmem:[%s1 + $0x384] sm:$0xff]
    %v480 = vld [vmem:[%s1 + $0x38c] sm:$0xff]
    %v481 = vld [vmem:[%s1 + $0x394] sm:$0xf]
    %v482 = vld [vmem:[%s1 + $0x398] sm:$0xff]
    %v483 = vld [vmem:[%s1 + $0x3a0] sm:$0xff]
    %v484 = vld [vmem:[%s1 + $0x3a8] sm:$0xf]
    %v485 = vld [vmem:[%s1 + $0x3ac] sm:$0xff]
    %v486 = vld [vmem:[%s1 + $0x3b4] sm:$0xff]
    %v487 = vld [vmem:[%s1 + $0x3bc] sm:$0xf]
    %v488 = vld [vmem:[%s1 + $0x3c0] sm:$0xff]
    %v489 = vld [vmem:[%s1 + $0x3c8] sm:$0xff]
    %v490 = vld [vmem:[%s1 + $0x3d0] sm:$0xf]
    %v491 = vld [vmem:[%s1 + $0x3d4] sm:$0xff]
    %v492 = vld [vmem:[%s1 + $0x3dc] sm:$0xff]
    %v493 = vld [vmem:[%s1 + $0x3e4] sm:$0xf]
    %v494 = vld [vmem:[%s1 + $0x3e8] sm:$0xff]
    %v495 = vld [vmem:[%s1 + $0x3f0] sm:$0xff]
    %v496 = vld [vmem:[%s1 + $0x3f8] sm:$0xf]
    %v497 = vld [vmem:[%s1 + $0x3fc] sm:$0xff]
    %v498 = vld [vmem:[%s1 + $0x404] sm:$0xff]
    %v499 = vld [vmem:[%s1 + $0x40c] sm:$0xf]
    %v500 = vld [vmem:[%s1 + $0x410] sm:$0xff]
    %v501 = vld [vmem:[%s1 + $0x418] sm:$0xff]
    %v502 = vld [vmem:[%s1 + $0x420] sm:$0xf]
    %v503 = vld [vmem:[%s1 + $0x424] sm:$0xff]
    %v504 = vld [vmem:[%s1 + $0x42c] sm:$0xff]
    %v505 = vld [vmem:[%s1 + $0x434] sm:$0xf]
    %v506 = vld [vmem:[%s1 + $0x438] sm:$0xff]
    %v507 = vld [vmem:[%s1 + $0x440] sm:$0xff]
    %v508 = vld [vmem:[%s1 + $0x448] sm:$0xf]
    %v509 = vld [vmem:[%s1 + $0x44c] sm:$0xff]
    %v510 = vld [vmem:[%s1 + $0x454] sm:$0xff]
    %v511 = vld [vmem:[%s1 + $0x45c] sm:$0xf]
    %v512 = vld [vmem:[%s1 + $0x460] sm:$0xff]
    %v513 = vld [vmem:[%s1 + $0x468] sm:$0xff]
    %v514 = vld [vmem:[%s1 + $0x470] sm:$0xf]
    %v515 = vld [vmem:[%s1 + $0x474] sm:$0xff]
    %v516 = vld [vmem:[%s1 + $0x47c] sm:$0xff]
    %v517 = vld [vmem:[%s1 + $0x484] sm:$0xf]
    %v518 = vld [vmem:[%s1 + $0x488] sm:$0xff]
    %v519 = vld [vmem:[%s1 + $0x490] sm:$0xff]
    %v520 = vld [vmem:[%s1 + $0x498] sm:$0xf]
    %v521 = vld [vmem:[%s1 + $0x49c] sm:$0xff]
    %v522 = vld [vmem:[%s1 + $0x4a4] sm:$0xff]
    %v523 = vld [vmem:[%s1 + $0x4ac] sm:$0xf]
    %v524 = vld [vmem:[%s1 + $0x4b0] sm:$0xff]
    %v525 = vld [vmem:[%s1 + $0x4b8] sm:$0xff]
    %v526 = vld [vmem:[%s1 + $0x4c0] sm:$0xf]
    %v527 = vld [vmem:[%s1 + $0x4c4] sm:$0xff]
    %v528 = vld [vmem:[%s1 + $0x4cc] sm:$0xff]
    %v529 = vld [vmem:[%s1 + $0x4d4] sm:$0xf]
    %v530 = vld [vmem:[%s1 + $0x4d8] sm:$0xff]
    %v531 = vld [vmem:[%s1 + $0x4e0] sm:$0xff]
    %v532 = vld [vmem:[%s1 + $0x4e8] sm:$0xf]
    %v533 = vld [vmem:[%s1 + $0x4ec] sm:$0xff]
    %v534 = vld [vmem:[%s1 + $0x4f4] sm:$0xff]
    %v535 = vld [vmem:[%s1 + $0x4fc] sm:$0xf]
    %v536 = vld [vmem:[%s1 + $0x500] sm:$0xff]
    %v537 = vld [vmem:[%s1 + $0x508] sm:$0xff]
    %v538 = vld [vmem:[%s1 + $0x510] sm:$0xf]
    %v539 = vld [vmem:[%s1 + $0x514] sm:$0xff]
    %v540 = vld [vmem:[%s1 + $0x51c] sm:$0xff]
    %v541 = vld [vmem:[%s1 + $0x524] sm:$0xf]
    %v542 = vld [vmem:[%s1 + $0x528] sm:$0xff]
    %v543 = vld [vmem:[%s1 + $0x530] sm:$0xff]
    %v544 = vld [vmem:[%s1 + $0x538] sm:$0xf]
    %v545 = vld [vmem:[%s1 + $0x53c] sm:$0xff]
    %v546 = vld [vmem:[%s1 + $0x544] sm:$0xff]
    %v547 = vld [vmem:[%s1 + $0x54c] sm:$0xf]
    %v548 = vld [vmem:[%s1 + $0x550] sm:$0xff]
    %v549 = vld [vmem:[%s1 + $0x558] sm:$0xff]
    %v550 = vld [vmem:[%s1 + $0x560] sm:$0xf]
    %v551 = vld [vmem:[%s1 + $0x564] sm:$0xff]
    %v552 = vld [vmem:[%s1 + $0x56c] sm:$0xff]
    %v553 = vld [vmem:[%s1 + $0x574] sm:$0xf]
    %v554 = vld [vmem:[%s1 + $0x578] sm:$0xff]
    %v555 = vld [vmem:[%s1 + $0x580] sm:$0xff]
    %v556 = vld [vmem:[%s1 + $0x588] sm:$0xf]
    %v557 = vld [vmem:[%s1 + $0x58c] sm:$0xff]
    %v558 = vld [vmem:[%s1 + $0x594] sm:$0xff]
    %v559 = vld [vmem:[%s1 + $0x59c] sm:$0xf]
    %v560 = vld [vmem:[%s1 + $0x5a0] sm:$0xff]
    %v561 = vld [vmem:[%s1 + $0x5a8] sm:$0xff]
    %v562 = vld [vmem:[%s1 + $0x5b0] sm:$0xf]
    %v563 = vld [vmem:[%s1 + $0x5b4] sm:$0xff]
    %v564 = vld [vmem:[%s1 + $0x5bc] sm:$0xff]
    %v565 = vld [vmem:[%s1 + $0x5c4] sm:$0xf]
    %v566 = vld [vmem:[%s1 + $0x5c8] sm:$0xff]
    %v567 = vld [vmem:[%s1 + $0x5d0] sm:$0xff]
    %v568 = vld [vmem:[%s1 + $0x5d8] sm:$0xf]
    %v569 = vld [vmem:[%s1 + $0x5dc] sm:$0xff]
    %v570 = vld [vmem:[%s1 + $0x5e4] sm:$0xff]
    %v571 = vld [vmem:[%s1 + $0x5ec] sm:$0xf]
    %v572 = vld [vmem:[%s1 + $0x5f0] sm:$0xff]
    %v573 = vld [vmem:[%s1 + $0x5f8] sm:$0xff]
    %v574 = vld [vmem:[%s1 + $0x600] sm:$0xf]
    %v575 = vld [vmem:[%s1 + $0x604] sm:$0xff]
    %v576 = vld [vmem:[%s1 + $0x60c] sm:$0xff]
    %v577 = vld [vmem:[%s1 + $0x614] sm:$0xf]
    %v578 = vld [vmem:[%s1 + $0x618] sm:$0xff]
    %v579 = vld [vmem:[%s1 + $0x620] sm:$0xff]
    %v580 = vld [vmem:[%s1 + $0x628] sm:$0xf]
    %v581 = vld [vmem:[%s1 + $0x62c] sm:$0xff]
    %v582 = vld [vmem:[%s1 + $0x634] sm:$0xff]
    %v583 = vld [vmem:[%s1 + $0x63c] sm:$0xf]
    %v584 = vld [vmem:[%s1 + $0x640] sm:$0xff]
    %v585 = vld [vmem:[%s1 + $0x648] sm:$0xff]
    %v586 = vld [vmem:[%s1 + $0x650] sm:$0xf]
    %v587 = vld [vmem:[%s1 + $0x654] sm:$0xff]
    %v588 = vld [vmem:[%s1 + $0x65c] sm:$0xff]
    %v589 = vld [vmem:[%s1 + $0x664] sm:$0xf]
    %v590 = vld [vmem:[%s1 + $0x668] sm:$0xff]
    %v591 = vld [vmem:[%s1 + $0x670] sm:$0xff]
    %v592 = vld [vmem:[%s1 + $0x678] sm:$0xf]
    %v593 = vld [vmem:[%s1 + $0x67c] sm:$0xff]
    %v594 = vld [vmem:[%s1 + $0x684] sm:$0xff]
    %v595 = vld [vmem:[%s1 + $0x68c] sm:$0xf]
    %v596 = vld [vmem:[%s1 + $0x690] sm:$0xff]
    %v597 = vld [vmem:[%s1 + $0x698] sm:$0xff]
    %v598 = vld [vmem:[%s1 + $0x6a0] sm:$0xf]
    %v599 = vld [vmem:[%s1 + $0x6a4] sm:$0xff]
    %v600 = vld [vmem:[%s1 + $0x6ac] sm:$0xff]
    %v601 = vld [vmem:[%s1 + $0x6b4] sm:$0xf]
    %v602 = vld [vmem:[%s1 + $0x6b8] sm:$0xff]
    %v603 = vld [vmem:[%s1 + $0x6c0] sm:$0xff]
    %v604 = vld [vmem:[%s1 + $0x6c8] sm:$0xf]
    %v605 = vld [vmem:[%s1 + $0x6cc] sm:$0xff]
    %v606 = vld [vmem:[%s1 + $0x6d4] sm:$0xff]
    %v607 = vld [vmem:[%s1 + $0x6dc] sm:$0xf]
    %v608 = vld [vmem:[%s1 + $0x6e0] sm:$0xff]
    %v609 = vld [vmem:[%s1 + $0x6e8] sm:$0xff]
    %v610 = vld [vmem:[%s1 + $0x6f0] sm:$0xf]
    %v611 = vld [vmem:[%s1 + $0x6f4] sm:$0xff]
    %v612 = vld [vmem:[%s1 + $0x6fc] sm:$0xff]
    %v613 = vld [vmem:[%s1 + $0x704] sm:$0xf]
    %v614 = vld [vmem:[%s1 + $0x708] sm:$0xff]
    %v615 = vld [vmem:[%s1 + $0x710] sm:$0xff]
    %v616 = vld [vmem:[%s1 + $0x718] sm:$0xf]
    %v617 = vld [vmem:[%s1 + $0x71c] sm:$0xff]
    %v618 = vld [vmem:[%s1 + $0x724] sm:$0xff]
    %v619 = vld [vmem:[%s1 + $0x72c] sm:$0xf]
    %v620 = vld [vmem:[%s1 + $0x730] sm:$0xff]
    %v621 = vld [vmem:[%s1 + $0x738] sm:$0xff]
    %v622 = vld [vmem:[%s1 + $0x740] sm:$0xf]
    %v623 = vld [vmem:[%s1 + $0x744] sm:$0xff]
    %v624 = vld [vmem:[%s1 + $0x74c] sm:$0xff]
    %v625 = vld [vmem:[%s1 + $0x754] sm:$0xf]
    %v626 = vld [vmem:[%s1 + $0x758] sm:$0xff]
    %v627 = vld [vmem:[%s1 + $0x760] sm:$0xff]
    %v628 = vld [vmem:[%s1 + $0x768] sm:$0xf]
    %v629 = vld [vmem:[%s1 + $0x76c] sm:$0xff]
    %v630 = vld [vmem:[%s1 + $0x774] sm:$0xff]
    %v631 = vld [vmem:[%s1 + $0x77c] sm:$0xf]
    %v632 = vld [vmem:[%s1 + $0x780] sm:$0xff]
    %v633 = vld [vmem:[%s1 + $0x788] sm:$0xff]
    %v634 = vld [vmem:[%s1 + $0x790] sm:$0xf]
    %v635 = vld [vmem:[%s1 + $0x794] sm:$0xff]
    %v636 = vld [vmem:[%s1 + $0x79c] sm:$0xff]
    %v637 = vld [vmem:[%s1 + $0x7a4] sm:$0xf]
    %v638 = vld [vmem:[%s1 + $0x7a8] sm:$0xff]
    %v639 = vld [vmem:[%s1 + $0x7b0] sm:$0xff]
    %v640 = vld [vmem:[%s1 + $0x7b8] sm:$0xf]
    %v641 = vld [vmem:[%s1 + $0x7bc] sm:$0xff]
    %v642 = vld [vmem:[%s1 + $0x7c4] sm:$0xff]
    %v643 = vld [vmem:[%s1 + $0x7cc] sm:$0xf]
    %v644 = vld [vmem:[%s1 + $0x7d0] sm:$0xff]
    %v645 = vld [vmem:[%s1 + $0x7d8] sm:$0xff]
    %v646 = vld [vmem:[%s1 + $0x7e0] sm:$0xf]
    %v647 = vld [vmem:[%s1 + $0x7e4] sm:$0xff]
    %v648 = vld [vmem:[%s1 + $0x7ec] sm:$0xff]
    %v649 = vld [vmem:[%s1 + $0x7f4] sm:$0xf]
    %v650 = vld [vmem:[%s1 + $0x7f8] sm:$0xff]
    %v651 = vld [vmem:[%s1 + $0x800] sm:$0xff]
    %v652 = vld [vmem:[%s1 + $0x808] sm:$0xf]
    %v653 = vld [vmem:[%s1 + $0x80c] sm:$0xff]
    %v654 = vld [vmem:[%s1 + $0x814] sm:$0xff]
    %v655 = vld [vmem:[%s1 + $0x81c] sm:$0xf]
    %v656 = vld [vmem:[%s1 + $0x820] sm:$0xff]
    %v657 = vld [vmem:[%s1 + $0x828] sm:$0xff]
    %v658 = vld [vmem:[%s1 + $0x830] sm:$0xf]
    %v659 = vld [vmem:[%s1 + $0x834] sm:$0xff]
    %v660 = vld [vmem:[%s1 + $0x83c] sm:$0xff]
    %v661 = vld [vmem:[%s1 + $0x844] sm:$0xf]
    %v662 = vld [vmem:[%s1 + $0x848] sm:$0xff]
    %v663 = vld [vmem:[%s1 + $0x850] sm:$0xff]
    %v664 = vld [vmem:[%s1 + $0x858] sm:$0xf]
    %v665 = vld [vmem:[%s1 + $0x85c] sm:$0xff]
    %v666 = vld [vmem:[%s1 + $0x864] sm:$0xff]
    %v667 = vld [vmem:[%s1 + $0x86c] sm:$0xf]
    %v668 = vld [vmem:[%s1 + $0x870] sm:$0xff]
    %v669 = vld [vmem:[%s1 + $0x878] sm:$0xff]
    %v670 = vld [vmem:[%s1 + $0x880] sm:$0xf]
    %v671 = vld [vmem:[%s1 + $0x884] sm:$0xff]
    %v672 = vld [vmem:[%s1 + $0x88c] sm:$0xff]
    %v673 = vld [vmem:[%s1 + $0x894] sm:$0xf]
    %v674 = vld [vmem:[%s1 + $0x898] sm:$0xff]
    %v675 = vld [vmem:[%s1 + $0x8a0] sm:$0xff]
    %v676 = vld [vmem:[%s1 + $0x8a8] sm:$0xf]
    %v677 = vld [vmem:[%s1 + $0x8ac] sm:$0xff]
    %v678 = vld [vmem:[%s1 + $0x8b4] sm:$0xff]
    %v679 = vld [vmem:[%s1 + $0x8bc] sm:$0xf]
    %v680 = vld [vmem:[%s1 + $0x8c0] sm:$0xff]
    %v681 = vld [vmem:[%s1 + $0x8c8] sm:$0xff]
    %v682 = vld [vmem:[%s1 + $0x8d0] sm:$0xf]
    %v683 = vld [vmem:[%s1 + $0x8d4] sm:$0xff]
    %v684 = vld [vmem:[%s1 + $0x8dc] sm:$0xff]
    %v685 = vld [vmem:[%s1 + $0x8e4] sm:$0xf]
    %v686 = vld [vmem:[%s1 + $0x8e8] sm:$0xff]
    %v687 = vld [vmem:[%s1 + $0x8f0] sm:$0xff]
    %v688 = vld [vmem:[%s1 + $0x8f8] sm:$0xf]
    %v689 = vld [vmem:[%s1 + $0x8fc] sm:$0xff]
    %v690 = vld [vmem:[%s1 + $0x904] sm:$0xff]
    %v691 = vld [vmem:[%s1 + $0x90c] sm:$0xf]
    %v692 = vld [vmem:[%s1 + $0x910] sm:$0xff]
    %v693 = vld [vmem:[%s1 + $0x918] sm:$0xff]
    %v694 = vld [vmem:[%s1 + $0x920] sm:$0xf]
    %v695 = vld [vmem:[%s1 + $0x924] sm:$0xff]
    %v696 = vld [vmem:[%s1 + $0x92c] sm:$0xff]
    %v697 = vld [vmem:[%s1 + $0x934] sm:$0xf]
    %v698 = vld [vmem:[%s1 + $0x938] sm:$0xff]
    %v699 = vld [vmem:[%s1 + $0x940] sm:$0xff]
    %v700 = vld [vmem:[%s1 + $0x948] sm:$0xf]
    %v701 = vld [vmem:[%s1 + $0x94c] sm:$0xff]
    %v702 = vld [vmem:[%s1 + $0x954] sm:$0xff]
    %v703 = vld [vmem:[%s1 + $0x95c] sm:$0xf]
    %v704 = vld [vmem:[%s1 + $0x960] sm:$0xff]
    %v705 = vld [vmem:[%s1 + $0x968] sm:$0xff]
    %v706 = vld [vmem:[%s1 + $0x970] sm:$0xf]
    %v707 = vld [vmem:[%s1 + $0x974] sm:$0xff]
    %v708 = vld [vmem:[%s1 + $0x97c] sm:$0xff]
    %v709 = vld [vmem:[%s1 + $0x984] sm:$0xf]
    %v710 = vld [vmem:[%s1 + $0x988] sm:$0xff]
    %v711 = vld [vmem:[%s1 + $0x990] sm:$0xff]
    %v712 = vld [vmem:[%s1 + $0x998] sm:$0xf]
    %v713 = vld [vmem:[%s1 + $0x99c] sm:$0xff]
    %v714 = vld [vmem:[%s1 + $0x9a4] sm:$0xff]
    %v715 = vld [vmem:[%s1 + $0x9ac] sm:$0xf]
    %v716 = vld [vmem:[%s1 + $0x9b0] sm:$0xff]
    %v717 = vld [vmem:[%s1 + $0x9b8] sm:$0xff]
    %v718 = vld [vmem:[%s1 + $0x9c0] sm:$0xf]
    %v719 = vld [vmem:[%s1 + $0x9c4] sm:$0xff]
    %v720 = vld [vmem:[%s1 + $0x9cc] sm:$0xff]
    %v721 = vld [vmem:[%s1 + $0x9d4] sm:$0xf]
    %v722 = vld [vmem:[%s1 + $0x9d8] sm:$0xff]
    %v723 = vld [vmem:[%s1 + $0x9e0] sm:$0xff]
    %v724 = vld [vmem:[%s1 + $0x9e8] sm:$0xf]
    %v725 = vld [vmem:[%s1 + $0x9ec] sm:$0xff]
    %v726 = vld [vmem:[%s1 + $0x9f4] sm:$0xff]
    %v727 = vld [vmem:[%s1 + $0x9fc] sm:$0xf]
    %v1112 = vunpack.c.l.b16 %v344
    %v1113 = vunpack.c.h.b16 %v344
    %v1114 = vunpack.c.l.b16 %v345
    %v1115 = vunpack.c.h.b16 %v345
    %v1116 = vunpack.c.l.b16 %v346
    %v1117 = vunpack.c.l.b16 %v347
    %v1118 = vunpack.c.h.b16 %v347
    %v1119 = vunpack.c.l.b16 %v348
    %v1120 = vunpack.c.h.b16 %v348
    %v1121 = vunpack.c.l.b16 %v349
    %v1122 = vunpack.c.l.b16 %v350
    %v1123 = vunpack.c.h.b16 %v350
    %v1124 = vunpack.c.l.b16 %v351
    %v1125 = vunpack.c.h.b16 %v351
    %v1126 = vunpack.c.l.b16 %v352
    %v1127 = vunpack.c.l.b16 %v353
    %v1128 = vunpack.c.h.b16 %v353
    %v1129 = vunpack.c.l.b16 %v354
    %v1130 = vunpack.c.h.b16 %v354
    %v1131 = vunpack.c.l.b16 %v355
    %v1132 = vunpack.c.l.b16 %v356
    %v1133 = vunpack.c.h.b16 %v356
    %v1134 = vunpack.c.l.b16 %v357
    %v1135 = vunpack.c.h.b16 %v357
    %v1136 = vunpack.c.l.b16 %v358
    %v1137 = vunpack.c.l.b16 %v359
    %v1138 = vunpack.c.h.b16 %v359
    %v1139 = vunpack.c.l.b16 %v360
    %v1140 = vunpack.c.h.b16 %v360
    %v1141 = vunpack.c.l.b16 %v361
    %v1142 = vunpack.c.l.b16 %v362
    %v1143 = vunpack.c.h.b16 %v362
    %v1144 = vunpack.c.l.b16 %v363
    %v1145 = vunpack.c.h.b16 %v363
    %v1146 = vunpack.c.l.b16 %v364
    %v1147 = vunpack.c.l.b16 %v365
    %v1148 = vunpack.c.h.b16 %v365
    %v1149 = vunpack.c.l.b16 %v366
    %v1150 = vunpack.c.h.b16 %v366
    %v1151 = vunpack.c.l.b16 %v367
    %v1152 = vunpack.c.l.b16 %v368
    %v1153 = vunpack.c.h.b16 %v368
    %v1154 = vunpack.c.l.b16 %v369
    %v1155 = vunpack.c.h.b16 %v369
    %v1156 = vunpack.c.l.b16 %v370
    %v1157 = vunpack.c.l.b16 %v371
    %v1158 = vunpack.c.h.b16 %v371
    %v1159 = vunpack.c.l.b16 %v372
    %v1160 = vunpack.c.h.b16 %v372
    %v1161 = vunpack.c.l.b16 %v373
    %v1162 = vunpack.c.l.b16 %v374
    %v1163 = vunpack.c.h.b16 %v374
    %v1164 = vunpack.c.l.b16 %v375
    %v1165 = vunpack.c.h.b16 %v375
    %v1166 = vunpack.c.l.b16 %v376
    %v1167 = vunpack.c.l.b16 %v377
    %v1168 = vunpack.c.h.b16 %v377
    %v1169 = vunpack.c.l.b16 %v378
    %v1170 = vunpack.c.h.b16 %v378
    %v1171 = vunpack.c.l.b16 %v379
    %v1172 = vunpack.c.l.b16 %v380
    %v1173 = vunpack.c.h.b16 %v380
    %v1174 = vunpack.c.l.b16 %v381
    %v1175 = vunpack.c.h.b16 %v381
    %v1176 = vunpack.c.l.b16 %v382
    %v1177 = vunpack.c.l.b16 %v383
    %v1178 = vunpack.c.h.b16 %v383
    %v1179 = vunpack.c.l.b16 %v384
    %v1180 = vunpack.c.h.b16 %v384
    %v1181 = vunpack.c.l.b16 %v385
    %v1182 = vunpack.c.l.b16 %v386
    %v1183 = vunpack.c.h.b16 %v386
    %v1184 = vunpack.c.l.b16 %v387
    %v1185 = vunpack.c.h.b16 %v387
    %v1186 = vunpack.c.l.b16 %v388
    %v1187 = vunpack.c.l.b16 %v389
    %v1188 = vunpack.c.h.b16 %v389
    %v1189 = vunpack.c.l.b16 %v390
    %v1190 = vunpack.c.h.b16 %v390
    %v1191 = vunpack.c.l.b16 %v391
    %v1192 = vunpack.c.l.b16 %v392
    %v1193 = vunpack.c.h.b16 %v392
    %v1194 = vunpack.c.l.b16 %v393
    %v1195 = vunpack.c.h.b16 %v393
    %v1196 = vunpack.c.l.b16 %v394
    %v1197 = vunpack.c.l.b16 %v395
    %v1198 = vunpack.c.h.b16 %v395
    %v1199 = vunpack.c.l.b16 %v396
    %v1200 = vunpack.c.h.b16 %v396
    %v1201 = vunpack.c.l.b16 %v397
    %v1202 = vunpack.c.l.b16 %v398
    %v1203 = vunpack.c.h.b16 %v398
    %v1204 = vunpack.c.l.b16 %v399
    %v1205 = vunpack.c.h.b16 %v399
    %v1206 = vunpack.c.l.b16 %v400
    %v1207 = vunpack.c.l.b16 %v401
    %v1208 = vunpack.c.h.b16 %v401
    %v1209 = vunpack.c.l.b16 %v402
    %v1210 = vunpack.c.h.b16 %v402
    %v1211 = vunpack.c.l.b16 %v403
    %v1212 = vunpack.c.l.b16 %v404
    %v1213 = vunpack.c.h.b16 %v404
    %v1214 = vunpack.c.l.b16 %v405
    %v1215 = vunpack.c.h.b16 %v405
    %v1216 = vunpack.c.l.b16 %v406
    %v1217 = vunpack.c.l.b16 %v407
    %v1218 = vunpack.c.h.b16 %v407
    %v1219 = vunpack.c.l.b16 %v408
    %v1220 = vunpack.c.h.b16 %v408
    %v1221 = vunpack.c.l.b16 %v409
    %v1222 = vunpack.c.l.b16 %v410
    %v1223 = vunpack.c.h.b16 %v410
    %v1224 = vunpack.c.l.b16 %v411
    %v1225 = vunpack.c.h.b16 %v411
    %v1226 = vunpack.c.l.b16 %v412
    %v1227 = vunpack.c.l.b16 %v413
    %v1228 = vunpack.c.h.b16 %v413
    %v1229 = vunpack.c.l.b16 %v414
    %v1230 = vunpack.c.h.b16 %v414
    %v1231 = vunpack.c.l.b16 %v415
    %v1232 = vunpack.c.l.b16 %v416
    %v1233 = vunpack.c.h.b16 %v416
    %v1234 = vunpack.c.l.b16 %v417
    %v1235 = vunpack.c.h.b16 %v417
    %v1236 = vunpack.c.l.b16 %v418
    %v1237 = vunpack.c.l.b16 %v419
    %v1238 = vunpack.c.h.b16 %v419
    %v1239 = vunpack.c.l.b16 %v420
    %v1240 = vunpack.c.h.b16 %v420
    %v1241 = vunpack.c.l.b16 %v421
    %v1242 = vunpack.c.l.b16 %v422
    %v1243 = vunpack.c.h.b16 %v422
    %v1244 = vunpack.c.l.b16 %v423
    %v1245 = vunpack.c.h.b16 %v423
    %v1246 = vunpack.c.l.b16 %v424
    %v1247 = vunpack.c.l.b16 %v425
    %v1248 = vunpack.c.h.b16 %v425
    %v1249 = vunpack.c.l.b16 %v426
    %v1250 = vunpack.c.h.b16 %v426
    %v1251 = vunpack.c.l.b16 %v427
    %v1252 = vunpack.c.l.b16 %v428
    %v1253 = vunpack.c.h.b16 %v428
    %v1254 = vunpack.c.l.b16 %v429
    %v1255 = vunpack.c.h.b16 %v429
    %v1256 = vunpack.c.l.b16 %v430
    %v1257 = vunpack.c.l.b16 %v431
    %v1258 = vunpack.c.h.b16 %v431
    %v1259 = vunpack.c.l.b16 %v432
    %v1260 = vunpack.c.h.b16 %v432
    %v1261 = vunpack.c.l.b16 %v433
    %v1262 = vunpack.c.l.b16 %v434
    %v1263 = vunpack.c.h.b16 %v434
    %v1264 = vunpack.c.l.b16 %v435
    %v1265 = vunpack.c.h.b16 %v435
    %v1266 = vunpack.c.l.b16 %v436
    %v1267 = vunpack.c.l.b16 %v437
    %v1268 = vunpack.c.h.b16 %v437
    %v1269 = vunpack.c.l.b16 %v438
    %v1270 = vunpack.c.h.b16 %v438
    %v1271 = vunpack.c.l.b16 %v439
    %v1272 = vunpack.c.l.b16 %v440
    %v1273 = vunpack.c.h.b16 %v440
    %v1274 = vunpack.c.l.b16 %v441
    %v1275 = vunpack.c.h.b16 %v441
    %v1276 = vunpack.c.l.b16 %v442
    %v1277 = vunpack.c.l.b16 %v443
    %v1278 = vunpack.c.h.b16 %v443
    %v1279 = vunpack.c.l.b16 %v444
    %v1280 = vunpack.c.h.b16 %v444
    %v1281 = vunpack.c.l.b16 %v445
    %v1282 = vunpack.c.l.b16 %v446
    %v1283 = vunpack.c.h.b16 %v446
    %v1284 = vunpack.c.l.b16 %v447
    %v1285 = vunpack.c.h.b16 %v447
    %v1286 = vunpack.c.l.b16 %v448
    %v1287 = vunpack.c.l.b16 %v449
    %v1288 = vunpack.c.h.b16 %v449
    %v1289 = vunpack.c.l.b16 %v450
    %v1290 = vunpack.c.h.b16 %v450
    %v1291 = vunpack.c.l.b16 %v451
    %v1292 = vunpack.c.l.b16 %v452
    %v1293 = vunpack.c.h.b16 %v452
    %v1294 = vunpack.c.l.b16 %v453
    %v1295 = vunpack.c.h.b16 %v453
    %v1296 = vunpack.c.l.b16 %v454
    %v1297 = vunpack.c.l.b16 %v455
    %v1298 = vunpack.c.h.b16 %v455
    %v1299 = vunpack.c.l.b16 %v456
    %v1300 = vunpack.c.h.b16 %v456
    %v1301 = vunpack.c.l.b16 %v457
    %v1302 = vunpack.c.l.b16 %v458
    %v1303 = vunpack.c.h.b16 %v458
    %v1304 = vunpack.c.l.b16 %v459
    %v1305 = vunpack.c.h.b16 %v459
    %v1306 = vunpack.c.l.b16 %v460
    %v1307 = vunpack.c.l.b16 %v461
    %v1308 = vunpack.c.h.b16 %v461
    %v1309 = vunpack.c.l.b16 %v462
    %v1310 = vunpack.c.h.b16 %v462
    %v1311 = vunpack.c.l.b16 %v463
    %v1312 = vunpack.c.l.b16 %v464
    %v1313 = vunpack.c.h.b16 %v464
    %v1314 = vunpack.c.l.b16 %v465
    %v1315 = vunpack.c.h.b16 %v465
    %v1316 = vunpack.c.l.b16 %v466
    %v1317 = vunpack.c.l.b16 %v467
    %v1318 = vunpack.c.h.b16 %v467
    %v1319 = vunpack.c.l.b16 %v468
    %v1320 = vunpack.c.h.b16 %v468
    %v1321 = vunpack.c.l.b16 %v469
    %v1322 = vunpack.c.l.b16 %v470
    %v1323 = vunpack.c.h.b16 %v470
    %v1324 = vunpack.c.l.b16 %v471
    %v1325 = vunpack.c.h.b16 %v471
    %v1326 = vunpack.c.l.b16 %v472
    %v1327 = vunpack.c.l.b16 %v473
    %v1328 = vunpack.c.h.b16 %v473
    %v1329 = vunpack.c.l.b16 %v474
    %v1330 = vunpack.c.h.b16 %v474
    %v1331 = vunpack.c.l.b16 %v475
    %v1332 = vunpack.c.l.b16 %v476
    %v1333 = vunpack.c.h.b16 %v476
    %v1334 = vunpack.c.l.b16 %v477
    %v1335 = vunpack.c.h.b16 %v477
    %v1336 = vunpack.c.l.b16 %v478
    %v1337 = vunpack.c.l.b16 %v479
    %v1338 = vunpack.c.h.b16 %v479
    %v1339 = vunpack.c.l.b16 %v480
    %v1340 = vunpack.c.h.b16 %v480
    %v1341 = vunpack.c.l.b16 %v481
    %v1342 = vunpack.c.l.b16 %v482
    %v1343 = vunpack.c.h.b16 %v482
    %v1344 = vunpack.c.l.b16 %v483
    %v1345 = vunpack.c.h.b16 %v483
    %v1346 = vunpack.c.l.b16 %v484
    %v1347 = vunpack.c.l.b16 %v485
    %v1348 = vunpack.c.h.b16 %v485
    %v1349 = vunpack.c.l.b16 %v486
    %v1350 = vunpack.c.h.b16 %v486
    %v1351 = vunpack.c.l.b16 %v487
    %v1352 = vunpack.c.l.b16 %v488
    %v1353 = vunpack.c.h.b16 %v488
    %v1354 = vunpack.c.l.b16 %v489
    %v1355 = vunpack.c.h.b16 %v489
    %v1356 = vunpack.c.l.b16 %v490
    %v1357 = vunpack.c.l.b16 %v491
    %v1358 = vunpack.c.h.b16 %v491
    %v1359 = vunpack.c.l.b16 %v492
    %v1360 = vunpack.c.h.b16 %v492
    %v1361 = vunpack.c.l.b16 %v493
    %v1362 = vunpack.c.l.b16 %v494
    %v1363 = vunpack.c.h.b16 %v494
    %v1364 = vunpack.c.l.b16 %v495
    %v1365 = vunpack.c.h.b16 %v495
    %v1366 = vunpack.c.l.b16 %v496
    %v1367 = vunpack.c.l.b16 %v497
    %v1368 = vunpack.c.h.b16 %v497
    %v1369 = vunpack.c.l.b16 %v498
    %v1370 = vunpack.c.h.b16 %v498
    %v1371 = vunpack.c.l.b16 %v499
    %v1372 = vunpack.c.l.b16 %v500
    %v1373 = vunpack.c.h.b16 %v500
    %v1374 = vunpack.c.l.b16 %v501
    %v1375 = vunpack.c.h.b16 %v501
    %v1376 = vunpack.c.l.b16 %v502
    %v1377 = vunpack.c.l.b16 %v503
    %v1378 = vunpack.c.h.b16 %v503
    %v1379 = vunpack.c.l.b16 %v504
    %v1380 = vunpack.c.h.b16 %v504
    %v1381 = vunpack.c.l.b16 %v505
    %v1382 = vunpack.c.l.b16 %v506
    %v1383 = vunpack.c.h.b16 %v506
    %v1384 = vunpack.c.l.b16 %v507
    %v1385 = vunpack.c.h.b16 %v507
    %v1386 = vunpack.c.l.b16 %v508
    %v1387 = vunpack.c.l.b16 %v509
    %v1388 = vunpack.c.h.b16 %v509
    %v1389 = vunpack.c.l.b16 %v510
    %v1390 = vunpack.c.h.b16 %v510
    %v1391 = vunpack.c.l.b16 %v511
    %v1392 = vunpack.c.l.b16 %v512
    %v1393 = vunpack.c.h.b16 %v512
    %v1394 = vunpack.c.l.b16 %v513
    %v1395 = vunpack.c.h.b16 %v513
    %v1396 = vunpack.c.l.b16 %v514
    %v1397 = vunpack.c.l.b16 %v515
    %v1398 = vunpack.c.h.b16 %v515
    %v1399 = vunpack.c.l.b16 %v516
    %v1400 = vunpack.c.h.b16 %v516
    %v1401 = vunpack.c.l.b16 %v517
    %v1402 = vunpack.c.l.b16 %v518
    %v1403 = vunpack.c.h.b16 %v518
    %v1404 = vunpack.c.l.b16 %v519
    %v1405 = vunpack.c.h.b16 %v519
    %v1406 = vunpack.c.l.b16 %v520
    %v1407 = vunpack.c.l.b16 %v521
    %v1408 = vunpack.c.h.b16 %v521
    %v1409 = vunpack.c.l.b16 %v522
    %v1410 = vunpack.c.h.b16 %v522
    %v1411 = vunpack.c.l.b16 %v523
    %v1412 = vunpack.c.l.b16 %v524
    %v1413 = vunpack.c.h.b16 %v524
    %v1414 = vunpack.c.l.b16 %v525
    %v1415 = vunpack.c.h.b16 %v525
    %v1416 = vunpack.c.l.b16 %v526
    %v1417 = vunpack.c.l.b16 %v527
    %v1418 = vunpack.c.h.b16 %v527
    %v1419 = vunpack.c.l.b16 %v528
    %v1420 = vunpack.c.h.b16 %v528
    %v1421 = vunpack.c.l.b16 %v529
    %v1422 = vunpack.c.l.b16 %v530
    %v1423 = vunpack.c.h.b16 %v530
    %v1424 = vunpack.c.l.b16 %v531
    %v1425 = vunpack.c.h.b16 %v531
    %v1426 = vunpack.c.l.b16 %v532
    %v1427 = vunpack.c.l.b16 %v533
    %v1428 = vunpack.c.h.b16 %v533
    %v1429 = vunpack.c.l.b16 %v534
    %v1430 = vunpack.c.h.b16 %v534
    %v1431 = vunpack.c.l.b16 %v535
    %v1432 = vunpack.c.l.b16 %v536
    %v1433 = vunpack.c.h.b16 %v536
    %v1434 = vunpack.c.l.b16 %v537
    %v1435 = vunpack.c.h.b16 %v537
    %v1436 = vunpack.c.l.b16 %v538
    %v1437 = vunpack.c.l.b16 %v539
    %v1438 = vunpack.c.h.b16 %v539
    %v1439 = vunpack.c.l.b16 %v540
    %v1440 = vunpack.c.h.b16 %v540
    %v1441 = vunpack.c.l.b16 %v541
    %v1442 = vunpack.c.l.b16 %v542
    %v1443 = vunpack.c.h.b16 %v542
    %v1444 = vunpack.c.l.b16 %v543
    %v1445 = vunpack.c.h.b16 %v543
    %v1446 = vunpack.c.l.b16 %v544
    %v1447 = vunpack.c.l.b16 %v545
    %v1448 = vunpack.c.h.b16 %v545
    %v1449 = vunpack.c.l.b16 %v546
    %v1450 = vunpack.c.h.b16 %v546
    %v1451 = vunpack.c.l.b16 %v547
    %v1452 = vunpack.c.l.b16 %v548
    %v1453 = vunpack.c.h.b16 %v548
    %v1454 = vunpack.c.l.b16 %v549
    %v1455 = vunpack.c.h.b16 %v549
    %v1456 = vunpack.c.l.b16 %v550
    %v1457 = vunpack.c.l.b16 %v551
    %v1458 = vunpack.c.h.b16 %v551
    %v1459 = vunpack.c.l.b16 %v552
    %v1460 = vunpack.c.h.b16 %v552
    %v1461 = vunpack.c.l.b16 %v553
    %v1462 = vunpack.c.l.b16 %v554
    %v1463 = vunpack.c.h.b16 %v554
    %v1464 = vunpack.c.l.b16 %v555
    %v1465 = vunpack.c.h.b16 %v555
    %v1466 = vunpack.c.l.b16 %v556
    %v1467 = vunpack.c.l.b16 %v557
    %v1468 = vunpack.c.h.b16 %v557
    %v1469 = vunpack.c.l.b16 %v558
    %v1470 = vunpack.c.h.b16 %v558
    %v1471 = vunpack.c.l.b16 %v559
    %v1472 = vunpack.c.l.b16 %v560
    %v1473 = vunpack.c.h.b16 %v560
    %v1474 = vunpack.c.l.b16 %v561
    %v1475 = vunpack.c.h.b16 %v561
    %v1476 = vunpack.c.l.b16 %v562
    %v1477 = vunpack.c.l.b16 %v563
    %v1478 = vunpack.c.h.b16 %v563
    %v1479 = vunpack.c.l.b16 %v564
    %v1480 = vunpack.c.h.b16 %v564
    %v1481 = vunpack.c.l.b16 %v565
    %v1482 = vunpack.c.l.b16 %v566
    %v1483 = vunpack.c.h.b16 %v566
    %v1484 = vunpack.c.l.b16 %v567
    %v1485 = vunpack.c.h.b16 %v567
    %v1486 = vunpack.c.l.b16 %v568
    %v1487 = vunpack.c.l.b16 %v569
    %v1488 = vunpack.c.h.b16 %v569
    %v1489 = vunpack.c.l.b16 %v570
    %v1490 = vunpack.c.h.b16 %v570
    %v1491 = vunpack.c.l.b16 %v571
    %v1492 = vunpack.c.l.b16 %v572
    %v1493 = vunpack.c.h.b16 %v572
    %v1494 = vunpack.c.l.b16 %v573
    %v1495 = vunpack.c.h.b16 %v573
    %v1496 = vunpack.c.l.b16 %v574
    %v1497 = vunpack.c.l.b16 %v575
    %v1498 = vunpack.c.h.b16 %v575
    %v1499 = vunpack.c.l.b16 %v576
    %v1500 = vunpack.c.h.b16 %v576
    %v1501 = vunpack.c.l.b16 %v577
    %v1502 = vunpack.c.l.b16 %v578
    %v1503 = vunpack.c.h.b16 %v578
    %v1504 = vunpack.c.l.b16 %v579
    %v1505 = vunpack.c.h.b16 %v579
    %v1506 = vunpack.c.l.b16 %v580
    %v1507 = vunpack.c.l.b16 %v581
    %v1508 = vunpack.c.h.b16 %v581
    %v1509 = vunpack.c.l.b16 %v582
    %v1510 = vunpack.c.h.b16 %v582
    %v1511 = vunpack.c.l.b16 %v583
    %v1512 = vunpack.c.l.b16 %v584
    %v1513 = vunpack.c.h.b16 %v584
    %v1514 = vunpack.c.l.b16 %v585
    %v1515 = vunpack.c.h.b16 %v585
    %v1516 = vunpack.c.l.b16 %v586
    %v1517 = vunpack.c.l.b16 %v587
    %v1518 = vunpack.c.h.b16 %v587
    %v1519 = vunpack.c.l.b16 %v588
    %v1520 = vunpack.c.h.b16 %v588
    %v1521 = vunpack.c.l.b16 %v589
    %v1522 = vunpack.c.l.b16 %v590
    %v1523 = vunpack.c.h.b16 %v590
    %v1524 = vunpack.c.l.b16 %v591
    %v1525 = vunpack.c.h.b16 %v591
    %v1526 = vunpack.c.l.b16 %v592
    %v1527 = vunpack.c.l.b16 %v593
    %v1528 = vunpack.c.h.b16 %v593
    %v1529 = vunpack.c.l.b16 %v594
    %v1530 = vunpack.c.h.b16 %v594
    %v1531 = vunpack.c.l.b16 %v595
    %v1532 = vunpack.c.l.b16 %v596
    %v1533 = vunpack.c.h.b16 %v596
    %v1534 = vunpack.c.l.b16 %v597
    %v1535 = vunpack.c.h.b16 %v597
    %v1536 = vunpack.c.l.b16 %v598
    %v1537 = vunpack.c.l.b16 %v599
    %v1538 = vunpack.c.h.b16 %v599
    %v1539 = vunpack.c.l.b16 %v600
    %v1540 = vunpack.c.h.b16 %v600
    %v1541 = vunpack.c.l.b16 %v601
    %v1542 = vunpack.c.l.b16 %v602
    %v1543 = vunpack.c.h.b16 %v602
    %v1544 = vunpack.c.l.b16 %v603
    %v1545 = vunpack.c.h.b16 %v603
    %v1546 = vunpack.c.l.b16 %v604
    %v1547 = vunpack.c.l.b16 %v605
    %v1548 = vunpack.c.h.b16 %v605
    %v1549 = vunpack.c.l.b16 %v606
    %v1550 = vunpack.c.h.b16 %v606
    %v1551 = vunpack.c.l.b16 %v607
    %v1552 = vunpack.c.l.b16 %v608
    %v1553 = vunpack.c.h.b16 %v608
    %v1554 = vunpack.c.l.b16 %v609
    %v1555 = vunpack.c.h.b16 %v609
    %v1556 = vunpack.c.l.b16 %v610
    %v1557 = vunpack.c.l.b16 %v611
    %v1558 = vunpack.c.h.b16 %v611
    %v1559 = vunpack.c.l.b16 %v612
    %v1560 = vunpack.c.h.b16 %v612
    %v1561 = vunpack.c.l.b16 %v613
    %v1562 = vunpack.c.l.b16 %v614
    %v1563 = vunpack.c.h.b16 %v614
    %v1564 = vunpack.c.l.b16 %v615
    %v1565 = vunpack.c.h.b16 %v615
    %v1566 = vunpack.c.l.b16 %v616
    %v1567 = vunpack.c.l.b16 %v617
    %v1568 = vunpack.c.h.b16 %v617
    %v1569 = vunpack.c.l.b16 %v618
    %v1570 = vunpack.c.h.b16 %v618
    %v1571 = vunpack.c.l.b16 %v619
    %v1572 = vunpack.c.l.b16 %v620
    %v1573 = vunpack.c.h.b16 %v620
    %v1574 = vunpack.c.l.b16 %v621
    %v1575 = vunpack.c.h.b16 %v621
    %v1576 = vunpack.c.l.b16 %v622
    %v1577 = vunpack.c.l.b16 %v623
    %v1578 = vunpack.c.h.b16 %v623
    %v1579 = vunpack.c.l.b16 %v624
    %v1580 = vunpack.c.h.b16 %v624
    %v1581 = vunpack.c.l.b16 %v625
    %v1582 = vunpack.c.l.b16 %v626
    %v1583 = vunpack.c.h.b16 %v626
    %v1584 = vunpack.c.l.b16 %v627
    %v1585 = vunpack.c.h.b16 %v627
    %v1586 = vunpack.c.l.b16 %v628
    %v1587 = vunpack.c.l.b16 %v629
    %v1588 = vunpack.c.h.b16 %v629
    %v1589 = vunpack.c.l.b16 %v630
    %v1590 = vunpack.c.h.b16 %v630
    %v1591 = vunpack.c.l.b16 %v631
    %v1592 = vunpack.c.l.b16 %v632
    %v1593 = vunpack.c.h.b16 %v632
    %v1594 = vunpack.c.l.b16 %v633
    %v1595 = vunpack.c.h.b16 %v633
    %v1596 = vunpack.c.l.b16 %v634
    %v1597 = vunpack.c.l.b16 %v635
    %v1598 = vunpack.c.h.b16 %v635
    %v1599 = vunpack.c.l.b16 %v636
    %v1600 = vunpack.c.h.b16 %v636
    %v1601 = vunpack.c.l.b16 %v637
    %v1602 = vunpack.c.l.b16 %v638
    %v1603 = vunpack.c.h.b16 %v638
    %v1604 = vunpack.c.l.b16 %v639
    %v1605 = vunpack.c.h.b16 %v639
    %v1606 = vunpack.c.l.b16 %v640
    %v1607 = vunpack.c.l.b16 %v641
    %v1608 = vunpack.c.h.b16 %v641
    %v1609 = vunpack.c.l.b16 %v642
    %v1610 = vunpack.c.h.b16 %v642
    %v1611 = vunpack.c.l.b16 %v643
    %v1612 = vunpack.c.l.b16 %v644
    %v1613 = vunpack.c.h.b16 %v644
    %v1614 = vunpack.c.l.b16 %v645
    %v1615 = vunpack.c.h.b16 %v645
    %v1616 = vunpack.c.l.b16 %v646
    %v1617 = vunpack.c.l.b16 %v647
    %v1618 = vunpack.c.h.b16 %v647
    %v1619 = vunpack.c.l.b16 %v648
    %v1620 = vunpack.c.h.b16 %v648
    %v1621 = vunpack.c.l.b16 %v649
    %v1622 = vunpack.c.l.b16 %v650
    %v1623 = vunpack.c.h.b16 %v650
    %v1624 = vunpack.c.l.b16 %v651
    %v1625 = vunpack.c.h.b16 %v651
    %v1626 = vunpack.c.l.b16 %v652
    %v1627 = vunpack.c.l.b16 %v653
    %v1628 = vunpack.c.h.b16 %v653
    %v1629 = vunpack.c.l.b16 %v654
    %v1630 = vunpack.c.h.b16 %v654
    %v1631 = vunpack.c.l.b16 %v655
    %v1632 = vunpack.c.l.b16 %v656
    %v1633 = vunpack.c.h.b16 %v656
    %v1634 = vunpack.c.l.b16 %v657
    %v1635 = vunpack.c.h.b16 %v657
    %v1636 = vunpack.c.l.b16 %v658
    %v1637 = vunpack.c.l.b16 %v659
    %v1638 = vunpack.c.h.b16 %v659
    %v1639 = vunpack.c.l.b16 %v660
    %v1640 = vunpack.c.h.b16 %v660
    %v1641 = vunpack.c.l.b16 %v661
    %v1642 = vunpack.c.l.b16 %v662
    %v1643 = vunpack.c.h.b16 %v662
    %v1644 = vunpack.c.l.b16 %v663
    %v1645 = vunpack.c.h.b16 %v663
    %v1646 = vunpack.c.l.b16 %v664
    %v1647 = vunpack.c.l.b16 %v665
    %v1648 = vunpack.c.h.b16 %v665
    %v1649 = vunpack.c.l.b16 %v666
    %v1650 = vunpack.c.h.b16 %v666
    %v1651 = vunpack.c.l.b16 %v667
    %v1652 = vunpack.c.l.b16 %v668
    %v1653 = vunpack.c.h.b16 %v668
    %v1654 = vunpack.c.l.b16 %v669
    %v1655 = vunpack.c.h.b16 %v669
    %v1656 = vunpack.c.l.b16 %v670
    %v1657 = vunpack.c.l.b16 %v671
    %v1658 = vunpack.c.h.b16 %v671
    %v1659 = vunpack.c.l.b16 %v672
    %v1660 = vunpack.c.h.b16 %v672
    %v1661 = vunpack.c.l.b16 %v673
    %v1662 = vunpack.c.l.b16 %v674
    %v1663 = vunpack.c.h.b16 %v674
    %v1664 = vunpack.c.l.b16 %v675
    %v1665 = vunpack.c.h.b16 %v675
    %v1666 = vunpack.c.l.b16 %v676
    %v1667 = vunpack.c.l.b16 %v677
    %v1668 = vunpack.c.h.b16 %v677
    %v1669 = vunpack.c.l.b16 %v678
    %v1670 = vunpack.c.h.b16 %v678
    %v1671 = vunpack.c.l.b16 %v679
    %v1672 = vunpack.c.l.b16 %v680
    %v1673 = vunpack.c.h.b16 %v680
    %v1674 = vunpack.c.l.b16 %v681
    %v1675 = vunpack.c.h.b16 %v681
    %v1676 = vunpack.c.l.b16 %v682
    %v1677 = vunpack.c.l.b16 %v683
    %v1678 = vunpack.c.h.b16 %v683
    %v1679 = vunpack.c.l.b16 %v684
    %v1680 = vunpack.c.h.b16 %v684
    %v1681 = vunpack.c.l.b16 %v685
    %v1682 = vunpack.c.l.b16 %v686
    %v1683 = vunpack.c.h.b16 %v686
    %v1684 = vunpack.c.l.b16 %v687
    %v1685 = vunpack.c.h.b16 %v687
    %v1686 = vunpack.c.l.b16 %v688
    %v1687 = vunpack.c.l.b16 %v689
    %v1688 = vunpack.c.h.b16 %v689
    %v1689 = vunpack.c.l.b16 %v690
    %v1690 = vunpack.c.h.b16 %v690
    %v1691 = vunpack.c.l.b16 %v691
    %v1692 = vunpack.c.l.b16 %v692
    %v1693 = vunpack.c.h.b16 %v692
    %v1694 = vunpack.c.l.b16 %v693
    %v1695 = vunpack.c.h.b16 %v693
    %v1696 = vunpack.c.l.b16 %v694
    %v1697 = vunpack.c.l.b16 %v695
    %v1698 = vunpack.c.h.b16 %v695
    %v1699 = vunpack.c.l.b16 %v696
    %v1700 = vunpack.c.h.b16 %v696
    %v1701 = vunpack.c.l.b16 %v697
    %v1702 = vunpack.c.l.b16 %v698
    %v1703 = vunpack.c.h.b16 %v698
    %v1704 = vunpack.c.l.b16 %v699
    %v1705 = vunpack.c.h.b16 %v699
    %v1706 = vunpack.c.l.b16 %v700
    %v1707 = vunpack.c.l.b16 %v701
    %v1708 = vunpack.c.h.b16 %v701
    %v1709 = vunpack.c.l.b16 %v702
    %v1710 = vunpack.c.h.b16 %v702
    %v1711 = vunpack.c.l.b16 %v703
    %v1712 = vunpack.c.l.b16 %v704
    %v1713 = vunpack.c.h.b16 %v704
    %v1714 = vunpack.c.l.b16 %v705
    %v1715 = vunpack.c.h.b16 %v705
    %v1716 = vunpack.c.l.b16 %v706
    %v1717 = vunpack.c.l.b16 %v707
    %v1718 = vunpack.c.h.b16 %v707
    %v1719 = vunpack.c.l.b16 %v708
    %v1720 = vunpack.c.h.b16 %v708
    %v1721 = vunpack.c.l.b16 %v709
    %v1722 = vunpack.c.l.b16 %v710
    %v1723 = vunpack.c.h.b16 %v710
    %v1724 = vunpack.c.l.b16 %v711
    %v1725 = vunpack.c.h.b16 %v711
    %v1726 = vunpack.c.l.b16 %v712
    %v1727 = vunpack.c.l.b16 %v713
    %v1728 = vunpack.c.h.b16 %v713
    %v1729 = vunpack.c.l.b16 %v714
    %v1730 = vunpack.c.h.b16 %v714
    %v1731 = vunpack.c.l.b16 %v715
    %v1732 = vunpack.c.l.b16 %v716
    %v1733 = vunpack.c.h.b16 %v716
    %v1734 = vunpack.c.l.b16 %v717
    %v1735 = vunpack.c.h.b16 %v717
    %v1736 = vunpack.c.l.b16 %v718
    %v1737 = vunpack.c.l.b16 %v719
    %v1738 = vunpack.c.h.b16 %v719
    %v1739 = vunpack.c.l.b16 %v720
    %v1740 = vunpack.c.h.b16 %v720
    %v1741 = vunpack.c.l.b16 %v721
    %v1742 = vunpack.c.l.b16 %v722
    %v1743 = vunpack.c.h.b16 %v722
    %v1744 = vunpack.c.l.b16 %v723
    %v1745 = vunpack.c.h.b16 %v723
    %v1746 = vunpack.c.l.b16 %v724
    %v1747 = vunpack.c.l.b16 %v725
    %v1748 = vunpack.c.h.b16 %v725
    %v1749 = vunpack.c.l.b16 %v726
    %v1750 = vunpack.c.h.b16 %v726
    %v1751 = vunpack.c.l.b16 %v727
    %v1752 = vpack.c.b16 %v1117, %v1112
    %v1753 = vpack.c.b16 %v1118, %v1113
    %v1754 = vpack.c.b16 %v1119, %v1114
    %v1755 = vpack.c.b16 %v1120, %v1115
    %v1756 = vpack.c.b16 %v1121, %v1116
    %v1757 = vpack.c.b16 %v1127, %v1122
    %v1758 = vpack.c.b16 %v1128, %v1123
    %v1759 = vpack.c.b16 %v1129, %v1124
    %v1760 = vpack.c.b16 %v1130, %v1125
    %v1761 = vpack.c.b16 %v1131, %v1126
    %v1762 = vpack.c.b16 %v1137, %v1132
    %v1763 = vpack.c.b16 %v1138, %v1133
    %v1764 = vpack.c.b16 %v1139, %v1134
    %v1765 = vpack.c.b16 %v1140, %v1135
    %v1766 = vpack.c.b16 %v1141, %v1136
    %v1767 = vpack.c.b16 %v1147, %v1142
    %v1768 = vpack.c.b16 %v1148, %v1143
    %v1769 = vpack.c.b16 %v1149, %v1144
    %v1770 = vpack.c.b16 %v1150, %v1145
    %v1771 = vpack.c.b16 %v1151, %v1146
    %v1772 = vpack.c.b16 %v1157, %v1152
    %v1773 = vpack.c.b16 %v1158, %v1153
    %v1774 = vpack.c.b16 %v1159, %v1154
    %v1775 = vpack.c.b16 %v1160, %v1155
    %v1776 = vpack.c.b16 %v1161, %v1156
    %v1777 = vpack.c.b16 %v1167, %v1162
    %v1778 = vpack.c.b16 %v1168, %v1163
    %v1779 = vpack.c.b16 %v1169, %v1164
    %v1780 = vpack.c.b16 %v1170, %v1165
    %v1781 = vpack.c.b16 %v1171, %v1166
    %v1782 = vpack.c.b16 %v1177, %v1172
    %v1783 = vpack.c.b16 %v1178, %v1173
    %v1784 = vpack.c.b16 %v1179, %v1174
    %v1785 = vpack.c.b16 %v1180, %v1175
    %v1786 = vpack.c.b16 %v1181, %v1176
    %v1787 = vpack.c.b16 %v1187, %v1182
    %v1788 = vpack.c.b16 %v1188, %v1183
    %v1789 = vpack.c.b16 %v1189, %v1184
    %v1790 = vpack.c.b16 %v1190, %v1185
    %v1791 = vpack.c.b16 %v1191, %v1186
    %v1792 = vpack.c.b16 %v1197, %v1192
    %v1793 = vpack.c.b16 %v1198, %v1193
    %v1794 = vpack.c.b16 %v1199, %v1194
    %v1795 = vpack.c.b16 %v1200, %v1195
    %v1796 = vpack.c.b16 %v1201, %v1196
    %v1797 = vpack.c.b16 %v1207, %v1202
    %v1798 = vpack.c.b16 %v1208, %v1203
    %v1799 = vpack.c.b16 %v1209, %v1204
    %v1800 = vpack.c.b16 %v1210, %v1205
    %v1801 = vpack.c.b16 %v1211, %v1206
    %v1802 = vpack.c.b16 %v1217, %v1212
    %v1803 = vpack.c.b16 %v1218, %v1213
    %v1804 = vpack.c.b16 %v1219, %v1214
    %v1805 = vpack.c.b16 %v1220, %v1215
    %v1806 = vpack.c.b16 %v1221, %v1216
    %v1807 = vpack.c.b16 %v1227, %v1222
    %v1808 = vpack.c.b16 %v1228, %v1223
    %v1809 = vpack.c.b16 %v1229, %v1224
    %v1810 = vpack.c.b16 %v1230, %v1225
    %v1811 = vpack.c.b16 %v1231, %v1226
    %v1812 = vpack.c.b16 %v1237, %v1232
    %v1813 = vpack.c.b16 %v1238, %v1233
    %v1814 = vpack.c.b16 %v1239, %v1234
    %v1815 = vpack.c.b16 %v1240, %v1235
    %v1816 = vpack.c.b16 %v1241, %v1236
    %v1817 = vpack.c.b16 %v1247, %v1242
    %v1818 = vpack.c.b16 %v1248, %v1243
    %v1819 = vpack.c.b16 %v1249, %v1244
    %v1820 = vpack.c.b16 %v1250, %v1245
    %v1821 = vpack.c.b16 %v1251, %v1246
    %v1822 = vpack.c.b16 %v1257, %v1252
    %v1823 = vpack.c.b16 %v1258, %v1253
    %v1824 = vpack.c.b16 %v1259, %v1254
    %v1825 = vpack.c.b16 %v1260, %v1255
    %v1826 = vpack.c.b16 %v1261, %v1256
    %v1827 = vpack.c.b16 %v1267, %v1262
    %v1828 = vpack.c.b16 %v1268, %v1263
    %v1829 = vpack.c.b16 %v1269, %v1264
    %v1830 = vpack.c.b16 %v1270, %v1265
    %v1831 = vpack.c.b16 %v1271, %v1266
    %v1832 = vpack.c.b16 %v1277, %v1272
    %v1833 = vpack.c.b16 %v1278, %v1273
    %v1834 = vpack.c.b16 %v1279, %v1274
    %v1835 = vpack.c.b16 %v1280, %v1275
    %v1836 = vpack.c.b16 %v1281, %v1276
    %v1837 = vpack.c.b16 %v1287, %v1282
    %v1838 = vpack.c.b16 %v1288, %v1283
    %v1839 = vpack.c.b16 %v1289, %v1284
    %v1840 = vpack.c.b16 %v1290, %v1285
    %v1841 = vpack.c.b16 %v1291, %v1286
    %v1842 = vpack.c.b16 %v1297, %v1292
    %v1843 = vpack.c.b16 %v1298, %v1293
    %v1844 = vpack.c.b16 %v1299, %v1294
    %v1845 = vpack.c.b16 %v1300, %v1295
    %v1846 = vpack.c.b16 %v1301, %v1296
    %v1847 = vpack.c.b16 %v1307, %v1302
    %v1848 = vpack.c.b16 %v1308, %v1303
    %v1849 = vpack.c.b16 %v1309, %v1304
    %v1850 = vpack.c.b16 %v1310, %v1305
    %v1851 = vpack.c.b16 %v1311, %v1306
    %v1852 = vpack.c.b16 %v1317, %v1312
    %v1853 = vpack.c.b16 %v1318, %v1313
    %v1854 = vpack.c.b16 %v1319, %v1314
    %v1855 = vpack.c.b16 %v1320, %v1315
    %v1856 = vpack.c.b16 %v1321, %v1316
    %v1857 = vpack.c.b16 %v1327, %v1322
    %v1858 = vpack.c.b16 %v1328, %v1323
    %v1859 = vpack.c.b16 %v1329, %v1324
    %v1860 = vpack.c.b16 %v1330, %v1325
    %v1861 = vpack.c.b16 %v1331, %v1326
    %v1862 = vpack.c.b16 %v1337, %v1332
    %v1863 = vpack.c.b16 %v1338, %v1333
    %v1864 = vpack.c.b16 %v1339, %v1334
    %v1865 = vpack.c.b16 %v1340, %v1335
    %v1866 = vpack.c.b16 %v1341, %v1336
    %v1867 = vpack.c.b16 %v1347, %v1342
    %v1868 = vpack.c.b16 %v1348, %v1343
    %v1869 = vpack.c.b16 %v1349, %v1344
    %v1870 = vpack.c.b16 %v1350, %v1345
    %v1871 = vpack.c.b16 %v1351, %v1346
    %v1872 = vpack.c.b16 %v1357, %v1352
    %v1873 = vpack.c.b16 %v1358, %v1353
    %v1874 = vpack.c.b16 %v1359, %v1354
    %v1875 = vpack.c.b16 %v1360, %v1355
    %v1876 = vpack.c.b16 %v1361, %v1356
    %v1877 = vpack.c.b16 %v1367, %v1362
    %v1878 = vpack.c.b16 %v1368, %v1363
    %v1879 = vpack.c.b16 %v1369, %v1364
    %v1880 = vpack.c.b16 %v1370, %v1365
    %v1881 = vpack.c.b16 %v1371, %v1366
    %v1882 = vpack.c.b16 %v1377, %v1372
    %v1883 = vpack.c.b16 %v1378, %v1373
    %v1884 = vpack.c.b16 %v1379, %v1374
    %v1885 = vpack.c.b16 %v1380, %v1375
    %v1886 = vpack.c.b16 %v1381, %v1376
    %v1887 = vpack.c.b16 %v1387, %v1382
    %v1888 = vpack.c.b16 %v1388, %v1383
    %v1889 = vpack.c.b16 %v1389, %v1384
    %v1890 = vpack.c.b16 %v1390, %v1385
    %v1891 = vpack.c.b16 %v1391, %v1386
    %v1892 = vpack.c.b16 %v1397, %v1392
    %v1893 = vpack.c.b16 %v1398, %v1393
    %v1894 = vpack.c.b16 %v1399, %v1394
    %v1895 = vpack.c.b16 %v1400, %v1395
    %v1896 = vpack.c.b16 %v1401, %v1396
    %v1897 = vpack.c.b16 %v1407, %v1402
    %v1898 = vpack.c.b16 %v1408, %v1403
    %v1899 = vpack.c.b16 %v1409, %v1404
    %v1900 = vpack.c.b16 %v1410, %v1405
    %v1901 = vpack.c.b16 %v1411, %v1406
    %v1902 = vpack.c.b16 %v1417, %v1412
    %v1903 = vpack.c.b16 %v1418, %v1413
    %v1904 = vpack.c.b16 %v1419, %v1414
    %v1905 = vpack.c.b16 %v1420, %v1415
    %v1906 = vpack.c.b16 %v1421, %v1416
    %v1907 = vpack.c.b16 %v1427, %v1422
    %v1908 = vpack.c.b16 %v1428, %v1423
    %v1909 = vpack.c.b16 %v1429, %v1424
    %v1910 = vpack.c.b16 %v1430, %v1425
    %v1911 = vpack.c.b16 %v1431, %v1426
    %v1912 = vpack.c.b16 %v1437, %v1432
    %v1913 = vpack.c.b16 %v1438, %v1433
    %v1914 = vpack.c.b16 %v1439, %v1434
    %v1915 = vpack.c.b16 %v1440, %v1435
    %v1916 = vpack.c.b16 %v1441, %v1436
    %v1917 = vpack.c.b16 %v1447, %v1442
    %v1918 = vpack.c.b16 %v1448, %v1443
    %v1919 = vpack.c.b16 %v1449, %v1444
    %v1920 = vpack.c.b16 %v1450, %v1445
    %v1921 = vpack.c.b16 %v1451, %v1446
    %v1922 = vpack.c.b16 %v1457, %v1452
    %v1923 = vpack.c.b16 %v1458, %v1453
    %v1924 = vpack.c.b16 %v1459, %v1454
    %v1925 = vpack.c.b16 %v1460, %v1455
    %v1926 = vpack.c.b16 %v1461, %v1456
    %v1927 = vpack.c.b16 %v1467, %v1462
    %v1928 = vpack.c.b16 %v1468, %v1463
    %v1929 = vpack.c.b16 %v1469, %v1464
    %v1930 = vpack.c.b16 %v1470, %v1465
    %v1931 = vpack.c.b16 %v1471, %v1466
    %v1932 = vpack.c.b16 %v1477, %v1472
    %v1933 = vpack.c.b16 %v1478, %v1473
    %v1934 = vpack.c.b16 %v1479, %v1474
    %v1935 = vpack.c.b16 %v1480, %v1475
    %v1936 = vpack.c.b16 %v1481, %v1476
    %v1937 = vpack.c.b16 %v1487, %v1482
    %v1938 = vpack.c.b16 %v1488, %v1483
    %v1939 = vpack.c.b16 %v1489, %v1484
    %v1940 = vpack.c.b16 %v1490, %v1485
    %v1941 = vpack.c.b16 %v1491, %v1486
    %v1942 = vpack.c.b16 %v1497, %v1492
    %v1943 = vpack.c.b16 %v1498, %v1493
    %v1944 = vpack.c.b16 %v1499, %v1494
    %v1945 = vpack.c.b16 %v1500, %v1495
    %v1946 = vpack.c.b16 %v1501, %v1496
    %v1947 = vpack.c.b16 %v1507, %v1502
    %v1948 = vpack.c.b16 %v1508, %v1503
    %v1949 = vpack.c.b16 %v1509, %v1504
    %v1950 = vpack.c.b16 %v1510, %v1505
    %v1951 = vpack.c.b16 %v1511, %v1506
    %v1952 = vpack.c.b16 %v1517, %v1512
    %v1953 = vpack.c.b16 %v1518, %v1513
    %v1954 = vpack.c.b16 %v1519, %v1514
    %v1955 = vpack.c.b16 %v1520, %v1515
    %v1956 = vpack.c.b16 %v1521, %v1516
    %v1957 = vpack.c.b16 %v1527, %v1522
    %v1958 = vpack.c.b16 %v1528, %v1523
    %v1959 = vpack.c.b16 %v1529, %v1524
    %v1960 = vpack.c.b16 %v1530, %v1525
    %v1961 = vpack.c.b16 %v1531, %v1526
    %v1962 = vpack.c.b16 %v1537, %v1532
    %v1963 = vpack.c.b16 %v1538, %v1533
    %v1964 = vpack.c.b16 %v1539, %v1534
    %v1965 = vpack.c.b16 %v1540, %v1535
    %v1966 = vpack.c.b16 %v1541, %v1536
    %v1967 = vpack.c.b16 %v1547, %v1542
    %v1968 = vpack.c.b16 %v1548, %v1543
    %v1969 = vpack.c.b16 %v1549, %v1544
    %v1970 = vpack.c.b16 %v1550, %v1545
    %v1971 = vpack.c.b16 %v1551, %v1546
    %v1972 = vpack.c.b16 %v1557, %v1552
    %v1973 = vpack.c.b16 %v1558, %v1553
    %v1974 = vpack.c.b16 %v1559, %v1554
    %v1975 = vpack.c.b16 %v1560, %v1555
    %v1976 = vpack.c.b16 %v1561, %v1556
    %v1977 = vpack.c.b16 %v1567, %v1562
    %v1978 = vpack.c.b16 %v1568, %v1563
    %v1979 = vpack.c.b16 %v1569, %v1564
    %v1980 = vpack.c.b16 %v1570, %v1565
    %v1981 = vpack.c.b16 %v1571, %v1566
    %v1982 = vpack.c.b16 %v1577, %v1572
    %v1983 = vpack.c.b16 %v1578, %v1573
    %v1984 = vpack.c.b16 %v1579, %v1574
    %v1985 = vpack.c.b16 %v1580, %v1575
    %v1986 = vpack.c.b16 %v1581, %v1576
    %v1987 = vpack.c.b16 %v1587, %v1582
    %v1988 = vpack.c.b16 %v1588, %v1583
    %v1989 = vpack.c.b16 %v1589, %v1584
    %v1990 = vpack.c.b16 %v1590, %v1585
    %v1991 = vpack.c.b16 %v1591, %v1586
    %v1992 = vpack.c.b16 %v1597, %v1592
    %v1993 = vpack.c.b16 %v1598, %v1593
    %v1994 = vpack.c.b16 %v1599, %v1594
    %v1995 = vpack.c.b16 %v1600, %v1595
    %v1996 = vpack.c.b16 %v1601, %v1596
    %v1997 = vpack.c.b16 %v1607, %v1602
    %v1998 = vpack.c.b16 %v1608, %v1603
    %v1999 = vpack.c.b16 %v1609, %v1604
    %v2000 = vpack.c.b16 %v1610, %v1605
    %v2001 = vpack.c.b16 %v1611, %v1606
    %v2002 = vpack.c.b16 %v1617, %v1612
    %v2003 = vpack.c.b16 %v1618, %v1613
    %v2004 = vpack.c.b16 %v1619, %v1614
    %v2005 = vpack.c.b16 %v1620, %v1615
    %v2006 = vpack.c.b16 %v1621, %v1616
    %v2007 = vpack.c.b16 %v1627, %v1622
    %v2008 = vpack.c.b16 %v1628, %v1623
    %v2009 = vpack.c.b16 %v1629, %v1624
    %v2010 = vpack.c.b16 %v1630, %v1625
    %v2011 = vpack.c.b16 %v1631, %v1626
    %v2012 = vpack.c.b16 %v1637, %v1632
    %v2013 = vpack.c.b16 %v1638, %v1633
    %v2014 = vpack.c.b16 %v1639, %v1634
    %v2015 = vpack.c.b16 %v1640, %v1635
    %v2016 = vpack.c.b16 %v1641, %v1636
    %v2017 = vpack.c.b16 %v1647, %v1642
    %v2018 = vpack.c.b16 %v1648, %v1643
    %v2019 = vpack.c.b16 %v1649, %v1644
    %v2020 = vpack.c.b16 %v1650, %v1645
    %v2021 = vpack.c.b16 %v1651, %v1646
    %v2022 = vpack.c.b16 %v1657, %v1652
    %v2023 = vpack.c.b16 %v1658, %v1653
    %v2024 = vpack.c.b16 %v1659, %v1654
    %v2025 = vpack.c.b16 %v1660, %v1655
    %v2026 = vpack.c.b16 %v1661, %v1656
    %v2027 = vpack.c.b16 %v1667, %v1662
    %v2028 = vpack.c.b16 %v1668, %v1663
    %v2029 = vpack.c.b16 %v1669, %v1664
    %v2030 = vpack.c.b16 %v1670, %v1665
    %v2031 = vpack.c.b16 %v1671, %v1666
    %v2032 = vpack.c.b16 %v1677, %v1672
    %v2033 = vpack.c.b16 %v1678, %v1673
    %v2034 = vpack.c.b16 %v1679, %v1674
    %v2035 = vpack.c.b16 %v1680, %v1675
    %v2036 = vpack.c.b16 %v1681, %v1676
    %v2037 = vpack.c.b16 %v1687, %v1682
    %v2038 = vpack.c.b16 %v1688, %v1683
    %v2039 = vpack.c.b16 %v1689, %v1684
    %v2040 = vpack.c.b16 %v1690, %v1685
    %v2041 = vpack.c.b16 %v1691, %v1686
    %v2042 = vpack.c.b16 %v1697, %v1692
    %v2043 = vpack.c.b16 %v1698, %v1693
    %v2044 = vpack.c.b16 %v1699, %v1694
    %v2045 = vpack.c.b16 %v1700, %v1695
    %v2046 = vpack.c.b16 %v1701, %v1696
    %v2047 = vpack.c.b16 %v1707, %v1702
    %v2048 = vpack.c.b16 %v1708, %v1703
    %v2049 = vpack.c.b16 %v1709, %v1704
    %v2050 = vpack.c.b16 %v1710, %v1705
    %v2051 = vpack.c.b16 %v1711, %v1706
    %v2052 = vpack.c.b16 %v1717, %v1712
    %v2053 = vpack.c.b16 %v1718, %v1713
    %v2054 = vpack.c.b16 %v1719, %v1714
    %v2055 = vpack.c.b16 %v1720, %v1715
    %v2056 = vpack.c.b16 %v1721, %v1716
    %v2057 = vpack.c.b16 %v1727, %v1722
    %v2058 = vpack.c.b16 %v1728, %v1723
    %v2059 = vpack.c.b16 %v1729, %v1724
    %v2060 = vpack.c.b16 %v1730, %v1725
    %v2061 = vpack.c.b16 %v1731, %v1726
    %v2062 = vpack.c.b16 %v1737, %v1732
    %v2063 = vpack.c.b16 %v1738, %v1733
    %v2064 = vpack.c.b16 %v1739, %v1734
    %v2065 = vpack.c.b16 %v1740, %v1735
    %v2066 = vpack.c.b16 %v1741, %v1736
    %v2067 = vpack.c.b16 %v1747, %v1742
    %v2068 = vpack.c.b16 %v1748, %v1743
    %v2069 = vpack.c.b16 %v1749, %v1744
    %v2070 = vpack.c.b16 %v1750, %v1745
    %v2071 = vpack.c.b16 %v1751, %v1746
    %2392 = vmatprep.subr.bf16.mxu0 %v1788
    %2393 = vmatpush1.bf16.msra.mxu0 %v1787
    %2394 = vmatprep.subr.bf16.mxu0 %v1783
    %2395 = vmatpush1.bf16.msra.mxu0 %v1782
    %2396 = vmatprep.subr.bf16.mxu0 %v1778
    %2397 = vmatpush1.bf16.msra.mxu0 %v1777
    %2398 = vmatprep.subr.bf16.mxu0 %v1773
    %2399 = vmatpush1.bf16.msra.mxu0 %v1772
    %2400 = vmatprep.subr.bf16.mxu0 %v1768
    %2401 = vmatpush1.bf16.msra.mxu0 %v1767
    %2402 = vmatprep.subr.bf16.mxu0 %v1763
    %2403 = vmatpush1.bf16.msra.mxu0 %v1762
    %2404 = vmatprep.subr.bf16.mxu0 %v1758
    %2405 = vmatpush1.bf16.msra.mxu0 %v1757
    %2406 = vmatprep.subr.bf16.mxu0 %v1753
    %2407 = vmatpush1.bf16.msra.mxu0 %v1752
    %2408 = vmatprep.subr.bf16.mxu0 %v1828
    %2409 = vmatpush2.bf16.msra.mxu0 %v1827
    %2410 = vmatprep.subr.bf16.mxu0 %v1823
    %2411 = vmatpush2.bf16.msra.mxu0 %v1822
    %2412 = vmatprep.subr.bf16.mxu0 %v1818
    %2413 = vmatpush2.bf16.msra.mxu0 %v1817
    %2414 = vmatprep.subr.bf16.mxu0 %v1813
    %2415 = vmatpush2.bf16.msra.mxu0 %v1812
    %2416 = vmatprep.subr.bf16.mxu0 %v1808
    %2417 = vmatpush2.bf16.msra.mxu0 %v1807
    %2418 = vmatprep.subr.bf16.mxu0 %v1803
    %2419 = vmatpush2.bf16.msra.mxu0 %v1802
    %2420 = vmatprep.subr.bf16.mxu0 %v1798
    %2421 = vmatpush2.bf16.msra.mxu0 %v1797
    %2422 = vmatprep.subr.bf16.mxu0 %v1793
    %2423 = vmatpush2.bf16.msra.mxu0 %v1792
    %2424 = vmatprep.mubr.bf16.mxu0 %v241
    %2425 = vmatmul.mubr.bf16.gmra.mxu0 %v240
    %v2426 = vpop.f32.mrf.mxu0
    %v2427 = vadd.f32 0.0, %v2426
    %v2428 = vpop.f32.mrf.mxu0
    %v2429 = vadd.f32 0.0, %v2428
    %v2430 = vpop.f32.mrf.mxu0
    %v2431 = vadd.f32 0.0, %v2430
    %v2432 = vpop.f32.mrf.mxu0
    %v2433 = vadd.f32 0.0, %v2432
    %2434 = vmatprep.mubr.bf16.mxu0 %v249
    %2435 = vmatmul.mubr.bf16.gmra.mxu0 %v248
    %v2436 = vpop.f32.mrf.mxu0
    %v2437 = vadd.f32 0.0, %v2436
    %v2438 = vpop.f32.mrf.mxu0
    %v2439 = vadd.f32 0.0, %v2438
    %v2440 = vpop.f32.mrf.mxu0
    %v2441 = vadd.f32 0.0, %v2440
    %v2442 = vpop.f32.mrf.mxu0
    %v2443 = vadd.f32 0.0, %v2442
    %2444 = vmatprep.mubr.bf16.mxu0 %v257
    %2445 = vmatmul.mubr.bf16.gmra.mxu0 %v256
    %v2446 = vpop.f32.mrf.mxu0
    %v2447 = vadd.f32 0.0, %v2446
    %v2448 = vpop.f32.mrf.mxu0
    %v2449 = vadd.f32 0.0, %v2448
    %v2450 = vpop.f32.mrf.mxu0
    %v2451 = vadd.f32 0.0, %v2450
    %v2452 = vpop.f32.mrf.mxu0
    %v2453 = vadd.f32 0.0, %v2452
    %2454 = vmatprep.mubr.bf16.mxu0 %v265
    %2455 = vmatmul.mubr.bf16.gmra.mxu0 %v264
    %v2456 = vpop.f32.mrf.mxu0
    %v2457 = vadd.f32 0.0, %v2456
    %v2458 = vpop.f32.mrf.mxu0
    %v2459 = vadd.f32 0.0, %v2458
    %v2460 = vpop.f32.mrf.mxu0
    %v2461 = vadd.f32 0.0, %v2460
    %v2462 = vpop.f32.mrf.mxu0
    %v2463 = vadd.f32 0.0, %v2462
    %2464 = vmatprep.mubr.bf16.mxu0 %v273
    %2465 = vmatmul.mubr.bf16.gmra.mxu0 %v272
    %v2466 = vpop.f32.mrf.mxu0
    %v2467 = vadd.f32 0.0, %v2466
    %v2468 = vpop.f32.mrf.mxu0
    %v2469 = vadd.f32 0.0, %v2468
    %v2470 = vpop.f32.mrf.mxu0
    %v2471 = vadd.f32 0.0, %v2470
    %v2472 = vpop.f32.mrf.mxu0
    %v2473 = vadd.f32 0.0, %v2472
    %2474 = vmatprep.mubr.bf16.mxu0 %v281
    %2475 = vmatmul.mubr.bf16.gmra.mxu0 %v280
    %v2476 = vpop.f32.mrf.mxu0
    %v2477 = vadd.f32 0.0, %v2476
    %v2478 = vpop.f32.mrf.mxu0
    %v2479 = vadd.f32 0.0, %v2478
    %v2480 = vpop.f32.mrf.mxu0
    %v2481 = vadd.f32 0.0, %v2480
    %v2482 = vpop.f32.mrf.mxu0
    %v2483 = vadd.f32 0.0, %v2482
    %2484 = vmatprep.mubr.bf16.mxu0 %v289
    %2485 = vmatmul.mubr.bf16.gmra.mxu0 %v288
    %v2486 = vpop.f32.mrf.mxu0
    %v2487 = vadd.f32 0.0, %v2486
    %v2488 = vpop.f32.mrf.mxu0
    %v2489 = vadd.f32 0.0, %v2488
    %v2490 = vpop.f32.mrf.mxu0
    %v2491 = vadd.f32 0.0, %v2490
    %v2492 = vpop.f32.mrf.mxu0
    %v2493 = vadd.f32 0.0, %v2492
    %2494 = vmatprep.mubr.bf16.mxu0 %v297
    %2495 = vmatmul.mubr.bf16.gmra.mxu0 %v296
    %v2496 = vpop.f32.mrf.mxu0
    %v2497 = vadd.f32 0.0, %v2496
    %v2498 = vpop.f32.mrf.mxu0
    %v2499 = vadd.f32 0.0, %v2498
    %v2500 = vpop.f32.mrf.mxu0
    %v2501 = vadd.f32 0.0, %v2500
    %v2502 = vpop.f32.mrf.mxu0
    %v2503 = vadd.f32 0.0, %v2502
    %2504 = vmatprep.mubr.bf16.mxu0 %v305
    %2505 = vmatmul.mubr.bf16.gmra.mxu0 %v304
    %v2506 = vpop.f32.mrf.mxu0
    %v2507 = vadd.f32 0.0, %v2506
    %v2508 = vpop.f32.mrf.mxu0
    %v2509 = vadd.f32 0.0, %v2508
    %v2510 = vpop.f32.mrf.mxu0
    %v2511 = vadd.f32 0.0, %v2510
    %v2512 = vpop.f32.mrf.mxu0
    %v2513 = vadd.f32 0.0, %v2512
    %2514 = vmatprep.mubr.bf16.mxu0 %v313
    %2515 = vmatmul.mubr.bf16.gmra.mxu0 %v312
    %v2516 = vpop.f32.mrf.mxu0
    %v2517 = vadd.f32 0.0, %v2516
    %v2518 = vpop.f32.mrf.mxu0
    %v2519 = vadd.f32 0.0, %v2518
    %v2520 = vpop.f32.mrf.mxu0
    %v2521 = vadd.f32 0.0, %v2520
    %v2522 = vpop.f32.mrf.mxu0
    %v2523 = vadd.f32 0.0, %v2522
    %2524 = vmatprep.mubr.bf16.mxu0 %v321
    %2525 = vmatmul.mubr.bf16.gmra.mxu0 %v320
    %v2526 = vpop.f32.mrf.mxu0
    %v2527 = vadd.f32 0.0, %v2526
    %v2528 = vpop.f32.mrf.mxu0
    %v2529 = vadd.f32 0.0, %v2528
    %v2530 = vpop.f32.mrf.mxu0
    %v2531 = vadd.f32 0.0, %v2530
    %v2532 = vpop.f32.mrf.mxu0
    %v2533 = vadd.f32 0.0, %v2532
    %2534 = vmatprep.mubr.bf16.mxu0 %v329
    %2535 = vmatmul.mubr.bf16.gmra.mxu0 %v328
    %v2536 = vpop.f32.mrf.mxu0
    %v2537 = vadd.f32 0.0, %v2536
    %v2538 = vpop.f32.mrf.mxu0
    %v2539 = vadd.f32 0.0, %v2538
    %v2540 = vpop.f32.mrf.mxu0
    %v2541 = vadd.f32 0.0, %v2540
    %v2542 = vpop.f32.mrf.mxu0
    %v2543 = vadd.f32 0.0, %v2542
    %2544 = vmatprep.mubr.bf16.mxu0 %v337
    %2545 = vmatmul.mubr.bf16.gmra.mxu0 %v336
    %v2546 = vpop.f32.mrf.mxu0
    %v2547 = vadd.f32 0.0, %v2546
    %v2548 = vpop.f32.mrf.mxu0
    %v2549 = vadd.f32 0.0, %v2548
    %v2550 = vpop.f32.mrf.mxu0
    %v2551 = vpop.f32.mrf.mxu0
    %2552 = vdwg.mxu0
    %2553 = vmatprep.subr.bf16.mxu0 %v1868
    %2554 = vmatpush1.bf16.msra.mxu0 %v1867
    %2555 = vmatprep.subr.bf16.mxu0 %v1863
    %2556 = vmatpush1.bf16.msra.mxu0 %v1862
    %2557 = vmatprep.subr.bf16.mxu0 %v1858
    %2558 = vmatpush1.bf16.msra.mxu0 %v1857
    %2559 = vmatprep.subr.bf16.mxu0 %v1853
    %2560 = vmatpush1.bf16.msra.mxu0 %v1852
    %2561 = vmatprep.subr.bf16.mxu0 %v1848
    %2562 = vmatpush1.bf16.msra.mxu0 %v1847
    %2563 = vmatprep.subr.bf16.mxu0 %v1843
    %2564 = vmatpush1.bf16.msra.mxu0 %v1842
    %2565 = vmatprep.subr.bf16.mxu0 %v1838
    %2566 = vmatpush1.bf16.msra.mxu0 %v1837
    %2567 = vmatprep.subr.bf16.mxu0 %v1833
    %2568 = vmatpush1.bf16.msra.mxu0 %v1832
    %2569 = vmatprep.subr.bf16.mxu0 %v1908
    %2570 = vmatpush2.bf16.msra.mxu0 %v1907
    %2571 = vmatprep.subr.bf16.mxu0 %v1903
    %2572 = vmatpush2.bf16.msra.mxu0 %v1902
    %2573 = vmatprep.subr.bf16.mxu0 %v1898
    %2574 = vmatpush2.bf16.msra.mxu0 %v1897
    %2575 = vmatprep.subr.bf16.mxu0 %v1893
    %2576 = vmatpush2.bf16.msra.mxu0 %v1892
    %2577 = vmatprep.subr.bf16.mxu0 %v1888
    %2578 = vmatpush2.bf16.msra.mxu0 %v1887
    %2579 = vmatprep.subr.bf16.mxu0 %v1883
    %2580 = vmatpush2.bf16.msra.mxu0 %v1882
    %2581 = vmatprep.subr.bf16.mxu0 %v1878
    %2582 = vmatpush2.bf16.msra.mxu0 %v1877
    %2583 = vmatprep.subr.bf16.mxu0 %v1873
    %2584 = vmatpush2.bf16.msra.mxu0 %v1872
    %2585 = vmatprep.mubr.bf16.mxu0 %v243
    %2586 = vmatmul.mubr.bf16.gmra.mxu0 %v242
    %v2587 = vpop.f32.mrf.mxu0
    %v2588 = vadd.f32 %v2427, %v2587
    %v2589 = vpop.f32.mrf.mxu0
    %v2590 = vadd.f32 %v2429, %v2589
    %v2591 = vpop.f32.mrf.mxu0
    %v2592 = vadd.f32 %v2431, %v2591
    %v2593 = vpop.f32.mrf.mxu0
    %v2594 = vadd.f32 %v2433, %v2593
    %2595 = vmatprep.mubr.bf16.mxu0 %v251
    %2596 = vmatmul.mubr.bf16.gmra.mxu0 %v250
    %v2597 = vpop.f32.mrf.mxu0
    %v2598 = vadd.f32 %v2437, %v2597
    %v2599 = vpop.f32.mrf.mxu0
    %v2600 = vadd.f32 %v2439, %v2599
    %v2601 = vpop.f32.mrf.mxu0
    %v2602 = vadd.f32 %v2441, %v2601
    %v2603 = vpop.f32.mrf.mxu0
    %v2604 = vadd.f32 %v2443, %v2603
    %2605 = vmatprep.mubr.bf16.mxu0 %v259
    %2606 = vmatmul.mubr.bf16.gmra.mxu0 %v258
    %v2607 = vpop.f32.mrf.mxu0
    %v2608 = vadd.f32 %v2447, %v2607
    %v2609 = vpop.f32.mrf.mxu0
    %v2610 = vadd.f32 %v2449, %v2609
    %v2611 = vpop.f32.mrf.mxu0
    %v2612 = vadd.f32 %v2451, %v2611
    %v2613 = vpop.f32.mrf.mxu0
    %v2614 = vadd.f32 %v2453, %v2613
    %2615 = vmatprep.mubr.bf16.mxu0 %v267
    %2616 = vmatmul.mubr.bf16.gmra.mxu0 %v266
    %v2617 = vpop.f32.mrf.mxu0
    %v2618 = vadd.f32 %v2457, %v2617
    %v2619 = vpop.f32.mrf.mxu0
    %v2620 = vadd.f32 %v2459, %v2619
    %v2621 = vpop.f32.mrf.mxu0
    %v2622 = vadd.f32 %v2461, %v2621
    %v2623 = vpop.f32.mrf.mxu0
    %v2624 = vadd.f32 %v2463, %v2623
    %2625 = vmatprep.mubr.bf16.mxu0 %v275
    %2626 = vmatmul.mubr.bf16.gmra.mxu0 %v274
    %v2627 = vpop.f32.mrf.mxu0
    %v2628 = vadd.f32 %v2467, %v2627
    %v2629 = vpop.f32.mrf.mxu0
    %v2630 = vadd.f32 %v2469, %v2629
    %v2631 = vpop.f32.mrf.mxu0
    %v2632 = vadd.f32 %v2471, %v2631
    %v2633 = vpop.f32.mrf.mxu0
    %v2634 = vadd.f32 %v2473, %v2633
    %2635 = vmatprep.mubr.bf16.mxu0 %v283
    %2636 = vmatmul.mubr.bf16.gmra.mxu0 %v282
    %v2637 = vpop.f32.mrf.mxu0
    %v2638 = vadd.f32 %v2477, %v2637
    %v2639 = vpop.f32.mrf.mxu0
    %v2640 = vadd.f32 %v2479, %v2639
    %v2641 = vpop.f32.mrf.mxu0
    %v2642 = vadd.f32 %v2481, %v2641
    %v2643 = vpop.f32.mrf.mxu0
    %v2644 = vadd.f32 %v2483, %v2643
    %2645 = vmatprep.mubr.bf16.mxu0 %v291
    %2646 = vmatmul.mubr.bf16.gmra.mxu0 %v290
    %v2647 = vpop.f32.mrf.mxu0
    %v2648 = vadd.f32 %v2487, %v2647
    %v2649 = vpop.f32.mrf.mxu0
    %v2650 = vadd.f32 %v2489, %v2649
    %v2651 = vpop.f32.mrf.mxu0
    %v2652 = vadd.f32 %v2491, %v2651
    %v2653 = vpop.f32.mrf.mxu0
    %v2654 = vadd.f32 %v2493, %v2653
    %2655 = vmatprep.mubr.bf16.mxu0 %v299
    %2656 = vmatmul.mubr.bf16.gmra.mxu0 %v298
    %v2657 = vpop.f32.mrf.mxu0
    %v2658 = vadd.f32 %v2497, %v2657
    %v2659 = vpop.f32.mrf.mxu0
    %v2660 = vadd.f32 %v2499, %v2659
    %v2661 = vpop.f32.mrf.mxu0
    %v2662 = vadd.f32 %v2501, %v2661
    %v2663 = vpop.f32.mrf.mxu0
    %v2664 = vadd.f32 %v2503, %v2663
    %2665 = vmatprep.mubr.bf16.mxu0 %v307
    %2666 = vmatmul.mubr.bf16.gmra.mxu0 %v306
    %v2667 = vpop.f32.mrf.mxu0
    %v2668 = vadd.f32 %v2507, %v2667
    %v2669 = vpop.f32.mrf.mxu0
    %v2670 = vadd.f32 %v2509, %v2669
    %v2671 = vpop.f32.mrf.mxu0
    %v2672 = vadd.f32 %v2511, %v2671
    %v2673 = vpop.f32.mrf.mxu0
    %v2674 = vadd.f32 %v2513, %v2673
    %2675 = vmatprep.mubr.bf16.mxu0 %v315
    %2676 = vmatmul.mubr.bf16.gmra.mxu0 %v314
    %v2677 = vpop.f32.mrf.mxu0
    %v2678 = vadd.f32 %v2517, %v2677
    %v2679 = vpop.f32.mrf.mxu0
    %v2680 = vadd.f32 %v2519, %v2679
    %v2681 = vpop.f32.mrf.mxu0
    %v2682 = vadd.f32 %v2521, %v2681
    %v2683 = vpop.f32.mrf.mxu0
    %v2684 = vadd.f32 %v2523, %v2683
    %2685 = vmatprep.mubr.bf16.mxu0 %v323
    %2686 = vmatmul.mubr.bf16.gmra.mxu0 %v322
    %v2687 = vpop.f32.mrf.mxu0
    %v2688 = vadd.f32 %v2527, %v2687
    %v2689 = vpop.f32.mrf.mxu0
    %v2690 = vadd.f32 %v2529, %v2689
    %v2691 = vpop.f32.mrf.mxu0
    %v2692 = vadd.f32 %v2531, %v2691
    %v2693 = vpop.f32.mrf.mxu0
    %v2694 = vadd.f32 %v2533, %v2693
    %2695 = vmatprep.mubr.bf16.mxu0 %v331
    %2696 = vmatmul.mubr.bf16.gmra.mxu0 %v330
    %v2697 = vpop.f32.mrf.mxu0
    %v2698 = vadd.f32 %v2537, %v2697
    %v2699 = vpop.f32.mrf.mxu0
    %v2700 = vadd.f32 %v2539, %v2699
    %v2701 = vpop.f32.mrf.mxu0
    %v2702 = vadd.f32 %v2541, %v2701
    %v2703 = vpop.f32.mrf.mxu0
    %v2704 = vadd.f32 %v2543, %v2703
    %2705 = vmatprep.mubr.bf16.mxu0 %v339
    %2706 = vmatmul.mubr.bf16.gmra.mxu0 %v338
    %v2707 = vpop.f32.mrf.mxu0
    %v2708 = vadd.f32 %v2547, %v2707
    %v2709 = vpop.f32.mrf.mxu0
    %v2710 = vadd.f32 %v2549, %v2709
    %v2711 = vpop.f32.mrf.mxu0
    %v2712 = vpop.f32.mrf.mxu0
    %2713 = vdwg.mxu0
    %2714 = vmatprep.subr.bf16.mxu0 %v1948
    %2715 = vmatpush1.bf16.msra.mxu0 %v1947
    %2716 = vmatprep.subr.bf16.mxu0 %v1943
    %2717 = vmatpush1.bf16.msra.mxu0 %v1942
    %2718 = vmatprep.subr.bf16.mxu0 %v1938
    %2719 = vmatpush1.bf16.msra.mxu0 %v1937
    %2720 = vmatprep.subr.bf16.mxu0 %v1933
    %2721 = vmatpush1.bf16.msra.mxu0 %v1932
    %2722 = vmatprep.subr.bf16.mxu0 %v1928
    %2723 = vmatpush1.bf16.msra.mxu0 %v1927
    %2724 = vmatprep.subr.bf16.mxu0 %v1923
    %2725 = vmatpush1.bf16.msra.mxu0 %v1922
    %2726 = vmatprep.subr.bf16.mxu0 %v1918
    %2727 = vmatpush1.bf16.msra.mxu0 %v1917
    %2728 = vmatprep.subr.bf16.mxu0 %v1913
    %2729 = vmatpush1.bf16.msra.mxu0 %v1912
    %2730 = vmatprep.subr.bf16.mxu0 %v1988
    %2731 = vmatpush2.bf16.msra.mxu0 %v1987
    %2732 = vmatprep.subr.bf16.mxu0 %v1983
    %2733 = vmatpush2.bf16.msra.mxu0 %v1982
    %2734 = vmatprep.subr.bf16.mxu0 %v1978
    %2735 = vmatpush2.bf16.msra.mxu0 %v1977
    %2736 = vmatprep.subr.bf16.mxu0 %v1973
    %2737 = vmatpush2.bf16.msra.mxu0 %v1972
    %2738 = vmatprep.subr.bf16.mxu0 %v1968
    %2739 = vmatpush2.bf16.msra.mxu0 %v1967
    %2740 = vmatprep.subr.bf16.mxu0 %v1963
    %2741 = vmatpush2.bf16.msra.mxu0 %v1962
    %2742 = vmatprep.subr.bf16.mxu0 %v1958
    %2743 = vmatpush2.bf16.msra.mxu0 %v1957
    %2744 = vmatprep.subr.bf16.mxu0 %v1953
    %2745 = vmatpush2.bf16.msra.mxu0 %v1952
    %2746 = vmatprep.mubr.bf16.mxu0 %v245
    %2747 = vmatmul.mubr.bf16.gmra.mxu0 %v244
    %v2748 = vpop.f32.mrf.mxu0
    %v2749 = vadd.f32 %v2588, %v2748
    %v2750 = vpop.f32.mrf.mxu0
    %v2751 = vadd.f32 %v2590, %v2750
    %v2752 = vpop.f32.mrf.mxu0
    %v2753 = vadd.f32 %v2592, %v2752
    %v2754 = vpop.f32.mrf.mxu0
    %v2755 = vadd.f32 %v2594, %v2754
    %2756 = vmatprep.mubr.bf16.mxu0 %v253
    %2757 = vmatmul.mubr.bf16.gmra.mxu0 %v252
    %v2758 = vpop.f32.mrf.mxu0
    %v2759 = vadd.f32 %v2598, %v2758
    %v2760 = vpop.f32.mrf.mxu0
    %v2761 = vadd.f32 %v2600, %v2760
    %v2762 = vpop.f32.mrf.mxu0
    %v2763 = vadd.f32 %v2602, %v2762
    %v2764 = vpop.f32.mrf.mxu0
    %v2765 = vadd.f32 %v2604, %v2764
    %2766 = vmatprep.mubr.bf16.mxu0 %v261
    %2767 = vmatmul.mubr.bf16.gmra.mxu0 %v260
    %v2768 = vpop.f32.mrf.mxu0
    %v2769 = vadd.f32 %v2608, %v2768
    %v2770 = vpop.f32.mrf.mxu0
    %v2771 = vadd.f32 %v2610, %v2770
    %v2772 = vpop.f32.mrf.mxu0
    %v2773 = vadd.f32 %v2612, %v2772
    %v2774 = vpop.f32.mrf.mxu0
    %v2775 = vadd.f32 %v2614, %v2774
    %2776 = vmatprep.mubr.bf16.mxu0 %v269
    %2777 = vmatmul.mubr.bf16.gmra.mxu0 %v268
    %v2778 = vpop.f32.mrf.mxu0
    %v2779 = vadd.f32 %v2618, %v2778
    %v2780 = vpop.f32.mrf.mxu0
    %v2781 = vadd.f32 %v2620, %v2780
    %v2782 = vpop.f32.mrf.mxu0
    %v2783 = vadd.f32 %v2622, %v2782
    %v2784 = vpop.f32.mrf.mxu0
    %v2785 = vadd.f32 %v2624, %v2784
    %2786 = vmatprep.mubr.bf16.mxu0 %v277
    %2787 = vmatmul.mubr.bf16.gmra.mxu0 %v276
    %v2788 = vpop.f32.mrf.mxu0
    %v2789 = vadd.f32 %v2628, %v2788
    %v2790 = vpop.f32.mrf.mxu0
    %v2791 = vadd.f32 %v2630, %v2790
    %v2792 = vpop.f32.mrf.mxu0
    %v2793 = vadd.f32 %v2632, %v2792
    %v2794 = vpop.f32.mrf.mxu0
    %v2795 = vadd.f32 %v2634, %v2794
    %2796 = vmatprep.mubr.bf16.mxu0 %v285
    %2797 = vmatmul.mubr.bf16.gmra.mxu0 %v284
    %v2798 = vpop.f32.mrf.mxu0
    %v2799 = vadd.f32 %v2638, %v2798
    %v2800 = vpop.f32.mrf.mxu0
    %v2801 = vadd.f32 %v2640, %v2800
    %v2802 = vpop.f32.mrf.mxu0
    %v2803 = vadd.f32 %v2642, %v2802
    %v2804 = vpop.f32.mrf.mxu0
    %v2805 = vadd.f32 %v2644, %v2804
    %2806 = vmatprep.mubr.bf16.mxu0 %v293
    %2807 = vmatmul.mubr.bf16.gmra.mxu0 %v292
    %v2808 = vpop.f32.mrf.mxu0
    %v2809 = vadd.f32 %v2648, %v2808
    %v2810 = vpop.f32.mrf.mxu0
    %v2811 = vadd.f32 %v2650, %v2810
    %v2812 = vpop.f32.mrf.mxu0
    %v2813 = vadd.f32 %v2652, %v2812
    %v2814 = vpop.f32.mrf.mxu0
    %v2815 = vadd.f32 %v2654, %v2814
    %2816 = vmatprep.mubr.bf16.mxu0 %v301
    %2817 = vmatmul.mubr.bf16.gmra.mxu0 %v300
    %v2818 = vpop.f32.mrf.mxu0
    %v2819 = vadd.f32 %v2658, %v2818
    %v2820 = vpop.f32.mrf.mxu0
    %v2821 = vadd.f32 %v2660, %v2820
    %v2822 = vpop.f32.mrf.mxu0
    %v2823 = vadd.f32 %v2662, %v2822
    %v2824 = vpop.f32.mrf.mxu0
    %v2825 = vadd.f32 %v2664, %v2824
    %2826 = vmatprep.mubr.bf16.mxu0 %v309
    %2827 = vmatmul.mubr.bf16.gmra.mxu0 %v308
    %v2828 = vpop.f32.mrf.mxu0
    %v2829 = vadd.f32 %v2668, %v2828
    %v2830 = vpop.f32.mrf.mxu0
    %v2831 = vadd.f32 %v2670, %v2830
    %v2832 = vpop.f32.mrf.mxu0
    %v2833 = vadd.f32 %v2672, %v2832
    %v2834 = vpop.f32.mrf.mxu0
    %v2835 = vadd.f32 %v2674, %v2834
    %2836 = vmatprep.mubr.bf16.mxu0 %v317
    %2837 = vmatmul.mubr.bf16.gmra.mxu0 %v316
    %v2838 = vpop.f32.mrf.mxu0
    %v2839 = vadd.f32 %v2678, %v2838
    %v2840 = vpop.f32.mrf.mxu0
    %v2841 = vadd.f32 %v2680, %v2840
    %v2842 = vpop.f32.mrf.mxu0
    %v2843 = vadd.f32 %v2682, %v2842
    %v2844 = vpop.f32.mrf.mxu0
    %v2845 = vadd.f32 %v2684, %v2844
    %2846 = vmatprep.mubr.bf16.mxu0 %v325
    %2847 = vmatmul.mubr.bf16.gmra.mxu0 %v324
    %v2848 = vpop.f32.mrf.mxu0
    %v2849 = vadd.f32 %v2688, %v2848
    %v2850 = vpop.f32.mrf.mxu0
    %v2851 = vadd.f32 %v2690, %v2850
    %v2852 = vpop.f32.mrf.mxu0
    %v2853 = vadd.f32 %v2692, %v2852
    %v2854 = vpop.f32.mrf.mxu0
    %v2855 = vadd.f32 %v2694, %v2854
    %2856 = vmatprep.mubr.bf16.mxu0 %v333
    %2857 = vmatmul.mubr.bf16.gmra.mxu0 %v332
    %v2858 = vpop.f32.mrf.mxu0
    %v2859 = vadd.f32 %v2698, %v2858
    %v2860 = vpop.f32.mrf.mxu0
    %v2861 = vadd.f32 %v2700, %v2860
    %v2862 = vpop.f32.mrf.mxu0
    %v2863 = vadd.f32 %v2702, %v2862
    %v2864 = vpop.f32.mrf.mxu0
    %v2865 = vadd.f32 %v2704, %v2864
    %2866 = vmatprep.mubr.bf16.mxu0 %v341
    %2867 = vmatmul.mubr.bf16.gmra.mxu0 %v340
    %v2868 = vpop.f32.mrf.mxu0
    %v2869 = vadd.f32 %v2708, %v2868
    %v2870 = vpop.f32.mrf.mxu0
    %v2871 = vadd.f32 %v2710, %v2870
    %v2872 = vpop.f32.mrf.mxu0
    %v2873 = vpop.f32.mrf.mxu0
    %2874 = vdwg.mxu0
    %2875 = vmatprep.subr.bf16.mxu0 %v2028
    %2876 = vmatpush1.bf16.msra.mxu0 %v2027
    %2877 = vmatprep.subr.bf16.mxu0 %v2023
    %2878 = vmatpush1.bf16.msra.mxu0 %v2022
    %2879 = vmatprep.subr.bf16.mxu0 %v2018
    %2880 = vmatpush1.bf16.msra.mxu0 %v2017
    %2881 = vmatprep.subr.bf16.mxu0 %v2013
    %2882 = vmatpush1.bf16.msra.mxu0 %v2012
    %2883 = vmatprep.subr.bf16.mxu0 %v2008
    %2884 = vmatpush1.bf16.msra.mxu0 %v2007
    %2885 = vmatprep.subr.bf16.mxu0 %v2003
    %2886 = vmatpush1.bf16.msra.mxu0 %v2002
    %2887 = vmatprep.subr.bf16.mxu0 %v1998
    %2888 = vmatpush1.bf16.msra.mxu0 %v1997
    %2889 = vmatprep.subr.bf16.mxu0 %v1993
    %2890 = vmatpush1.bf16.msra.mxu0 %v1992
    %2891 = vmatprep.subr.bf16.mxu0 %v2068
    %2892 = vmatpush2.bf16.msra.mxu0 %v2067
    %2893 = vmatprep.subr.bf16.mxu0 %v2063
    %2894 = vmatpush2.bf16.msra.mxu0 %v2062
    %2895 = vmatprep.subr.bf16.mxu0 %v2058
    %2896 = vmatpush2.bf16.msra.mxu0 %v2057
    %2897 = vmatprep.subr.bf16.mxu0 %v2053
    %2898 = vmatpush2.bf16.msra.mxu0 %v2052
    %2899 = vmatprep.subr.bf16.mxu0 %v2048
    %2900 = vmatpush2.bf16.msra.mxu0 %v2047
    %2901 = vmatprep.subr.bf16.mxu0 %v2043
    %2902 = vmatpush2.bf16.msra.mxu0 %v2042
    %2903 = vmatprep.subr.bf16.mxu0 %v2038
    %2904 = vmatpush2.bf16.msra.mxu0 %v2037
    %2905 = vmatprep.subr.bf16.mxu0 %v2033
    %2906 = vmatpush2.bf16.msra.mxu0 %v2032
    %2907 = vmatprep.mubr.bf16.mxu0 %v247
    %2908 = vmatmul.mubr.bf16.gmra.mxu0 %v246
    %v2909 = vpop.f32.mrf.mxu0
    %v2910 = vadd.f32 %v2749, %v2909
    %v2911 = vpop.f32.mrf.mxu0
    %v2912 = vadd.f32 %v2751, %v2911
    %v2913 = vpop.f32.mrf.mxu0
    %v2914 = vadd.f32 %v2753, %v2913
    %v2915 = vpop.f32.mrf.mxu0
    %v2916 = vadd.f32 %v2755, %v2915
    %2917 = vmatprep.mubr.bf16.mxu0 %v255
    %2918 = vmatmul.mubr.bf16.gmra.mxu0 %v254
    %v2919 = vpop.f32.mrf.mxu0
    %v2920 = vadd.f32 %v2759, %v2919
    %v2921 = vpop.f32.mrf.mxu0
    %v2922 = vadd.f32 %v2761, %v2921
    %v2923 = vpop.f32.mrf.mxu0
    %v2924 = vadd.f32 %v2763, %v2923
    %v2925 = vpop.f32.mrf.mxu0
    %v2926 = vadd.f32 %v2765, %v2925
    %2927 = vmatprep.mubr.bf16.mxu0 %v263
    %2928 = vmatmul.mubr.bf16.gmra.mxu0 %v262
    %v2929 = vpop.f32.mrf.mxu0
    %v2930 = vadd.f32 %v2769, %v2929
    %v2931 = vpop.f32.mrf.mxu0
    %v2932 = vadd.f32 %v2771, %v2931
    %v2933 = vpop.f32.mrf.mxu0
    %v2934 = vadd.f32 %v2773, %v2933
    %v2935 = vpop.f32.mrf.mxu0
    %v2936 = vadd.f32 %v2775, %v2935
    %2937 = vmatprep.mubr.bf16.mxu0 %v271
    %2938 = vmatmul.mubr.bf16.gmra.mxu0 %v270
    %v2939 = vpop.f32.mrf.mxu0
    %v2940 = vadd.f32 %v2779, %v2939
    %v2941 = vpop.f32.mrf.mxu0
    %v2942 = vadd.f32 %v2781, %v2941
    %v2943 = vpop.f32.mrf.mxu0
    %v2944 = vadd.f32 %v2783, %v2943
    %v2945 = vpop.f32.mrf.mxu0
    %v2946 = vadd.f32 %v2785, %v2945
    %2947 = vmatprep.mubr.bf16.mxu0 %v279
    %2948 = vmatmul.mubr.bf16.gmra.mxu0 %v278
    %v2949 = vpop.f32.mrf.mxu0
    %v2950 = vadd.f32 %v2789, %v2949
    %v2951 = vpop.f32.mrf.mxu0
    %v2952 = vadd.f32 %v2791, %v2951
    %v2953 = vpop.f32.mrf.mxu0
    %v2954 = vadd.f32 %v2793, %v2953
    %v2955 = vpop.f32.mrf.mxu0
    %v2956 = vadd.f32 %v2795, %v2955
    %2957 = vmatprep.mubr.bf16.mxu0 %v287
    %2958 = vmatmul.mubr.bf16.gmra.mxu0 %v286
    %v2959 = vpop.f32.mrf.mxu0
    %v2960 = vadd.f32 %v2799, %v2959
    %v2961 = vpop.f32.mrf.mxu0
    %v2962 = vadd.f32 %v2801, %v2961
    %v2963 = vpop.f32.mrf.mxu0
    %v2964 = vadd.f32 %v2803, %v2963
    %v2965 = vpop.f32.mrf.mxu0
    %v2966 = vadd.f32 %v2805, %v2965
    %2967 = vmatprep.mubr.bf16.mxu0 %v295
    %2968 = vmatmul.mubr.bf16.gmra.mxu0 %v294
    %v2969 = vpop.f32.mrf.mxu0
    %v2970 = vadd.f32 %v2809, %v2969
    %v2971 = vpop.f32.mrf.mxu0
    %v2972 = vadd.f32 %v2811, %v2971
    %v2973 = vpop.f32.mrf.mxu0
    %v2974 = vadd.f32 %v2813, %v2973
    %v2975 = vpop.f32.mrf.mxu0
    %v2976 = vadd.f32 %v2815, %v2975
    %2977 = vmatprep.mubr.bf16.mxu0 %v303
    %2978 = vmatmul.mubr.bf16.gmra.mxu0 %v302
    %v2979 = vpop.f32.mrf.mxu0
    %v2980 = vadd.f32 %v2819, %v2979
    %v2981 = vpop.f32.mrf.mxu0
    %v2982 = vadd.f32 %v2821, %v2981
    %v2983 = vpop.f32.mrf.mxu0
    %v2984 = vadd.f32 %v2823, %v2983
    %v2985 = vpop.f32.mrf.mxu0
    %v2986 = vadd.f32 %v2825, %v2985
    %2987 = vmatprep.mubr.bf16.mxu0 %v311
    %2988 = vmatmul.mubr.bf16.gmra.mxu0 %v310
    %v2989 = vpop.f32.mrf.mxu0
    %v2990 = vadd.f32 %v2829, %v2989
    %v2991 = vpop.f32.mrf.mxu0
    %v2992 = vadd.f32 %v2831, %v2991
    %v2993 = vpop.f32.mrf.mxu0
    %v2994 = vadd.f32 %v2833, %v2993
    %v2995 = vpop.f32.mrf.mxu0
    %v2996 = vadd.f32 %v2835, %v2995
    %2997 = vmatprep.mubr.bf16.mxu0 %v319
    %2998 = vmatmul.mubr.bf16.gmra.mxu0 %v318
    %v2999 = vpop.f32.mrf.mxu0
    %v3000 = vadd.f32 %v2839, %v2999
    %v3001 = vpop.f32.mrf.mxu0
    %v3002 = vadd.f32 %v2841, %v3001
    %v3003 = vpop.f32.mrf.mxu0
    %v3004 = vadd.f32 %v2843, %v3003
    %v3005 = vpop.f32.mrf.mxu0
    %v3006 = vadd.f32 %v2845, %v3005
    %3007 = vmatprep.mubr.bf16.mxu0 %v327
    %3008 = vmatmul.mubr.bf16.gmra.mxu0 %v326
    %v3009 = vpop.f32.mrf.mxu0
    %v3010 = vadd.f32 %v2849, %v3009
    %v3011 = vpop.f32.mrf.mxu0
    %v3012 = vadd.f32 %v2851, %v3011
    %v3013 = vpop.f32.mrf.mxu0
    %v3014 = vadd.f32 %v2853, %v3013
    %v3015 = vpop.f32.mrf.mxu0
    %v3016 = vadd.f32 %v2855, %v3015
    %3017 = vmatprep.mubr.bf16.mxu0 %v335
    %3018 = vmatmul.mubr.bf16.gmra.mxu0 %v334
    %v3019 = vpop.f32.mrf.mxu0
    %v3020 = vadd.f32 %v2859, %v3019
    %v3021 = vpop.f32.mrf.mxu0
    %v3022 = vadd.f32 %v2861, %v3021
    %v3023 = vpop.f32.mrf.mxu0
    %v3024 = vadd.f32 %v2863, %v3023
    %v3025 = vpop.f32.mrf.mxu0
    %v3026 = vadd.f32 %v2865, %v3025
    %3027 = vmatprep.mubr.bf16.mxu0 %v343
    %3028 = vmatmul.mubr.bf16.gmra.mxu0 %v342
    %v3029 = vpop.f32.mrf.mxu0
    %v3030 = vadd.f32 %v2869, %v3029
    %v3031 = vpop.f32.mrf.mxu0
    %v3032 = vadd.f32 %v2871, %v3031
    %v3033 = vpop.f32.mrf.mxu0
    %v3034 = vpop.f32.mrf.mxu0
    %3035 = vdwg.mxu0
    %3036 = vmatprep.subr.bf16.mxu0 %v1790
    %3037 = vmatpush1.bf16.msra.mxu0 %v1789
    %3038 = vmatprep.subr.bf16.mxu0 %v1785
    %3039 = vmatpush1.bf16.msra.mxu0 %v1784
    %3040 = vmatprep.subr.bf16.mxu0 %v1780
    %3041 = vmatpush1.bf16.msra.mxu0 %v1779
    %3042 = vmatprep.subr.bf16.mxu0 %v1775
    %3043 = vmatpush1.bf16.msra.mxu0 %v1774
    %3044 = vmatprep.subr.bf16.mxu0 %v1770
    %3045 = vmatpush1.bf16.msra.mxu0 %v1769
    %3046 = vmatprep.subr.bf16.mxu0 %v1765
    %3047 = vmatpush1.bf16.msra.mxu0 %v1764
    %3048 = vmatprep.subr.bf16.mxu0 %v1760
    %3049 = vmatpush1.bf16.msra.mxu0 %v1759
    %3050 = vmatprep.subr.bf16.mxu0 %v1755
    %3051 = vmatpush1.bf16.msra.mxu0 %v1754
    %3052 = vmatprep.subr.bf16.mxu0 %v1830
    %3053 = vmatpush2.bf16.msra.mxu0 %v1829
    %3054 = vmatprep.subr.bf16.mxu0 %v1825
    %3055 = vmatpush2.bf16.msra.mxu0 %v1824
    %3056 = vmatprep.subr.bf16.mxu0 %v1820
    %3057 = vmatpush2.bf16.msra.mxu0 %v1819
    %3058 = vmatprep.subr.bf16.mxu0 %v1815
    %3059 = vmatpush2.bf16.msra.mxu0 %v1814
    %3060 = vmatprep.subr.bf16.mxu0 %v1810
    %3061 = vmatpush2.bf16.msra.mxu0 %v1809
    %3062 = vmatprep.subr.bf16.mxu0 %v1805
    %3063 = vmatpush2.bf16.msra.mxu0 %v1804
    %3064 = vmatprep.subr.bf16.mxu0 %v1800
    %3065 = vmatpush2.bf16.msra.mxu0 %v1799
    %3066 = vmatprep.subr.bf16.mxu0 %v1795
    %3067 = vmatpush2.bf16.msra.mxu0 %v1794
    %3068 = vmatprep.mubr.bf16.mxu0 %v241
    %3069 = vmatmul.mubr.bf16.gmra.mxu0 %v240
    %v3070 = vpop.f32.mrf.mxu0
    %v3071 = vadd.f32 0.0, %v3070
    %v3072 = vpop.f32.mrf.mxu0
    %v3073 = vadd.f32 0.0, %v3072
    %v3074 = vpop.f32.mrf.mxu0
    %v3075 = vadd.f32 0.0, %v3074
    %v3076 = vpop.f32.mrf.mxu0
    %v3077 = vadd.f32 0.0, %v3076
    %3078 = vmatprep.mubr.bf16.mxu0 %v249
    %3079 = vmatmul.mubr.bf16.gmra.mxu0 %v248
    %v3080 = vpop.f32.mrf.mxu0
    %v3081 = vadd.f32 0.0, %v3080
    %v3082 = vpop.f32.mrf.mxu0
    %v3083 = vadd.f32 0.0, %v3082
    %v3084 = vpop.f32.mrf.mxu0
    %v3085 = vadd.f32 0.0, %v3084
    %v3086 = vpop.f32.mrf.mxu0
    %v3087 = vadd.f32 0.0, %v3086
    %3088 = vmatprep.mubr.bf16.mxu0 %v257
    %3089 = vmatmul.mubr.bf16.gmra.mxu0 %v256
    %v3090 = vpop.f32.mrf.mxu0
    %v3091 = vadd.f32 0.0, %v3090
    %v3092 = vpop.f32.mrf.mxu0
    %v3093 = vadd.f32 0.0, %v3092
    %v3094 = vpop.f32.mrf.mxu0
    %v3095 = vadd.f32 0.0, %v3094
    %v3096 = vpop.f32.mrf.mxu0
    %v3097 = vadd.f32 0.0, %v3096
    %3098 = vmatprep.mubr.bf16.mxu0 %v265
    %3099 = vmatmul.mubr.bf16.gmra.mxu0 %v264
    %v3100 = vpop.f32.mrf.mxu0
    %v3101 = vadd.f32 0.0, %v3100
    %v3102 = vpop.f32.mrf.mxu0
    %v3103 = vadd.f32 0.0, %v3102
    %v3104 = vpop.f32.mrf.mxu0
    %v3105 = vadd.f32 0.0, %v3104
    %v3106 = vpop.f32.mrf.mxu0
    %v3107 = vadd.f32 0.0, %v3106
    %3108 = vmatprep.mubr.bf16.mxu0 %v273
    %3109 = vmatmul.mubr.bf16.gmra.mxu0 %v272
    %v3110 = vpop.f32.mrf.mxu0
    %v3111 = vadd.f32 0.0, %v3110
    %v3112 = vpop.f32.mrf.mxu0
    %v3113 = vadd.f32 0.0, %v3112
    %v3114 = vpop.f32.mrf.mxu0
    %v3115 = vadd.f32 0.0, %v3114
    %v3116 = vpop.f32.mrf.mxu0
    %v3117 = vadd.f32 0.0, %v3116
    %3118 = vmatprep.mubr.bf16.mxu0 %v281
    %3119 = vmatmul.mubr.bf16.gmra.mxu0 %v280
    %v3120 = vpop.f32.mrf.mxu0
    %v3121 = vadd.f32 0.0, %v3120
    %v3122 = vpop.f32.mrf.mxu0
    %v3123 = vadd.f32 0.0, %v3122
    %v3124 = vpop.f32.mrf.mxu0
    %v3125 = vadd.f32 0.0, %v3124
    %v3126 = vpop.f32.mrf.mxu0
    %v3127 = vadd.f32 0.0, %v3126
    %3128 = vmatprep.mubr.bf16.mxu0 %v289
    %3129 = vmatmul.mubr.bf16.gmra.mxu0 %v288
    %v3130 = vpop.f32.mrf.mxu0
    %v3131 = vadd.f32 0.0, %v3130
    %v3132 = vpop.f32.mrf.mxu0
    %v3133 = vadd.f32 0.0, %v3132
    %v3134 = vpop.f32.mrf.mxu0
    %v3135 = vadd.f32 0.0, %v3134
    %v3136 = vpop.f32.mrf.mxu0
    %v3137 = vadd.f32 0.0, %v3136
    %3138 = vmatprep.mubr.bf16.mxu0 %v297
    %3139 = vmatmul.mubr.bf16.gmra.mxu0 %v296
    %v3140 = vpop.f32.mrf.mxu0
    %v3141 = vadd.f32 0.0, %v3140
    %v3142 = vpop.f32.mrf.mxu0
    %v3143 = vadd.f32 0.0, %v3142
    %v3144 = vpop.f32.mrf.mxu0
    %v3145 = vadd.f32 0.0, %v3144
    %v3146 = vpop.f32.mrf.mxu0
    %v3147 = vadd.f32 0.0, %v3146
    %3148 = vmatprep.mubr.bf16.mxu0 %v305
    %3149 = vmatmul.mubr.bf16.gmra.mxu0 %v304
    %v3150 = vpop.f32.mrf.mxu0
    %v3151 = vadd.f32 0.0, %v3150
    %v3152 = vpop.f32.mrf.mxu0
    %v3153 = vadd.f32 0.0, %v3152
    %v3154 = vpop.f32.mrf.mxu0
    %v3155 = vadd.f32 0.0, %v3154
    %v3156 = vpop.f32.mrf.mxu0
    %v3157 = vadd.f32 0.0, %v3156
    %3158 = vmatprep.mubr.bf16.mxu0 %v313
    %3159 = vmatmul.mubr.bf16.gmra.mxu0 %v312
    %v3160 = vpop.f32.mrf.mxu0
    %v3161 = vadd.f32 0.0, %v3160
    %v3162 = vpop.f32.mrf.mxu0
    %v3163 = vadd.f32 0.0, %v3162
    %v3164 = vpop.f32.mrf.mxu0
    %v3165 = vadd.f32 0.0, %v3164
    %v3166 = vpop.f32.mrf.mxu0
    %v3167 = vadd.f32 0.0, %v3166
    %3168 = vmatprep.mubr.bf16.mxu0 %v321
    %3169 = vmatmul.mubr.bf16.gmra.mxu0 %v320
    %v3170 = vpop.f32.mrf.mxu0
    %v3171 = vadd.f32 0.0, %v3170
    %v3172 = vpop.f32.mrf.mxu0
    %v3173 = vadd.f32 0.0, %v3172
    %v3174 = vpop.f32.mrf.mxu0
    %v3175 = vadd.f32 0.0, %v3174
    %v3176 = vpop.f32.mrf.mxu0
    %v3177 = vadd.f32 0.0, %v3176
    %3178 = vmatprep.mubr.bf16.mxu0 %v329
    %3179 = vmatmul.mubr.bf16.gmra.mxu0 %v328
    %v3180 = vpop.f32.mrf.mxu0
    %v3181 = vadd.f32 0.0, %v3180
    %v3182 = vpop.f32.mrf.mxu0
    %v3183 = vadd.f32 0.0, %v3182
    %v3184 = vpop.f32.mrf.mxu0
    %v3185 = vadd.f32 0.0, %v3184
    %v3186 = vpop.f32.mrf.mxu0
    %v3187 = vadd.f32 0.0, %v3186
    %3188 = vmatprep.mubr.bf16.mxu0 %v337
    %3189 = vmatmul.mubr.bf16.gmra.mxu0 %v336
    %v3190 = vpop.f32.mrf.mxu0
    %v3191 = vadd.f32 0.0, %v3190
    %v3192 = vpop.f32.mrf.mxu0
    %v3193 = vadd.f32 0.0, %v3192
    %v3194 = vpop.f32.mrf.mxu0
    %v3195 = vpop.f32.mrf.mxu0
    %3196 = vdwg.mxu0
    %3197 = vmatprep.subr.bf16.mxu0 %v1870
    %3198 = vmatpush1.bf16.msra.mxu0 %v1869
    %3199 = vmatprep.subr.bf16.mxu0 %v1865
    %3200 = vmatpush1.bf16.msra.mxu0 %v1864
    %3201 = vmatprep.subr.bf16.mxu0 %v1860
    %3202 = vmatpush1.bf16.msra.mxu0 %v1859
    %3203 = vmatprep.subr.bf16.mxu0 %v1855
    %3204 = vmatpush1.bf16.msra.mxu0 %v1854
    %3205 = vmatprep.subr.bf16.mxu0 %v1850
    %3206 = vmatpush1.bf16.msra.mxu0 %v1849
    %3207 = vmatprep.subr.bf16.mxu0 %v1845
    %3208 = vmatpush1.bf16.msra.mxu0 %v1844
    %3209 = vmatprep.subr.bf16.mxu0 %v1840
    %3210 = vmatpush1.bf16.msra.mxu0 %v1839
    %3211 = vmatprep.subr.bf16.mxu0 %v1835
    %3212 = vmatpush1.bf16.msra.mxu0 %v1834
    %3213 = vmatprep.subr.bf16.mxu0 %v1910
    %3214 = vmatpush2.bf16.msra.mxu0 %v1909
    %3215 = vmatprep.subr.bf16.mxu0 %v1905
    %3216 = vmatpush2.bf16.msra.mxu0 %v1904
    %3217 = vmatprep.subr.bf16.mxu0 %v1900
    %3218 = vmatpush2.bf16.msra.mxu0 %v1899
    %3219 = vmatprep.subr.bf16.mxu0 %v1895
    %3220 = vmatpush2.bf16.msra.mxu0 %v1894
    %3221 = vmatprep.subr.bf16.mxu0 %v1890
    %3222 = vmatpush2.bf16.msra.mxu0 %v1889
    %3223 = vmatprep.subr.bf16.mxu0 %v1885
    %3224 = vmatpush2.bf16.msra.mxu0 %v1884
    %3225 = vmatprep.subr.bf16.mxu0 %v1880
    %3226 = vmatpush2.bf16.msra.mxu0 %v1879
    %3227 = vmatprep.subr.bf16.mxu0 %v1875
    %3228 = vmatpush2.bf16.msra.mxu0 %v1874
    %3229 = vmatprep.mubr.bf16.mxu0 %v243
    %3230 = vmatmul.mubr.bf16.gmra.mxu0 %v242
    %v3231 = vpop.f32.mrf.mxu0
    %v3232 = vadd.f32 %v3071, %v3231
    %v3233 = vpop.f32.mrf.mxu0
    %v3234 = vadd.f32 %v3073, %v3233
    %v3235 = vpop.f32.mrf.mxu0
    %v3236 = vadd.f32 %v3075, %v3235
    %v3237 = vpop.f32.mrf.mxu0
    %v3238 = vadd.f32 %v3077, %v3237
    %3239 = vmatprep.mubr.bf16.mxu0 %v251
    %3240 = vmatmul.mubr.bf16.gmra.mxu0 %v250
    %v3241 = vpop.f32.mrf.mxu0
    %v3242 = vadd.f32 %v3081, %v3241
    %v3243 = vpop.f32.mrf.mxu0
    %v3244 = vadd.f32 %v3083, %v3243
    %v3245 = vpop.f32.mrf.mxu0
    %v3246 = vadd.f32 %v3085, %v3245
    %v3247 = vpop.f32.mrf.mxu0
    %v3248 = vadd.f32 %v3087, %v3247
    %3249 = vmatprep.mubr.bf16.mxu0 %v259
    %3250 = vmatmul.mubr.bf16.gmra.mxu0 %v258
    %v3251 = vpop.f32.mrf.mxu0
    %v3252 = vadd.f32 %v3091, %v3251
    %v3253 = vpop.f32.mrf.mxu0
    %v3254 = vadd.f32 %v3093, %v3253
    %v3255 = vpop.f32.mrf.mxu0
    %v3256 = vadd.f32 %v3095, %v3255
    %v3257 = vpop.f32.mrf.mxu0
    %v3258 = vadd.f32 %v3097, %v3257
    %3259 = vmatprep.mubr.bf16.mxu0 %v267
    %3260 = vmatmul.mubr.bf16.gmra.mxu0 %v266
    %v3261 = vpop.f32.mrf.mxu0
    %v3262 = vadd.f32 %v3101, %v3261
    %v3263 = vpop.f32.mrf.mxu0
    %v3264 = vadd.f32 %v3103, %v3263
    %v3265 = vpop.f32.mrf.mxu0
    %v3266 = vadd.f32 %v3105, %v3265
    %v3267 = vpop.f32.mrf.mxu0
    %v3268 = vadd.f32 %v3107, %v3267
    %3269 = vmatprep.mubr.bf16.mxu0 %v275
    %3270 = vmatmul.mubr.bf16.gmra.mxu0 %v274
    %v3271 = vpop.f32.mrf.mxu0
    %v3272 = vadd.f32 %v3111, %v3271
    %v3273 = vpop.f32.mrf.mxu0
    %v3274 = vadd.f32 %v3113, %v3273
    %v3275 = vpop.f32.mrf.mxu0
    %v3276 = vadd.f32 %v3115, %v3275
    %v3277 = vpop.f32.mrf.mxu0
    %v3278 = vadd.f32 %v3117, %v3277
    %3279 = vmatprep.mubr.bf16.mxu0 %v283
    %3280 = vmatmul.mubr.bf16.gmra.mxu0 %v282
    %v3281 = vpop.f32.mrf.mxu0
    %v3282 = vadd.f32 %v3121, %v3281
    %v3283 = vpop.f32.mrf.mxu0
    %v3284 = vadd.f32 %v3123, %v3283
    %v3285 = vpop.f32.mrf.mxu0
    %v3286 = vadd.f32 %v3125, %v3285
    %v3287 = vpop.f32.mrf.mxu0
    %v3288 = vadd.f32 %v3127, %v3287
    %3289 = vmatprep.mubr.bf16.mxu0 %v291
    %3290 = vmatmul.mubr.bf16.gmra.mxu0 %v290
    %v3291 = vpop.f32.mrf.mxu0
    %v3292 = vadd.f32 %v3131, %v3291
    %v3293 = vpop.f32.mrf.mxu0
    %v3294 = vadd.f32 %v3133, %v3293
    %v3295 = vpop.f32.mrf.mxu0
    %v3296 = vadd.f32 %v3135, %v3295
    %v3297 = vpop.f32.mrf.mxu0
    %v3298 = vadd.f32 %v3137, %v3297
    %3299 = vmatprep.mubr.bf16.mxu0 %v299
    %3300 = vmatmul.mubr.bf16.gmra.mxu0 %v298
    %v3301 = vpop.f32.mrf.mxu0
    %v3302 = vadd.f32 %v3141, %v3301
    %v3303 = vpop.f32.mrf.mxu0
    %v3304 = vadd.f32 %v3143, %v3303
    %v3305 = vpop.f32.mrf.mxu0
    %v3306 = vadd.f32 %v3145, %v3305
    %v3307 = vpop.f32.mrf.mxu0
    %v3308 = vadd.f32 %v3147, %v3307
    %3309 = vmatprep.mubr.bf16.mxu0 %v307
    %3310 = vmatmul.mubr.bf16.gmra.mxu0 %v306
    %v3311 = vpop.f32.mrf.mxu0
    %v3312 = vadd.f32 %v3151, %v3311
    %v3313 = vpop.f32.mrf.mxu0
    %v3314 = vadd.f32 %v3153, %v3313
    %v3315 = vpop.f32.mrf.mxu0
    %v3316 = vadd.f32 %v3155, %v3315
    %v3317 = vpop.f32.mrf.mxu0
    %v3318 = vadd.f32 %v3157, %v3317
    %3319 = vmatprep.mubr.bf16.mxu0 %v315
    %3320 = vmatmul.mubr.bf16.gmra.mxu0 %v314
    %v3321 = vpop.f32.mrf.mxu0
    %v3322 = vadd.f32 %v3161, %v3321
    %v3323 = vpop.f32.mrf.mxu0
    %v3324 = vadd.f32 %v3163, %v3323
    %v3325 = vpop.f32.mrf.mxu0
    %v3326 = vadd.f32 %v3165, %v3325
    %v3327 = vpop.f32.mrf.mxu0
    %v3328 = vadd.f32 %v3167, %v3327
    %3329 = vmatprep.mubr.bf16.mxu0 %v323
    %3330 = vmatmul.mubr.bf16.gmra.mxu0 %v322
    %v3331 = vpop.f32.mrf.mxu0
    %v3332 = vadd.f32 %v3171, %v3331
    %v3333 = vpop.f32.mrf.mxu0
    %v3334 = vadd.f32 %v3173, %v3333
    %v3335 = vpop.f32.mrf.mxu0
    %v3336 = vadd.f32 %v3175, %v3335
    %v3337 = vpop.f32.mrf.mxu0
    %v3338 = vadd.f32 %v3177, %v3337
    %3339 = vmatprep.mubr.bf16.mxu0 %v331
    %3340 = vmatmul.mubr.bf16.gmra.mxu0 %v330
    %v3341 = vpop.f32.mrf.mxu0
    %v3342 = vadd.f32 %v3181, %v3341
    %v3343 = vpop.f32.mrf.mxu0
    %v3344 = vadd.f32 %v3183, %v3343
    %v3345 = vpop.f32.mrf.mxu0
    %v3346 = vadd.f32 %v3185, %v3345
    %v3347 = vpop.f32.mrf.mxu0
    %v3348 = vadd.f32 %v3187, %v3347
    %3349 = vmatprep.mubr.bf16.mxu0 %v339
    %3350 = vmatmul.mubr.bf16.gmra.mxu0 %v338
    %v3351 = vpop.f32.mrf.mxu0
    %v3352 = vadd.f32 %v3191, %v3351
    %v3353 = vpop.f32.mrf.mxu0
    %v3354 = vadd.f32 %v3193, %v3353
    %v3355 = vpop.f32.mrf.mxu0
    %v3356 = vpop.f32.mrf.mxu0
    %3357 = vdwg.mxu0
    %3358 = vmatprep.subr.bf16.mxu0 %v1950
    %3359 = vmatpush1.bf16.msra.mxu0 %v1949
    %3360 = vmatprep.subr.bf16.mxu0 %v1945
    %3361 = vmatpush1.bf16.msra.mxu0 %v1944
    %3362 = vmatprep.subr.bf16.mxu0 %v1940
    %3363 = vmatpush1.bf16.msra.mxu0 %v1939
    %3364 = vmatprep.subr.bf16.mxu0 %v1935
    %3365 = vmatpush1.bf16.msra.mxu0 %v1934
    %3366 = vmatprep.subr.bf16.mxu0 %v1930
    %3367 = vmatpush1.bf16.msra.mxu0 %v1929
    %3368 = vmatprep.subr.bf16.mxu0 %v1925
    %3369 = vmatpush1.bf16.msra.mxu0 %v1924
    %3370 = vmatprep.subr.bf16.mxu0 %v1920
    %3371 = vmatpush1.bf16.msra.mxu0 %v1919
    %3372 = vmatprep.subr.bf16.mxu0 %v1915
    %3373 = vmatpush1.bf16.msra.mxu0 %v1914
    %3374 = vmatprep.subr.bf16.mxu0 %v1990
    %3375 = vmatpush2.bf16.msra.mxu0 %v1989
    %3376 = vmatprep.subr.bf16.mxu0 %v1985
    %3377 = vmatpush2.bf16.msra.mxu0 %v1984
    %3378 = vmatprep.subr.bf16.mxu0 %v1980
    %3379 = vmatpush2.bf16.msra.mxu0 %v1979
    %3380 = vmatprep.subr.bf16.mxu0 %v1975
    %3381 = vmatpush2.bf16.msra.mxu0 %v1974
    %3382 = vmatprep.subr.bf16.mxu0 %v1970
    %3383 = vmatpush2.bf16.msra.mxu0 %v1969
    %3384 = vmatprep.subr.bf16.mxu0 %v1965
    %3385 = vmatpush2.bf16.msra.mxu0 %v1964
    %3386 = vmatprep.subr.bf16.mxu0 %v1960
    %3387 = vmatpush2.bf16.msra.mxu0 %v1959
    %3388 = vmatprep.subr.bf16.mxu0 %v1955
    %3389 = vmatpush2.bf16.msra.mxu0 %v1954
    %3390 = vmatprep.mubr.bf16.mxu0 %v245
    %3391 = vmatmul.mubr.bf16.gmra.mxu0 %v244
    %v3392 = vpop.f32.mrf.mxu0
    %v3393 = vadd.f32 %v3232, %v3392
    %v3394 = vpop.f32.mrf.mxu0
    %v3395 = vadd.f32 %v3234, %v3394
    %v3396 = vpop.f32.mrf.mxu0
    %v3397 = vadd.f32 %v3236, %v3396
    %v3398 = vpop.f32.mrf.mxu0
    %v3399 = vadd.f32 %v3238, %v3398
    %3400 = vmatprep.mubr.bf16.mxu0 %v253
    %3401 = vmatmul.mubr.bf16.gmra.mxu0 %v252
    %v3402 = vpop.f32.mrf.mxu0
    %v3403 = vadd.f32 %v3242, %v3402
    %v3404 = vpop.f32.mrf.mxu0
    %v3405 = vadd.f32 %v3244, %v3404
    %v3406 = vpop.f32.mrf.mxu0
    %v3407 = vadd.f32 %v3246, %v3406
    %v3408 = vpop.f32.mrf.mxu0
    %v3409 = vadd.f32 %v3248, %v3408
    %3410 = vmatprep.mubr.bf16.mxu0 %v261
    %3411 = vmatmul.mubr.bf16.gmra.mxu0 %v260
    %v3412 = vpop.f32.mrf.mxu0
    %v3413 = vadd.f32 %v3252, %v3412
    %v3414 = vpop.f32.mrf.mxu0
    %v3415 = vadd.f32 %v3254, %v3414
    %v3416 = vpop.f32.mrf.mxu0
    %v3417 = vadd.f32 %v3256, %v3416
    %v3418 = vpop.f32.mrf.mxu0
    %v3419 = vadd.f32 %v3258, %v3418
    %3420 = vmatprep.mubr.bf16.mxu0 %v269
    %3421 = vmatmul.mubr.bf16.gmra.mxu0 %v268
    %v3422 = vpop.f32.mrf.mxu0
    %v3423 = vadd.f32 %v3262, %v3422
    %v3424 = vpop.f32.mrf.mxu0
    %v3425 = vadd.f32 %v3264, %v3424
    %v3426 = vpop.f32.mrf.mxu0
    %v3427 = vadd.f32 %v3266, %v3426
    %v3428 = vpop.f32.mrf.mxu0
    %v3429 = vadd.f32 %v3268, %v3428
    %3430 = vmatprep.mubr.bf16.mxu0 %v277
    %3431 = vmatmul.mubr.bf16.gmra.mxu0 %v276
    %v3432 = vpop.f32.mrf.mxu0
    %v3433 = vadd.f32 %v3272, %v3432
    %v3434 = vpop.f32.mrf.mxu0
    %v3435 = vadd.f32 %v3274, %v3434
    %v3436 = vpop.f32.mrf.mxu0
    %v3437 = vadd.f32 %v3276, %v3436
    %v3438 = vpop.f32.mrf.mxu0
    %v3439 = vadd.f32 %v3278, %v3438
    %3440 = vmatprep.mubr.bf16.mxu0 %v285
    %3441 = vmatmul.mubr.bf16.gmra.mxu0 %v284
    %v3442 = vpop.f32.mrf.mxu0
    %v3443 = vadd.f32 %v3282, %v3442
    %v3444 = vpop.f32.mrf.mxu0
    %v3445 = vadd.f32 %v3284, %v3444
    %v3446 = vpop.f32.mrf.mxu0
    %v3447 = vadd.f32 %v3286, %v3446
    %v3448 = vpop.f32.mrf.mxu0
    %v3449 = vadd.f32 %v3288, %v3448
    %3450 = vmatprep.mubr.bf16.mxu0 %v293
    %3451 = vmatmul.mubr.bf16.gmra.mxu0 %v292
    %v3452 = vpop.f32.mrf.mxu0
    %v3453 = vadd.f32 %v3292, %v3452
    %v3454 = vpop.f32.mrf.mxu0
    %v3455 = vadd.f32 %v3294, %v3454
    %v3456 = vpop.f32.mrf.mxu0
    %v3457 = vadd.f32 %v3296, %v3456
    %v3458 = vpop.f32.mrf.mxu0
    %v3459 = vadd.f32 %v3298, %v3458
    %3460 = vmatprep.mubr.bf16.mxu0 %v301
    %3461 = vmatmul.mubr.bf16.gmra.mxu0 %v300
    %v3462 = vpop.f32.mrf.mxu0
    %v3463 = vadd.f32 %v3302, %v3462
    %v3464 = vpop.f32.mrf.mxu0
    %v3465 = vadd.f32 %v3304, %v3464
    %v3466 = vpop.f32.mrf.mxu0
    %v3467 = vadd.f32 %v3306, %v3466
    %v3468 = vpop.f32.mrf.mxu0
    %v3469 = vadd.f32 %v3308, %v3468
    %3470 = vmatprep.mubr.bf16.mxu0 %v309
    %3471 = vmatmul.mubr.bf16.gmra.mxu0 %v308
    %v3472 = vpop.f32.mrf.mxu0
    %v3473 = vadd.f32 %v3312, %v3472
    %v3474 = vpop.f32.mrf.mxu0
    %v3475 = vadd.f32 %v3314, %v3474
    %v3476 = vpop.f32.mrf.mxu0
    %v3477 = vadd.f32 %v3316, %v3476
    %v3478 = vpop.f32.mrf.mxu0
    %v3479 = vadd.f32 %v3318, %v3478
    %3480 = vmatprep.mubr.bf16.mxu0 %v317
    %3481 = vmatmul.mubr.bf16.gmra.mxu0 %v316
    %v3482 = vpop.f32.mrf.mxu0
    %v3483 = vadd.f32 %v3322, %v3482
    %v3484 = vpop.f32.mrf.mxu0
    %v3485 = vadd.f32 %v3324, %v3484
    %v3486 = vpop.f32.mrf.mxu0
    %v3487 = vadd.f32 %v3326, %v3486
    %v3488 = vpop.f32.mrf.mxu0
    %v3489 = vadd.f32 %v3328, %v3488
    %3490 = vmatprep.mubr.bf16.mxu0 %v325
    %3491 = vmatmul.mubr.bf16.gmra.mxu0 %v324
    %v3492 = vpop.f32.mrf.mxu0
    %v3493 = vadd.f32 %v3332, %v3492
    %v3494 = vpop.f32.mrf.mxu0
    %v3495 = vadd.f32 %v3334, %v3494
    %v3496 = vpop.f32.mrf.mxu0
    %v3497 = vadd.f32 %v3336, %v3496
    %v3498 = vpop.f32.mrf.mxu0
    %v3499 = vadd.f32 %v3338, %v3498
    %3500 = vmatprep.mubr.bf16.mxu0 %v333
    %3501 = vmatmul.mubr.bf16.gmra.mxu0 %v332
    %v3502 = vpop.f32.mrf.mxu0
    %v3503 = vadd.f32 %v3342, %v3502
    %v3504 = vpop.f32.mrf.mxu0
    %v3505 = vadd.f32 %v3344, %v3504
    %v3506 = vpop.f32.mrf.mxu0
    %v3507 = vadd.f32 %v3346, %v3506
    %v3508 = vpop.f32.mrf.mxu0
    %v3509 = vadd.f32 %v3348, %v3508
    %3510 = vmatprep.mubr.bf16.mxu0 %v341
    %3511 = vmatmul.mubr.bf16.gmra.mxu0 %v340
    %v3512 = vpop.f32.mrf.mxu0
    %v3513 = vadd.f32 %v3352, %v3512
    %v3514 = vpop.f32.mrf.mxu0
    %v3515 = vadd.f32 %v3354, %v3514
    %v3516 = vpop.f32.mrf.mxu0
    %v3517 = vpop.f32.mrf.mxu0
    %3518 = vdwg.mxu0
    %3519 = vmatprep.subr.bf16.mxu0 %v2030
    %3520 = vmatpush1.bf16.msra.mxu0 %v2029
    %3521 = vmatprep.subr.bf16.mxu0 %v2025
    %3522 = vmatpush1.bf16.msra.mxu0 %v2024
    %3523 = vmatprep.subr.bf16.mxu0 %v2020
    %3524 = vmatpush1.bf16.msra.mxu0 %v2019
    %3525 = vmatprep.subr.bf16.mxu0 %v2015
    %3526 = vmatpush1.bf16.msra.mxu0 %v2014
    %3527 = vmatprep.subr.bf16.mxu0 %v2010
    %3528 = vmatpush1.bf16.msra.mxu0 %v2009
    %3529 = vmatprep.subr.bf16.mxu0 %v2005
    %3530 = vmatpush1.bf16.msra.mxu0 %v2004
    %3531 = vmatprep.subr.bf16.mxu0 %v2000
    %3532 = vmatpush1.bf16.msra.mxu0 %v1999
    %3533 = vmatprep.subr.bf16.mxu0 %v1995
    %3534 = vmatpush1.bf16.msra.mxu0 %v1994
    %3535 = vmatprep.subr.bf16.mxu0 %v2070
    %3536 = vmatpush2.bf16.msra.mxu0 %v2069
    %3537 = vmatprep.subr.bf16.mxu0 %v2065
    %3538 = vmatpush2.bf16.msra.mxu0 %v2064
    %3539 = vmatprep.subr.bf16.mxu0 %v2060
    %3540 = vmatpush2.bf16.msra.mxu0 %v2059
    %3541 = vmatprep.subr.bf16.mxu0 %v2055
    %3542 = vmatpush2.bf16.msra.mxu0 %v2054
    %3543 = vmatprep.subr.bf16.mxu0 %v2050
    %3544 = vmatpush2.bf16.msra.mxu0 %v2049
    %3545 = vmatprep.subr.bf16.mxu0 %v2045
    %3546 = vmatpush2.bf16.msra.mxu0 %v2044
    %3547 = vmatprep.subr.bf16.mxu0 %v2040
    %3548 = vmatpush2.bf16.msra.mxu0 %v2039
    %3549 = vmatprep.subr.bf16.mxu0 %v2035
    %3550 = vmatpush2.bf16.msra.mxu0 %v2034
    %3551 = vmatprep.mubr.bf16.mxu0 %v247
    %3552 = vmatmul.mubr.bf16.gmra.mxu0 %v246
    %v3553 = vpop.f32.mrf.mxu0
    %v3554 = vadd.f32 %v3393, %v3553
    %v3555 = vpop.f32.mrf.mxu0
    %v3556 = vadd.f32 %v3395, %v3555
    %v3557 = vpop.f32.mrf.mxu0
    %v3558 = vadd.f32 %v3397, %v3557
    %v3559 = vpop.f32.mrf.mxu0
    %v3560 = vadd.f32 %v3399, %v3559
    %3561 = vmatprep.mubr.bf16.mxu0 %v255
    %3562 = vmatmul.mubr.bf16.gmra.mxu0 %v254
    %v3563 = vpop.f32.mrf.mxu0
    %v3564 = vadd.f32 %v3403, %v3563
    %v3565 = vpop.f32.mrf.mxu0
    %v3566 = vadd.f32 %v3405, %v3565
    %v3567 = vpop.f32.mrf.mxu0
    %v3568 = vadd.f32 %v3407, %v3567
    %v3569 = vpop.f32.mrf.mxu0
    %v3570 = vadd.f32 %v3409, %v3569
    %3571 = vmatprep.mubr.bf16.mxu0 %v263
    %3572 = vmatmul.mubr.bf16.gmra.mxu0 %v262
    %v3573 = vpop.f32.mrf.mxu0
    %v3574 = vadd.f32 %v3413, %v3573
    %v3575 = vpop.f32.mrf.mxu0
    %v3576 = vadd.f32 %v3415, %v3575
    %v3577 = vpop.f32.mrf.mxu0
    %v3578 = vadd.f32 %v3417, %v3577
    %v3579 = vpop.f32.mrf.mxu0
    %v3580 = vadd.f32 %v3419, %v3579
    %3581 = vmatprep.mubr.bf16.mxu0 %v271
    %3582 = vmatmul.mubr.bf16.gmra.mxu0 %v270
    %v3583 = vpop.f32.mrf.mxu0
    %v3584 = vadd.f32 %v3423, %v3583
    %v3585 = vpop.f32.mrf.mxu0
    %v3586 = vadd.f32 %v3425, %v3585
    %v3587 = vpop.f32.mrf.mxu0
    %v3588 = vadd.f32 %v3427, %v3587
    %v3589 = vpop.f32.mrf.mxu0
    %v3590 = vadd.f32 %v3429, %v3589
    %3591 = vmatprep.mubr.bf16.mxu0 %v279
    %3592 = vmatmul.mubr.bf16.gmra.mxu0 %v278
    %v3593 = vpop.f32.mrf.mxu0
    %v3594 = vadd.f32 %v3433, %v3593
    %v3595 = vpop.f32.mrf.mxu0
    %v3596 = vadd.f32 %v3435, %v3595
    %v3597 = vpop.f32.mrf.mxu0
    %v3598 = vadd.f32 %v3437, %v3597
    %v3599 = vpop.f32.mrf.mxu0
    %v3600 = vadd.f32 %v3439, %v3599
    %3601 = vmatprep.mubr.bf16.mxu0 %v287
    %3602 = vmatmul.mubr.bf16.gmra.mxu0 %v286
    %v3603 = vpop.f32.mrf.mxu0
    %v3604 = vadd.f32 %v3443, %v3603
    %v3605 = vpop.f32.mrf.mxu0
    %v3606 = vadd.f32 %v3445, %v3605
    %v3607 = vpop.f32.mrf.mxu0
    %v3608 = vadd.f32 %v3447, %v3607
    %v3609 = vpop.f32.mrf.mxu0
    %v3610 = vadd.f32 %v3449, %v3609
    %3611 = vmatprep.mubr.bf16.mxu0 %v295
    %3612 = vmatmul.mubr.bf16.gmra.mxu0 %v294
    %v3613 = vpop.f32.mrf.mxu0
    %v3614 = vadd.f32 %v3453, %v3613
    %v3615 = vpop.f32.mrf.mxu0
    %v3616 = vadd.f32 %v3455, %v3615
    %v3617 = vpop.f32.mrf.mxu0
    %v3618 = vadd.f32 %v3457, %v3617
    %v3619 = vpop.f32.mrf.mxu0
    %v3620 = vadd.f32 %v3459, %v3619
    %3621 = vmatprep.mubr.bf16.mxu0 %v303
    %3622 = vmatmul.mubr.bf16.gmra.mxu0 %v302
    %v3623 = vpop.f32.mrf.mxu0
    %v3624 = vadd.f32 %v3463, %v3623
    %v3625 = vpop.f32.mrf.mxu0
    %v3626 = vadd.f32 %v3465, %v3625
    %v3627 = vpop.f32.mrf.mxu0
    %v3628 = vadd.f32 %v3467, %v3627
    %v3629 = vpop.f32.mrf.mxu0
    %v3630 = vadd.f32 %v3469, %v3629
    %3631 = vmatprep.mubr.bf16.mxu0 %v311
    %3632 = vmatmul.mubr.bf16.gmra.mxu0 %v310
    %v3633 = vpop.f32.mrf.mxu0
    %v3634 = vadd.f32 %v3473, %v3633
    %v3635 = vpop.f32.mrf.mxu0
    %v3636 = vadd.f32 %v3475, %v3635
    %v3637 = vpop.f32.mrf.mxu0
    %v3638 = vadd.f32 %v3477, %v3637
    %v3639 = vpop.f32.mrf.mxu0
    %v3640 = vadd.f32 %v3479, %v3639
    %3641 = vmatprep.mubr.bf16.mxu0 %v319
    %3642 = vmatmul.mubr.bf16.gmra.mxu0 %v318
    %v3643 = vpop.f32.mrf.mxu0
    %v3644 = vadd.f32 %v3483, %v3643
    %v3645 = vpop.f32.mrf.mxu0
    %v3646 = vadd.f32 %v3485, %v3645
    %v3647 = vpop.f32.mrf.mxu0
    %v3648 = vadd.f32 %v3487, %v3647
    %v3649 = vpop.f32.mrf.mxu0
    %v3650 = vadd.f32 %v3489, %v3649
    %3651 = vmatprep.mubr.bf16.mxu0 %v327
    %3652 = vmatmul.mubr.bf16.gmra.mxu0 %v326
    %v3653 = vpop.f32.mrf.mxu0
    %v3654 = vadd.f32 %v3493, %v3653
    %v3655 = vpop.f32.mrf.mxu0
    %v3656 = vadd.f32 %v3495, %v3655
    %v3657 = vpop.f32.mrf.mxu0
    %v3658 = vadd.f32 %v3497, %v3657
    %v3659 = vpop.f32.mrf.mxu0
    %v3660 = vadd.f32 %v3499, %v3659
    %3661 = vmatprep.mubr.bf16.mxu0 %v335
    %3662 = vmatmul.mubr.bf16.gmra.mxu0 %v334
    %v3663 = vpop.f32.mrf.mxu0
    %v3664 = vadd.f32 %v3503, %v3663
    %v3665 = vpop.f32.mrf.mxu0
    %v3666 = vadd.f32 %v3505, %v3665
    %v3667 = vpop.f32.mrf.mxu0
    %v3668 = vadd.f32 %v3507, %v3667
    %v3669 = vpop.f32.mrf.mxu0
    %v3670 = vadd.f32 %v3509, %v3669
    %3671 = vmatprep.mubr.bf16.mxu0 %v343
    %3672 = vmatmul.mubr.bf16.gmra.mxu0 %v342
    %v3673 = vpop.f32.mrf.mxu0
    %v3674 = vadd.f32 %v3513, %v3673
    %v3675 = vpop.f32.mrf.mxu0
    %v3676 = vadd.f32 %v3515, %v3675
    %v3677 = vpop.f32.mrf.mxu0
    %v3678 = vpop.f32.mrf.mxu0
    %3679 = vdwg.mxu0
    %3680 = vmatprep.subr.bf16.mxu0 0
    %3681 = vmatpush1.bf16.msra.mxu0 %v1791
    %3682 = vmatprep.subr.bf16.mxu0 0
    %3683 = vmatpush1.bf16.msra.mxu0 %v1786
    %3684 = vmatprep.subr.bf16.mxu0 0
    %3685 = vmatpush1.bf16.msra.mxu0 %v1781
    %3686 = vmatprep.subr.bf16.mxu0 0
    %3687 = vmatpush1.bf16.msra.mxu0 %v1776
    %3688 = vmatprep.subr.bf16.mxu0 0
    %3689 = vmatpush1.bf16.msra.mxu0 %v1771
    %3690 = vmatprep.subr.bf16.mxu0 0
    %3691 = vmatpush1.bf16.msra.mxu0 %v1766
    %3692 = vmatprep.subr.bf16.mxu0 0
    %3693 = vmatpush1.bf16.msra.mxu0 %v1761
    %3694 = vmatprep.subr.bf16.mxu0 0
    %3695 = vmatpush1.bf16.msra.mxu0 %v1756
    %3696 = vmatprep.subr.bf16.mxu0 0
    %3697 = vmatpush2.bf16.msra.mxu0 %v1831
    %3698 = vmatprep.subr.bf16.mxu0 0
    %3699 = vmatpush2.bf16.msra.mxu0 %v1826
    %3700 = vmatprep.subr.bf16.mxu0 0
    %3701 = vmatpush2.bf16.msra.mxu0 %v1821
    %3702 = vmatprep.subr.bf16.mxu0 0
    %3703 = vmatpush2.bf16.msra.mxu0 %v1816
    %3704 = vmatprep.subr.bf16.mxu0 0
    %3705 = vmatpush2.bf16.msra.mxu0 %v1811
    %3706 = vmatprep.subr.bf16.mxu0 0
    %3707 = vmatpush2.bf16.msra.mxu0 %v1806
    %3708 = vmatprep.subr.bf16.mxu0 0
    %3709 = vmatpush2.bf16.msra.mxu0 %v1801
    %3710 = vmatprep.subr.bf16.mxu0 0
    %3711 = vmatpush2.bf16.msra.mxu0 %v1796
    %3712 = vmatprep.mubr.bf16.mxu0 %v241
    %3713 = vmatmul.mubr.bf16.gmra.mxu0 %v240
    %v3714 = vpop.f32.mrf.mxu0
    %v3715 = vadd.f32 0.0, %v3714
    %v3716 = vpop.f32.mrf.mxu0
    %v3717 = vpop.f32.mrf.mxu0
    %v3718 = vadd.f32 0.0, %v3717
    %v3719 = vpop.f32.mrf.mxu0
    %3720 = vmatprep.mubr.bf16.mxu0 %v249
    %3721 = vmatmul.mubr.bf16.gmra.mxu0 %v248
    %v3722 = vpop.f32.mrf.mxu0
    %v3723 = vadd.f32 0.0, %v3722
    %v3724 = vpop.f32.mrf.mxu0
    %v3725 = vpop.f32.mrf.mxu0
    %v3726 = vadd.f32 0.0, %v3725
    %v3727 = vpop.f32.mrf.mxu0
    %3728 = vmatprep.mubr.bf16.mxu0 %v257
    %3729 = vmatmul.mubr.bf16.gmra.mxu0 %v256
    %v3730 = vpop.f32.mrf.mxu0
    %v3731 = vadd.f32 0.0, %v3730
    %v3732 = vpop.f32.mrf.mxu0
    %v3733 = vpop.f32.mrf.mxu0
    %v3734 = vadd.f32 0.0, %v3733
    %v3735 = vpop.f32.mrf.mxu0
    %3736 = vmatprep.mubr.bf16.mxu0 %v265
    %3737 = vmatmul.mubr.bf16.gmra.mxu0 %v264
    %v3738 = vpop.f32.mrf.mxu0
    %v3739 = vadd.f32 0.0, %v3738
    %v3740 = vpop.f32.mrf.mxu0
    %v3741 = vpop.f32.mrf.mxu0
    %v3742 = vadd.f32 0.0, %v3741
    %v3743 = vpop.f32.mrf.mxu0
    %3744 = vmatprep.mubr.bf16.mxu0 %v273
    %3745 = vmatmul.mubr.bf16.gmra.mxu0 %v272
    %v3746 = vpop.f32.mrf.mxu0
    %v3747 = vadd.f32 0.0, %v3746
    %v3748 = vpop.f32.mrf.mxu0
    %v3749 = vpop.f32.mrf.mxu0
    %v3750 = vadd.f32 0.0, %v3749
    %v3751 = vpop.f32.mrf.mxu0
    %3752 = vmatprep.mubr.bf16.mxu0 %v281
    %3753 = vmatmul.mubr.bf16.gmra.mxu0 %v280
    %v3754 = vpop.f32.mrf.mxu0
    %v3755 = vadd.f32 0.0, %v3754
    %v3756 = vpop.f32.mrf.mxu0
    %v3757 = vpop.f32.mrf.mxu0
    %v3758 = vadd.f32 0.0, %v3757
    %v3759 = vpop.f32.mrf.mxu0
    %3760 = vmatprep.mubr.bf16.mxu0 %v289
    %3761 = vmatmul.mubr.bf16.gmra.mxu0 %v288
    %v3762 = vpop.f32.mrf.mxu0
    %v3763 = vadd.f32 0.0, %v3762
    %v3764 = vpop.f32.mrf.mxu0
    %v3765 = vpop.f32.mrf.mxu0
    %v3766 = vadd.f32 0.0, %v3765
    %v3767 = vpop.f32.mrf.mxu0
    %3768 = vmatprep.mubr.bf16.mxu0 %v297
    %3769 = vmatmul.mubr.bf16.gmra.mxu0 %v296
    %v3770 = vpop.f32.mrf.mxu0
    %v3771 = vadd.f32 0.0, %v3770
    %v3772 = vpop.f32.mrf.mxu0
    %v3773 = vpop.f32.mrf.mxu0
    %v3774 = vadd.f32 0.0, %v3773
    %v3775 = vpop.f32.mrf.mxu0
    %3776 = vmatprep.mubr.bf16.mxu0 %v305
    %3777 = vmatmul.mubr.bf16.gmra.mxu0 %v304
    %v3778 = vpop.f32.mrf.mxu0
    %v3779 = vadd.f32 0.0, %v3778
    %v3780 = vpop.f32.mrf.mxu0
    %v3781 = vpop.f32.mrf.mxu0
    %v3782 = vadd.f32 0.0, %v3781
    %v3783 = vpop.f32.mrf.mxu0
    %3784 = vmatprep.mubr.bf16.mxu0 %v313
    %3785 = vmatmul.mubr.bf16.gmra.mxu0 %v312
    %v3786 = vpop.f32.mrf.mxu0
    %v3787 = vadd.f32 0.0, %v3786
    %v3788 = vpop.f32.mrf.mxu0
    %v3789 = vpop.f32.mrf.mxu0
    %v3790 = vadd.f32 0.0, %v3789
    %v3791 = vpop.f32.mrf.mxu0
    %3792 = vmatprep.mubr.bf16.mxu0 %v321
    %3793 = vmatmul.mubr.bf16.gmra.mxu0 %v320
    %v3794 = vpop.f32.mrf.mxu0
    %v3795 = vadd.f32 0.0, %v3794
    %v3796 = vpop.f32.mrf.mxu0
    %v3797 = vpop.f32.mrf.mxu0
    %v3798 = vadd.f32 0.0, %v3797
    %v3799 = vpop.f32.mrf.mxu0
    %3800 = vmatprep.mubr.bf16.mxu0 %v329
    %3801 = vmatmul.mubr.bf16.gmra.mxu0 %v328
    %v3802 = vpop.f32.mrf.mxu0
    %v3803 = vadd.f32 0.0, %v3802
    %v3804 = vpop.f32.mrf.mxu0
    %v3805 = vpop.f32.mrf.mxu0
    %v3806 = vadd.f32 0.0, %v3805
    %v3807 = vpop.f32.mrf.mxu0
    %3808 = vmatprep.mubr.bf16.mxu0 %v337
    %3809 = vmatmul.mubr.bf16.gmra.mxu0 %v336
    %v3810 = vpop.f32.mrf.mxu0
    %v3811 = vadd.f32 0.0, %v3810
    %v3812 = vpop.f32.mrf.mxu0
    %v3813 = vpop.f32.mrf.mxu0
    %v3814 = vpop.f32.mrf.mxu0
    %3815 = vdwg.mxu0
    %3816 = vmatprep.subr.bf16.mxu0 0
    %3817 = vmatpush1.bf16.msra.mxu0 %v1871
    %3818 = vmatprep.subr.bf16.mxu0 0
    %3819 = vmatpush1.bf16.msra.mxu0 %v1866
    %3820 = vmatprep.subr.bf16.mxu0 0
    %3821 = vmatpush1.bf16.msra.mxu0 %v1861
    %3822 = vmatprep.subr.bf16.mxu0 0
    %3823 = vmatpush1.bf16.msra.mxu0 %v1856
    %3824 = vmatprep.subr.bf16.mxu0 0
    %3825 = vmatpush1.bf16.msra.mxu0 %v1851
    %3826 = vmatprep.subr.bf16.mxu0 0
    %3827 = vmatpush1.bf16.msra.mxu0 %v1846
    %3828 = vmatprep.subr.bf16.mxu0 0
    %3829 = vmatpush1.bf16.msra.mxu0 %v1841
    %3830 = vmatprep.subr.bf16.mxu0 0
    %3831 = vmatpush1.bf16.msra.mxu0 %v1836
    %3832 = vmatprep.subr.bf16.mxu0 0
    %3833 = vmatpush2.bf16.msra.mxu0 %v1911
    %3834 = vmatprep.subr.bf16.mxu0 0
    %3835 = vmatpush2.bf16.msra.mxu0 %v1906
    %3836 = vmatprep.subr.bf16.mxu0 0
    %3837 = vmatpush2.bf16.msra.mxu0 %v1901
    %3838 = vmatprep.subr.bf16.mxu0 0
    %3839 = vmatpush2.bf16.msra.mxu0 %v1896
    %3840 = vmatprep.subr.bf16.mxu0 0
    %3841 = vmatpush2.bf16.msra.mxu0 %v1891
    %3842 = vmatprep.subr.bf16.mxu0 0
    %3843 = vmatpush2.bf16.msra.mxu0 %v1886
    %3844 = vmatprep.subr.bf16.mxu0 0
    %3845 = vmatpush2.bf16.msra.mxu0 %v1881
    %3846 = vmatprep.subr.bf16.mxu0 0
    %3847 = vmatpush2.bf16.msra.mxu0 %v1876
    %3848 = vmatprep.mubr.bf16.mxu0 %v243
    %3849 = vmatmul.mubr.bf16.gmra.mxu0 %v242
    %v3850 = vpop.f32.mrf.mxu0
    %v3851 = vadd.f32 %v3715, %v3850
    %v3852 = vpop.f32.mrf.mxu0
    %v3853 = vpop.f32.mrf.mxu0
    %v3854 = vadd.f32 %v3718, %v3853
    %v3855 = vpop.f32.mrf.mxu0
    %3856 = vmatprep.mubr.bf16.mxu0 %v251
    %3857 = vmatmul.mubr.bf16.gmra.mxu0 %v250
    %v3858 = vpop.f32.mrf.mxu0
    %v3859 = vadd.f32 %v3723, %v3858
    %v3860 = vpop.f32.mrf.mxu0
    %v3861 = vpop.f32.mrf.mxu0
    %v3862 = vadd.f32 %v3726, %v3861
    %v3863 = vpop.f32.mrf.mxu0
    %3864 = vmatprep.mubr.bf16.mxu0 %v259
    %3865 = vmatmul.mubr.bf16.gmra.mxu0 %v258
    %v3866 = vpop.f32.mrf.mxu0
    %v3867 = vadd.f32 %v3731, %v3866
    %v3868 = vpop.f32.mrf.mxu0
    %v3869 = vpop.f32.mrf.mxu0
    %v3870 = vadd.f32 %v3734, %v3869
    %v3871 = vpop.f32.mrf.mxu0
    %3872 = vmatprep.mubr.bf16.mxu0 %v267
    %3873 = vmatmul.mubr.bf16.gmra.mxu0 %v266
    %v3874 = vpop.f32.mrf.mxu0
    %v3875 = vadd.f32 %v3739, %v3874
    %v3876 = vpop.f32.mrf.mxu0
    %v3877 = vpop.f32.mrf.mxu0
    %v3878 = vadd.f32 %v3742, %v3877
    %v3879 = vpop.f32.mrf.mxu0
    %3880 = vmatprep.mubr.bf16.mxu0 %v275
    %3881 = vmatmul.mubr.bf16.gmra.mxu0 %v274
    %v3882 = vpop.f32.mrf.mxu0
    %v3883 = vadd.f32 %v3747, %v3882
    %v3884 = vpop.f32.mrf.mxu0
    %v3885 = vpop.f32.mrf.mxu0
    %v3886 = vadd.f32 %v3750, %v3885
    %v3887 = vpop.f32.mrf.mxu0
    %3888 = vmatprep.mubr.bf16.mxu0 %v283
    %3889 = vmatmul.mubr.bf16.gmra.mxu0 %v282
    %v3890 = vpop.f32.mrf.mxu0
    %v3891 = vadd.f32 %v3755, %v3890
    %v3892 = vpop.f32.mrf.mxu0
    %v3893 = vpop.f32.mrf.mxu0
    %v3894 = vadd.f32 %v3758, %v3893
    %v3895 = vpop.f32.mrf.mxu0
    %3896 = vmatprep.mubr.bf16.mxu0 %v291
    %3897 = vmatmul.mubr.bf16.gmra.mxu0 %v290
    %v3898 = vpop.f32.mrf.mxu0
    %v3899 = vadd.f32 %v3763, %v3898
    %v3900 = vpop.f32.mrf.mxu0
    %v3901 = vpop.f32.mrf.mxu0
    %v3902 = vadd.f32 %v3766, %v3901
    %v3903 = vpop.f32.mrf.mxu0
    %3904 = vmatprep.mubr.bf16.mxu0 %v299
    %3905 = vmatmul.mubr.bf16.gmra.mxu0 %v298
    %v3906 = vpop.f32.mrf.mxu0
    %v3907 = vadd.f32 %v3771, %v3906
    %v3908 = vpop.f32.mrf.mxu0
    %v3909 = vpop.f32.mrf.mxu0
    %v3910 = vadd.f32 %v3774, %v3909
    %v3911 = vpop.f32.mrf.mxu0
    %3912 = vmatprep.mubr.bf16.mxu0 %v307
    %3913 = vmatmul.mubr.bf16.gmra.mxu0 %v306
    %v3914 = vpop.f32.mrf.mxu0
    %v3915 = vadd.f32 %v3779, %v3914
    %v3916 = vpop.f32.mrf.mxu0
    %v3917 = vpop.f32.mrf.mxu0
    %v3918 = vadd.f32 %v3782, %v3917
    %v3919 = vpop.f32.mrf.mxu0
    %3920 = vmatprep.mubr.bf16.mxu0 %v315
    %3921 = vmatmul.mubr.bf16.gmra.mxu0 %v314
    %v3922 = vpop.f32.mrf.mxu0
    %v3923 = vadd.f32 %v3787, %v3922
    %v3924 = vpop.f32.mrf.mxu0
    %v3925 = vpop.f32.mrf.mxu0
    %v3926 = vadd.f32 %v3790, %v3925
    %v3927 = vpop.f32.mrf.mxu0
    %3928 = vmatprep.mubr.bf16.mxu0 %v323
    %3929 = vmatmul.mubr.bf16.gmra.mxu0 %v322
    %v3930 = vpop.f32.mrf.mxu0
    %v3931 = vadd.f32 %v3795, %v3930
    %v3932 = vpop.f32.mrf.mxu0
    %v3933 = vpop.f32.mrf.mxu0
    %v3934 = vadd.f32 %v3798, %v3933
    %v3935 = vpop.f32.mrf.mxu0
    %3936 = vmatprep.mubr.bf16.mxu0 %v331
    %3937 = vmatmul.mubr.bf16.gmra.mxu0 %v330
    %v3938 = vpop.f32.mrf.mxu0
    %v3939 = vadd.f32 %v3803, %v3938
    %v3940 = vpop.f32.mrf.mxu0
    %v3941 = vpop.f32.mrf.mxu0
    %v3942 = vadd.f32 %v3806, %v3941
    %v3943 = vpop.f32.mrf.mxu0
    %3944 = vmatprep.mubr.bf16.mxu0 %v339
    %3945 = vmatmul.mubr.bf16.gmra.mxu0 %v338
    %v3946 = vpop.f32.mrf.mxu0
    %v3947 = vadd.f32 %v3811, %v3946
    %v3948 = vpop.f32.mrf.mxu0
    %v3949 = vpop.f32.mrf.mxu0
    %v3950 = vpop.f32.mrf.mxu0
    %3951 = vdwg.mxu0
    %3952 = vmatprep.subr.bf16.mxu0 0
    %3953 = vmatpush1.bf16.msra.mxu0 %v1951
    %3954 = vmatprep.subr.bf16.mxu0 0
    %3955 = vmatpush1.bf16.msra.mxu0 %v1946
    %3956 = vmatprep.subr.bf16.mxu0 0
    %3957 = vmatpush1.bf16.msra.mxu0 %v1941
    %3958 = vmatprep.subr.bf16.mxu0 0
    %3959 = vmatpush1.bf16.msra.mxu0 %v1936
    %3960 = vmatprep.subr.bf16.mxu0 0
    %3961 = vmatpush1.bf16.msra.mxu0 %v1931
    %3962 = vmatprep.subr.bf16.mxu0 0
    %3963 = vmatpush1.bf16.msra.mxu0 %v1926
    %3964 = vmatprep.subr.bf16.mxu0 0
    %3965 = vmatpush1.bf16.msra.mxu0 %v1921
    %3966 = vmatprep.subr.bf16.mxu0 0
    %3967 = vmatpush1.bf16.msra.mxu0 %v1916
    %3968 = vmatprep.subr.bf16.mxu0 0
    %3969 = vmatpush2.bf16.msra.mxu0 %v1991
    %3970 = vmatprep.subr.bf16.mxu0 0
    %3971 = vmatpush2.bf16.msra.mxu0 %v1986
    %3972 = vmatprep.subr.bf16.mxu0 0
    %3973 = vmatpush2.bf16.msra.mxu0 %v1981
    %3974 = vmatprep.subr.bf16.mxu0 0
    %3975 = vmatpush2.bf16.msra.mxu0 %v1976
    %3976 = vmatprep.subr.bf16.mxu0 0
    %3977 = vmatpush2.bf16.msra.mxu0 %v1971
    %3978 = vmatprep.subr.bf16.mxu0 0
    %3979 = vmatpush2.bf16.msra.mxu0 %v1966
    %3980 = vmatprep.subr.bf16.mxu0 0
    %3981 = vmatpush2.bf16.msra.mxu0 %v1961
    %3982 = vmatprep.subr.bf16.mxu0 0
    %3983 = vmatpush2.bf16.msra.mxu0 %v1956
    %3984 = vmatprep.mubr.bf16.mxu0 %v245
    %3985 = vmatmul.mubr.bf16.gmra.mxu0 %v244
    %v3986 = vpop.f32.mrf.mxu0
    %v3987 = vadd.f32 %v3851, %v3986
    %v3988 = vpop.f32.mrf.mxu0
    %v3989 = vpop.f32.mrf.mxu0
    %v3990 = vadd.f32 %v3854, %v3989
    %v3991 = vpop.f32.mrf.mxu0
    %3992 = vmatprep.mubr.bf16.mxu0 %v253
    %3993 = vmatmul.mubr.bf16.gmra.mxu0 %v252
    %v3994 = vpop.f32.mrf.mxu0
    %v3995 = vadd.f32 %v3859, %v3994
    %v3996 = vpop.f32.mrf.mxu0
    %v3997 = vpop.f32.mrf.mxu0
    %v3998 = vadd.f32 %v3862, %v3997
    %v3999 = vpop.f32.mrf.mxu0
    %4000 = vmatprep.mubr.bf16.mxu0 %v261
    %4001 = vmatmul.mubr.bf16.gmra.mxu0 %v260
    %v4002 = vpop.f32.mrf.mxu0
    %v4003 = vadd.f32 %v3867, %v4002
    %v4004 = vpop.f32.mrf.mxu0
    %v4005 = vpop.f32.mrf.mxu0
    %v4006 = vadd.f32 %v3870, %v4005
    %v4007 = vpop.f32.mrf.mxu0
    %4008 = vmatprep.mubr.bf16.mxu0 %v269
    %4009 = vmatmul.mubr.bf16.gmra.mxu0 %v268
    %v4010 = vpop.f32.mrf.mxu0
    %v4011 = vadd.f32 %v3875, %v4010
    %v4012 = vpop.f32.mrf.mxu0
    %v4013 = vpop.f32.mrf.mxu0
    %v4014 = vadd.f32 %v3878, %v4013
    %v4015 = vpop.f32.mrf.mxu0
    %4016 = vmatprep.mubr.bf16.mxu0 %v277
    %4017 = vmatmul.mubr.bf16.gmra.mxu0 %v276
    %v4018 = vpop.f32.mrf.mxu0
    %v4019 = vadd.f32 %v3883, %v4018
    %v4020 = vpop.f32.mrf.mxu0
    %v4021 = vpop.f32.mrf.mxu0
    %v4022 = vadd.f32 %v3886, %v4021
    %v4023 = vpop.f32.mrf.mxu0
    %4024 = vmatprep.mubr.bf16.mxu0 %v285
    %4025 = vmatmul.mubr.bf16.gmra.mxu0 %v284
    %v4026 = vpop.f32.mrf.mxu0
    %v4027 = vadd.f32 %v3891, %v4026
    %v4028 = vpop.f32.mrf.mxu0
    %v4029 = vpop.f32.mrf.mxu0
    %v4030 = vadd.f32 %v3894, %v4029
    %v4031 = vpop.f32.mrf.mxu0
    %4032 = vmatprep.mubr.bf16.mxu0 %v293
    %4033 = vmatmul.mubr.bf16.gmra.mxu0 %v292
    %v4034 = vpop.f32.mrf.mxu0
    %v4035 = vadd.f32 %v3899, %v4034
    %v4036 = vpop.f32.mrf.mxu0
    %v4037 = vpop.f32.mrf.mxu0
    %v4038 = vadd.f32 %v3902, %v4037
    %v4039 = vpop.f32.mrf.mxu0
    %4040 = vmatprep.mubr.bf16.mxu0 %v301
    %4041 = vmatmul.mubr.bf16.gmra.mxu0 %v300
    %v4042 = vpop.f32.mrf.mxu0
    %v4043 = vadd.f32 %v3907, %v4042
    %v4044 = vpop.f32.mrf.mxu0
    %v4045 = vpop.f32.mrf.mxu0
    %v4046 = vadd.f32 %v3910, %v4045
    %v4047 = vpop.f32.mrf.mxu0
    %4048 = vmatprep.mubr.bf16.mxu0 %v309
    %4049 = vmatmul.mubr.bf16.gmra.mxu0 %v308
    %v4050 = vpop.f32.mrf.mxu0
    %v4051 = vadd.f32 %v3915, %v4050
    %v4052 = vpop.f32.mrf.mxu0
    %v4053 = vpop.f32.mrf.mxu0
    %v4054 = vadd.f32 %v3918, %v4053
    %v4055 = vpop.f32.mrf.mxu0
    %4056 = vmatprep.mubr.bf16.mxu0 %v317
    %4057 = vmatmul.mubr.bf16.gmra.mxu0 %v316
    %v4058 = vpop.f32.mrf.mxu0
    %v4059 = vadd.f32 %v3923, %v4058
    %v4060 = vpop.f32.mrf.mxu0
    %v4061 = vpop.f32.mrf.mxu0
    %v4062 = vadd.f32 %v3926, %v4061
    %v4063 = vpop.f32.mrf.mxu0
    %4064 = vmatprep.mubr.bf16.mxu0 %v325
    %4065 = vmatmul.mubr.bf16.gmra.mxu0 %v324
    %v4066 = vpop.f32.mrf.mxu0
    %v4067 = vadd.f32 %v3931, %v4066
    %v4068 = vpop.f32.mrf.mxu0
    %v4069 = vpop.f32.mrf.mxu0
    %v4070 = vadd.f32 %v3934, %v4069
    %v4071 = vpop.f32.mrf.mxu0
    %4072 = vmatprep.mubr.bf16.mxu0 %v333
    %4073 = vmatmul.mubr.bf16.gmra.mxu0 %v332
    %v4074 = vpop.f32.mrf.mxu0
    %v4075 = vadd.f32 %v3939, %v4074
    %v4076 = vpop.f32.mrf.mxu0
    %v4077 = vpop.f32.mrf.mxu0
    %v4078 = vadd.f32 %v3942, %v4077
    %v4079 = vpop.f32.mrf.mxu0
    %4080 = vmatprep.mubr.bf16.mxu0 %v341
    %4081 = vmatmul.mubr.bf16.gmra.mxu0 %v340
    %v4082 = vpop.f32.mrf.mxu0
    %v4083 = vadd.f32 %v3947, %v4082
    %v4084 = vpop.f32.mrf.mxu0
    %v4085 = vpop.f32.mrf.mxu0
    %v4086 = vpop.f32.mrf.mxu0
    %4087 = vdwg.mxu0
    %4088 = vmatprep.subr.bf16.mxu0 0
    %4089 = vmatpush1.bf16.msra.mxu0 %v2031
    %4090 = vmatprep.subr.bf16.mxu0 0
    %4091 = vmatpush1.bf16.msra.mxu0 %v2026
    %4092 = vmatprep.subr.bf16.mxu0 0
    %4093 = vmatpush1.bf16.msra.mxu0 %v2021
    %4094 = vmatprep.subr.bf16.mxu0 0
    %4095 = vmatpush1.bf16.msra.mxu0 %v2016
    %4096 = vmatprep.subr.bf16.mxu0 0
    %4097 = vmatpush1.bf16.msra.mxu0 %v2011
    %4098 = vmatprep.subr.bf16.mxu0 0
    %4099 = vmatpush1.bf16.msra.mxu0 %v2006
    %4100 = vmatprep.subr.bf16.mxu0 0
    %4101 = vmatpush1.bf16.msra.mxu0 %v2001
    %4102 = vmatprep.subr.bf16.mxu0 0
    %4103 = vmatpush1.bf16.msra.mxu0 %v1996
    %4104 = vmatprep.subr.bf16.mxu0 0
    %4105 = vmatpush2.bf16.msra.mxu0 %v2071
    %4106 = vmatprep.subr.bf16.mxu0 0
    %4107 = vmatpush2.bf16.msra.mxu0 %v2066
    %4108 = vmatprep.subr.bf16.mxu0 0
    %4109 = vmatpush2.bf16.msra.mxu0 %v2061
    %4110 = vmatprep.subr.bf16.mxu0 0
    %4111 = vmatpush2.bf16.msra.mxu0 %v2056
    %4112 = vmatprep.subr.bf16.mxu0 0
    %4113 = vmatpush2.bf16.msra.mxu0 %v2051
    %4114 = vmatprep.subr.bf16.mxu0 0
    %4115 = vmatpush2.bf16.msra.mxu0 %v2046
    %4116 = vmatprep.subr.bf16.mxu0 0
    %4117 = vmatpush2.bf16.msra.mxu0 %v2041
    %4118 = vmatprep.subr.bf16.mxu0 0
    %4119 = vmatpush2.bf16.msra.mxu0 %v2036
    %4120 = vmatprep.mubr.bf16.mxu0 %v247
    %4121 = vmatmul.mubr.bf16.gmra.mxu0 %v246
    %v4122 = vpop.f32.mrf.mxu0
    %v4123 = vadd.f32 %v3987, %v4122
    %v4124 = vpop.f32.mrf.mxu0
    %v4125 = vpop.f32.mrf.mxu0
    %v4126 = vadd.f32 %v3990, %v4125
    %v4127 = vpop.f32.mrf.mxu0
    %4128 = vmatprep.mubr.bf16.mxu0 %v255
    %4129 = vmatmul.mubr.bf16.gmra.mxu0 %v254
    %v4130 = vpop.f32.mrf.mxu0
    %v4131 = vadd.f32 %v3995, %v4130
    %v4132 = vpop.f32.mrf.mxu0
    %v4133 = vpop.f32.mrf.mxu0
    %v4134 = vadd.f32 %v3998, %v4133
    %v4135 = vpop.f32.mrf.mxu0
    %4136 = vmatprep.mubr.bf16.mxu0 %v263
    %4137 = vmatmul.mubr.bf16.gmra.mxu0 %v262
    %v4138 = vpop.f32.mrf.mxu0
    %v4139 = vadd.f32 %v4003, %v4138
    %v4140 = vpop.f32.mrf.mxu0
    %v4141 = vpop.f32.mrf.mxu0
    %v4142 = vadd.f32 %v4006, %v4141
    %v4143 = vpop.f32.mrf.mxu0
    %4144 = vmatprep.mubr.bf16.mxu0 %v271
    %4145 = vmatmul.mubr.bf16.gmra.mxu0 %v270
    %v4146 = vpop.f32.mrf.mxu0
    %v4147 = vadd.f32 %v4011, %v4146
    %v4148 = vpop.f32.mrf.mxu0
    %v4149 = vpop.f32.mrf.mxu0
    %v4150 = vadd.f32 %v4014, %v4149
    %v4151 = vpop.f32.mrf.mxu0
    %4152 = vmatprep.mubr.bf16.mxu0 %v279
    %4153 = vmatmul.mubr.bf16.gmra.mxu0 %v278
    %v4154 = vpop.f32.mrf.mxu0
    %v4155 = vadd.f32 %v4019, %v4154
    %v4156 = vpop.f32.mrf.mxu0
    %v4157 = vpop.f32.mrf.mxu0
    %v4158 = vadd.f32 %v4022, %v4157
    %v4159 = vpop.f32.mrf.mxu0
    %4160 = vmatprep.mubr.bf16.mxu0 %v287
    %4161 = vmatmul.mubr.bf16.gmra.mxu0 %v286
    %v4162 = vpop.f32.mrf.mxu0
    %v4163 = vadd.f32 %v4027, %v4162
    %v4164 = vpop.f32.mrf.mxu0
    %v4165 = vpop.f32.mrf.mxu0
    %v4166 = vadd.f32 %v4030, %v4165
    %v4167 = vpop.f32.mrf.mxu0
    %4168 = vmatprep.mubr.bf16.mxu0 %v295
    %4169 = vmatmul.mubr.bf16.gmra.mxu0 %v294
    %v4170 = vpop.f32.mrf.mxu0
    %v4171 = vadd.f32 %v4035, %v4170
    %v4172 = vpop.f32.mrf.mxu0
    %v4173 = vpop.f32.mrf.mxu0
    %v4174 = vadd.f32 %v4038, %v4173
    %v4175 = vpop.f32.mrf.mxu0
    %4176 = vmatprep.mubr.bf16.mxu0 %v303
    %4177 = vmatmul.mubr.bf16.gmra.mxu0 %v302
    %v4178 = vpop.f32.mrf.mxu0
    %v4179 = vadd.f32 %v4043, %v4178
    %v4180 = vpop.f32.mrf.mxu0
    %v4181 = vpop.f32.mrf.mxu0
    %v4182 = vadd.f32 %v4046, %v4181
    %v4183 = vpop.f32.mrf.mxu0
    %4184 = vmatprep.mubr.bf16.mxu0 %v311
    %4185 = vmatmul.mubr.bf16.gmra.mxu0 %v310
    %v4186 = vpop.f32.mrf.mxu0
    %v4187 = vadd.f32 %v4051, %v4186
    %v4188 = vpop.f32.mrf.mxu0
    %v4189 = vpop.f32.mrf.mxu0
    %v4190 = vadd.f32 %v4054, %v4189
    %v4191 = vpop.f32.mrf.mxu0
    %4192 = vmatprep.mubr.bf16.mxu0 %v319
    %4193 = vmatmul.mubr.bf16.gmra.mxu0 %v318
    %v4194 = vpop.f32.mrf.mxu0
    %v4195 = vadd.f32 %v4059, %v4194
    %v4196 = vpop.f32.mrf.mxu0
    %v4197 = vpop.f32.mrf.mxu0
    %v4198 = vadd.f32 %v4062, %v4197
    %v4199 = vpop.f32.mrf.mxu0
    %4200 = vmatprep.mubr.bf16.mxu0 %v327
    %4201 = vmatmul.mubr.bf16.gmra.mxu0 %v326
    %v4202 = vpop.f32.mrf.mxu0
    %v4203 = vadd.f32 %v4067, %v4202
    %v4204 = vpop.f32.mrf.mxu0
    %v4205 = vpop.f32.mrf.mxu0
    %v4206 = vadd.f32 %v4070, %v4205
    %v4207 = vpop.f32.mrf.mxu0
    %4208 = vmatprep.mubr.bf16.mxu0 %v335
    %4209 = vmatmul.mubr.bf16.gmra.mxu0 %v334
    %v4210 = vpop.f32.mrf.mxu0
    %v4211 = vadd.f32 %v4075, %v4210
    %v4212 = vpop.f32.mrf.mxu0
    %v4213 = vpop.f32.mrf.mxu0
    %v4214 = vadd.f32 %v4078, %v4213
    %v4215 = vpop.f32.mrf.mxu0
    %4216 = vmatprep.mubr.bf16.mxu0 %v343
    %4217 = vmatmul.mubr.bf16.gmra.mxu0 %v342
    %v4218 = vpop.f32.mrf.mxu0
    %v4219 = vadd.f32 %v4083, %v4218
    %v4220 = vpop.f32.mrf.mxu0
    %v4221 = vpop.f32.mrf.mxu0
    %v4222 = vpop.f32.mrf.mxu0
    %4223 = vdwg.mxu0
    %4224 = vst [vmem:[#allocation2] sm:$0xff] 0.0
    %4225 = vst [vmem:[#allocation2 + $0x8] sm:$0xff] 0.0
    %4226 = vst [vmem:[#allocation2 + $0x10] sm:$0xff] 0.0
    %4227 = vst [vmem:[#allocation2 + $0x18] sm:$0xff] 0.0
    %4228 = vst [vmem:[#allocation2 + $0x20] sm:$0xff] 0.0
    %4229 = vst [vmem:[#allocation2 + $0x28] sm:$0xff] 0.0
    %4230 = vst [vmem:[#allocation2 + $0x30] sm:$0xff] 0.0
    %4231 = vst [vmem:[#allocation2 + $0x38] sm:$0xff] 0.0
    %4232 = vst [vmem:[#allocation2 + $0x40] sm:$0xff] 0.0
    %4233 = vst [vmem:[#allocation2 + $0x48] sm:$0xff] 0.0
    %4234 = vst [vmem:[#allocation2 + $0x50] sm:$0xff] 0.0
    %4235 = vst [vmem:[#allocation2 + $0x58] sm:$0xff] 0.0
    %4236 = vst [vmem:[#allocation2 + $0x60] sm:$0xff] 0.0
    %4237 = vst [vmem:[#allocation2 + $0x68] sm:$0xff] 0.0
    %4238 = vst [vmem:[#allocation2 + $0x70] sm:$0xff] 0.0
    %4239 = vst [vmem:[#allocation2 + $0x78] sm:$0xff] 0.0
    %4240 = vst [vmem:[#allocation2 + $0x80] sm:$0xff] 0.0
    %4241 = vst [vmem:[#allocation2 + $0x88] sm:$0xff] 0.0
    %4242 = vst [vmem:[#allocation2 + $0x90] sm:$0xff] 0.0
    %4243 = vst [vmem:[#allocation2 + $0x98] sm:$0xff] 0.0
    %4244 = vst [vmem:[#allocation2 + $0xa0] sm:$0xff] 0.0
    %4245 = vst [vmem:[#allocation2 + $0xa8] sm:$0xff] 0.0
    %4246 = vst [vmem:[#allocation2 + $0xb0] sm:$0xff] 0.0
    %4247 = vst [vmem:[#allocation2 + $0xb8] sm:$0xff] 0.0
    %4248 = vst [vmem:[#allocation2 + $0xc0] sm:$0xff] 0.0
    %4249 = vst [vmem:[#allocation2 + $0xc8] sm:$0xff] 0.0
    %4250 = vst [vmem:[#allocation2 + $0xd0] sm:$0xff] 0.0
    %4251 = vst [vmem:[#allocation2 + $0xd8] sm:$0xff] 0.0
    %4252 = vst [vmem:[#allocation2 + $0xe0] sm:$0xff] 0.0
    %4253 = vst [vmem:[#allocation2 + $0xe8] sm:$0xff] 0.0
    %4254 = vst [vmem:[#allocation2 + $0xf0] sm:$0xff] 0.0
    %4255 = vst [vmem:[#allocation2 + $0xf8] sm:$0xff] 0.0
    %4256 = vst [vmem:[#allocation2 + $0x100] sm:$0xff] 0.0
    %4257 = vst [vmem:[#allocation2 + $0x108] sm:$0xff] 0.0
    %4258 = vst [vmem:[#allocation2 + $0x110] sm:$0xff] 0.0
    %4259 = vst [vmem:[#allocation2 + $0x118] sm:$0xff] 0.0
    %4260 = vst [vmem:[#allocation2 + $0x120] sm:$0xff] 0.0
    %4261 = vst [vmem:[#allocation2 + $0x128] sm:$0xff] 0.0
    %4262 = vst [vmem:[#allocation2 + $0x130] sm:$0xff] 0.0
    %4263 = vst [vmem:[#allocation2 + $0x138] sm:$0xff] 0.0
    %4264 = vst [vmem:[#allocation2 + $0x140] sm:$0xff] 0.0
    %4265 = vst [vmem:[#allocation2 + $0x148] sm:$0xff] 0.0
    %4266 = vst [vmem:[#allocation2 + $0x150] sm:$0xff] 0.0
    %4267 = vst [vmem:[#allocation2 + $0x158] sm:$0xff] 0.0
    %4268 = vst [vmem:[#allocation2 + $0x160] sm:$0xff] 0.0
    %4269 = vst [vmem:[#allocation2 + $0x168] sm:$0xff] 0.0
    %4270 = vst [vmem:[#allocation2 + $0x170] sm:$0xff] 0.0
    %4271 = vst [vmem:[#allocation2 + $0x178] sm:$0xff] 0.0
    %4272 = vst [vmem:[#allocation2 + $0x180] sm:$0xff] 0.0
    %4273 = vst [vmem:[#allocation2 + $0x188] sm:$0xff] 0.0
    %4274 = vst [vmem:[#allocation2 + $0x190] sm:$0xff] 0.0
    %4275 = vst [vmem:[#allocation2 + $0x198] sm:$0xff] 0.0
    %4276 = vst [vmem:[#allocation2 + $0x1a0] sm:$0xff] 0.0
    %4277 = vst [vmem:[#allocation2 + $0x1a8] sm:$0xff] 0.0
    %4278 = vst [vmem:[#allocation2 + $0x1b0] sm:$0xff] 0.0
    %4279 = vst [vmem:[#allocation2 + $0x1b8] sm:$0xff] 0.0
    %4280 = vst [vmem:[#allocation2 + $0x1c0] sm:$0xff] 0.0
    %4281 = vst [vmem:[#allocation2 + $0x1c8] sm:$0xff] 0.0
    %4282 = vst [vmem:[#allocation2 + $0x1d0] sm:$0xff] 0.0
    %4283 = vst [vmem:[#allocation2 + $0x1d8] sm:$0xff] 0.0
    %4284 = vst [vmem:[#allocation2 + $0x1e0] sm:$0xff] 0.0
    %4285 = vst [vmem:[#allocation2 + $0x1e8] sm:$0xff] 0.0
    %4286 = vst [vmem:[#allocation2 + $0x1f0] sm:$0xff] 0.0
    %4287 = vst [vmem:[#allocation2 + $0x1f8] sm:$0xff] 0.0
    %4288 = vst [vmem:[#allocation2 + $0x200] sm:$0xff] 0.0
    %4289 = vst [vmem:[#allocation2 + $0x208] sm:$0xff] 0.0
    %4290 = vst [vmem:[#allocation2 + $0x210] sm:$0xff] 0.0
    %4291 = vst [vmem:[#allocation2 + $0x218] sm:$0xff] 0.0
    %4292 = vst [vmem:[#allocation2 + $0x220] sm:$0xff] 0.0
    %4293 = vst [vmem:[#allocation2 + $0x228] sm:$0xff] 0.0
    %4294 = vst [vmem:[#allocation2 + $0x230] sm:$0xf] 0.0
    %4295 = vst [vmem:[#allocation2 + $0x238] sm:$0xf] 0.0
    %4296 = vst [vmem:[#allocation2 + $0x240] sm:$0xf] 0.0
    %4297 = vst [vmem:[#allocation2 + $0x248] sm:$0xf] 0.0
    %4298 = vst [vmem:[#allocation2 + $0x250] sm:$0xf] 0.0
    %4299 = vst [vmem:[#allocation2 + $0x258] sm:$0xff] 0.0
    %4300 = vst [vmem:[#allocation2 + $0x260] sm:$0xff] 0.0
    %4301 = vst [vmem:[#allocation2 + $0x268] sm:$0xff] 0.0
    %4302 = vst [vmem:[#allocation2 + $0x270] sm:$0xff] 0.0
    %4303 = vst [vmem:[#allocation2 + $0x278] sm:$0xff] 0.0
    %4304 = vst [vmem:[#allocation2 + $0x280] sm:$0xff] 0.0
    %4305 = vst [vmem:[#allocation2 + $0x288] sm:$0xff] 0.0
    %4306 = vst [vmem:[#allocation2 + $0x290] sm:$0xff] 0.0
    %4307 = vst [vmem:[#allocation2 + $0x298] sm:$0xff] 0.0
    %4308 = vst [vmem:[#allocation2 + $0x2a0] sm:$0xff] 0.0
    %4309 = vst [vmem:[#allocation2 + $0x2a8] sm:$0xff] 0.0
    %4310 = vst [vmem:[#allocation2 + $0x2b0] sm:$0xff] 0.0
    %4311 = vst [vmem:[#allocation2 + $0x2b8] sm:$0xff] 0.0
    %4312 = vst [vmem:[#allocation2 + $0x2c0] sm:$0xff] 0.0
    %4313 = vst [vmem:[#allocation2 + $0x2c8] sm:$0xff] 0.0
    %4314 = vst [vmem:[#allocation2 + $0x2d0] sm:$0xff] 0.0
    %4315 = vst [vmem:[#allocation2 + $0x2d8] sm:$0xff] 0.0
    %4316 = vst [vmem:[#allocation2 + $0x2e0] sm:$0xff] 0.0
    %4317 = vst [vmem:[#allocation2 + $0x2e8] sm:$0xff] 0.0
    %4318 = vst [vmem:[#allocation2 + $0x2f0] sm:$0xff] 0.0
    %4319 = vst [vmem:[#allocation2 + $0x2f8] sm:$0xff] 0.0
    %4320 = vst [vmem:[#allocation2 + $0x300] sm:$0xff] 0.0
    %4321 = vst [vmem:[#allocation2 + $0x308] sm:$0xff] 0.0
    %4322 = vst [vmem:[#allocation2 + $0x310] sm:$0xff] 0.0
    %4323 = vst [vmem:[#allocation2 + $0x318] sm:$0xff] 0.0
    %4324 = vst [vmem:[#allocation2 + $0x320] sm:$0xff] 0.0
    %4325 = vst [vmem:[#allocation2 + $0x328] sm:$0xff] 0.0
    %4326 = vst [vmem:[#allocation2 + $0x330] sm:$0xff] 0.0
    %4327 = vst [vmem:[#allocation2 + $0x338] sm:$0xff] 0.0
    %4328 = vst [vmem:[#allocation2 + $0x340] sm:$0xff] 0.0
    %4329 = vst [vmem:[#allocation2 + $0x348] sm:$0xff] 0.0
    %4330 = vst [vmem:[#allocation2 + $0x350] sm:$0xff] 0.0
    %4331 = vst [vmem:[#allocation2 + $0x358] sm:$0xff] 0.0
    %4332 = vst [vmem:[#allocation2 + $0x360] sm:$0xff] 0.0
    %4333 = vst [vmem:[#allocation2 + $0x368] sm:$0xff] 0.0
    %4334 = vst [vmem:[#allocation2 + $0x370] sm:$0xff] 0.0
    %4335 = vst [vmem:[#allocation2 + $0x378] sm:$0xff] 0.0
    %4336 = vst [vmem:[#allocation2 + $0x380] sm:$0xff] 0.0
    %4337 = vst [vmem:[#allocation2 + $0x388] sm:$0xff] 0.0
    %4338 = vst [vmem:[#allocation2 + $0x390] sm:$0xff] 0.0
    %4339 = vst [vmem:[#allocation2 + $0x398] sm:$0xff] 0.0
    %4340 = vst [vmem:[#allocation2 + $0x3a0] sm:$0xff] 0.0
    %4341 = vst [vmem:[#allocation2 + $0x3a8] sm:$0xff] 0.0
    %4342 = vst [vmem:[#allocation2 + $0x3b0] sm:$0xff] 0.0
    %4343 = vst [vmem:[#allocation2 + $0x3b8] sm:$0xff] 0.0
    %4344 = vst [vmem:[#allocation2 + $0x3c0] sm:$0xff] 0.0
    %4345 = vst [vmem:[#allocation2 + $0x3c8] sm:$0xff] 0.0
    %4346 = vst [vmem:[#allocation2 + $0x3d0] sm:$0xff] 0.0
    %4347 = vst [vmem:[#allocation2 + $0x3d8] sm:$0xff] 0.0
    %4348 = vst [vmem:[#allocation2 + $0x3e0] sm:$0xff] 0.0
    %4349 = vst [vmem:[#allocation2 + $0x3e8] sm:$0xff] 0.0
    %4350 = vst [vmem:[#allocation2 + $0x3f0] sm:$0xff] 0.0
    %4351 = vst [vmem:[#allocation2 + $0x3f8] sm:$0xff] 0.0
    %4352 = vst [vmem:[#allocation2 + $0x400] sm:$0xff] 0.0
    %4353 = vst [vmem:[#allocation2 + $0x408] sm:$0xff] 0.0
    %4354 = vst [vmem:[#allocation2 + $0x410] sm:$0xff] 0.0
    %4355 = vst [vmem:[#allocation2 + $0x418] sm:$0xff] 0.0
    %4356 = vst [vmem:[#allocation2 + $0x420] sm:$0xff] 0.0
    %4357 = vst [vmem:[#allocation2 + $0x428] sm:$0xff] 0.0
    %4358 = vst [vmem:[#allocation2 + $0x430] sm:$0xff] 0.0
    %4359 = vst [vmem:[#allocation2 + $0x438] sm:$0xff] 0.0
    %4360 = vst [vmem:[#allocation2 + $0x440] sm:$0xff] 0.0
    %4361 = vst [vmem:[#allocation2 + $0x448] sm:$0xff] 0.0
    %4362 = vst [vmem:[#allocation2 + $0x450] sm:$0xff] 0.0
    %4363 = vst [vmem:[#allocation2 + $0x458] sm:$0xff] 0.0
    %4364 = vst [vmem:[#allocation2 + $0x460] sm:$0xff] 0.0
    %4365 = vst [vmem:[#allocation2 + $0x468] sm:$0xff] 0.0
    %4366 = vst [vmem:[#allocation2 + $0x470] sm:$0xff] 0.0
    %4367 = vst [vmem:[#allocation2 + $0x478] sm:$0xff] 0.0
    %4368 = vst [vmem:[#allocation2 + $0x480] sm:$0xff] 0.0
    %4369 = vst [vmem:[#allocation2 + $0x488] sm:$0xf] 0.0
    %4370 = vst [vmem:[#allocation2 + $0x490] sm:$0xf] 0.0
    %4371 = vst [vmem:[#allocation2 + $0x498] sm:$0xf] 0.0
    %4372 = vst [vmem:[#allocation2 + $0x4a0] sm:$0xf] 0.0
    %4373 = vst [vmem:[#allocation2 + $0x4a8] sm:$0xf] 0.0
    %4374 = vst [vmem:[#allocation2 + $0x28] sm:$0xff] %v2910
    %4375 = vst [vmem:[#allocation2 + $0x30] sm:$0xff] %v2912
    %4376 = vst [vmem:[#allocation2 + $0x38] sm:$0xff] %v3554
    %4377 = vst [vmem:[#allocation2 + $0x40] sm:$0xff] %v3556
    %4378 = vst [vmem:[#allocation2 + $0x48] sm:$0xff] %v4123
    %4379 = vst [vmem:[#allocation2 + $0x50] sm:$0xff] %v2914
    %4380 = vst [vmem:[#allocation2 + $0x58] sm:$0xff] %v2916
    %4381 = vst [vmem:[#allocation2 + $0x60] sm:$0xff] %v3558
    %4382 = vst [vmem:[#allocation2 + $0x68] sm:$0xff] %v3560
    %4383 = vst [vmem:[#allocation2 + $0x70] sm:$0xff] %v4126
    %4384 = vst [vmem:[#allocation2 + $0x78] sm:$0xff] %v2920
    %4385 = vst [vmem:[#allocation2 + $0x80] sm:$0xff] %v2922
    %4386 = vst [vmem:[#allocation2 + $0x88] sm:$0xff] %v3564
    %4387 = vst [vmem:[#allocation2 + $0x90] sm:$0xff] %v3566
    %4388 = vst [vmem:[#allocation2 + $0x98] sm:$0xff] %v4131
    %4389 = vst [vmem:[#allocation2 + $0xa0] sm:$0xff] %v2924
    %4390 = vst [vmem:[#allocation2 + $0xa8] sm:$0xff] %v2926
    %4391 = vst [vmem:[#allocation2 + $0xb0] sm:$0xff] %v3568
    %4392 = vst [vmem:[#allocation2 + $0xb8] sm:$0xff] %v3570
    %4393 = vst [vmem:[#allocation2 + $0xc0] sm:$0xff] %v4134
    %4394 = vst [vmem:[#allocation2 + $0xc8] sm:$0xff] %v2930
    %4395 = vst [vmem:[#allocation2 + $0xd0] sm:$0xff] %v2932
    %4396 = vst [vmem:[#allocation2 + $0xd8] sm:$0xff] %v3574
    %4397 = vst [vmem:[#allocation2 + $0xe0] sm:$0xff] %v3576
    %4398 = vst [vmem:[#allocation2 + $0xe8] sm:$0xff] %v4139
    %4399 = vst [vmem:[#allocation2 + $0xf0] sm:$0xff] %v2934
    %4400 = vst [vmem:[#allocation2 + $0xf8] sm:$0xff] %v2936
    %4401 = vst [vmem:[#allocation2 + $0x100] sm:$0xff] %v3578
    %4402 = vst [vmem:[#allocation2 + $0x108] sm:$0xff] %v3580
    %4403 = vst [vmem:[#allocation2 + $0x110] sm:$0xff] %v4142
    %4404 = vst [vmem:[#allocation2 + $0x118] sm:$0xff] %v2940
    %4405 = vst [vmem:[#allocation2 + $0x120] sm:$0xff] %v2942
    %4406 = vst [vmem:[#allocation2 + $0x128] sm:$0xff] %v3584
    %4407 = vst [vmem:[#allocation2 + $0x130] sm:$0xff] %v3586
    %4408 = vst [vmem:[#allocation2 + $0x138] sm:$0xff] %v4147
    %4409 = vst [vmem:[#allocation2 + $0x140] sm:$0xff] %v2944
    %4410 = vst [vmem:[#allocation2 + $0x148] sm:$0xff] %v2946
    %4411 = vst [vmem:[#allocation2 + $0x150] sm:$0xff] %v3588
    %4412 = vst [vmem:[#allocation2 + $0x158] sm:$0xff] %v3590
    %4413 = vst [vmem:[#allocation2 + $0x160] sm:$0xff] %v4150
    %4414 = vst [vmem:[#allocation2 + $0x168] sm:$0xff] %v2950
    %4415 = vst [vmem:[#allocation2 + $0x170] sm:$0xff] %v2952
    %4416 = vst [vmem:[#allocation2 + $0x178] sm:$0xff] %v3594
    %4417 = vst [vmem:[#allocation2 + $0x180] sm:$0xff] %v3596
    %4418 = vst [vmem:[#allocation2 + $0x188] sm:$0xff] %v4155
    %4419 = vst [vmem:[#allocation2 + $0x190] sm:$0xff] %v2954
    %4420 = vst [vmem:[#allocation2 + $0x198] sm:$0xff] %v2956
    %4421 = vst [vmem:[#allocation2 + $0x1a0] sm:$0xff] %v3598
    %4422 = vst [vmem:[#allocation2 + $0x1a8] sm:$0xff] %v3600
    %4423 = vst [vmem:[#allocation2 + $0x1b0] sm:$0xff] %v4158
    %4424 = vst [vmem:[#allocation2 + $0x1b8] sm:$0xff] %v2960
    %4425 = vst [vmem:[#allocation2 + $0x1c0] sm:$0xff] %v2962
    %4426 = vst [vmem:[#allocation2 + $0x1c8] sm:$0xff] %v3604
    %4427 = vst [vmem:[#allocation2 + $0x1d0] sm:$0xff] %v3606
    %4428 = vst [vmem:[#allocation2 + $0x1d8] sm:$0xff] %v4163
    %4429 = vst [vmem:[#allocation2 + $0x1e0] sm:$0xff] %v2964
    %4430 = vst [vmem:[#allocation2 + $0x1e8] sm:$0xff] %v2966
    %4431 = vst [vmem:[#allocation2 + $0x1f0] sm:$0xff] %v3608
    %4432 = vst [vmem:[#allocation2 + $0x1f8] sm:$0xff] %v3610
    %4433 = vst [vmem:[#allocation2 + $0x200] sm:$0xff] %v4166
    %4434 = vst [vmem:[#allocation2 + $0x208] sm:$0xf] %v2970
    %4435 = vst [vmem:[#allocation2 + $0x210] sm:$0xf] %v2972
    %4436 = vst [vmem:[#allocation2 + $0x218] sm:$0xf] %v3614
    %4437 = vst [vmem:[#allocation2 + $0x220] sm:$0xf] %v3616
    %4438 = vst [vmem:[#allocation2 + $0x228] sm:$0xf] %v4171
    %vm4504 = vcmask 1043456
    %v4505 = vrot.slane %v2970, 4
    %v4506 = vrot.slane %v2974, 4
    %v4507 = vsel %vm4504, %v4505, %v4506
    %v4508 = vrot.slane %v2972, 4
    %v4509 = vrot.slane %v2976, 4
    %v4510 = vsel %vm4504, %v4508, %v4509
    %v4511 = vrot.slane %v3614, 4
    %v4512 = vrot.slane %v3618, 4
    %v4513 = vsel %vm4504, %v4511, %v4512
    %v4514 = vrot.slane %v3616, 4
    %v4515 = vrot.slane %v3620, 4
    %v4516 = vsel %vm4504, %v4514, %v4515
    %v4517 = vrot.slane %v4171, 4
    %v4518 = vrot.slane %v4174, 4
    %v4519 = vsel %vm4504, %v4517, %v4518
    %v4520 = vrot.slane %v2980, 4
    %v4521 = vsel %vm4504, %v4506, %v4520
    %v4522 = vrot.slane %v2982, 4
    %v4523 = vsel %vm4504, %v4509, %v4522
    %v4524 = vrot.slane %v3624, 4
    %v4525 = vsel %vm4504, %v4512, %v4524
    %v4526 = vrot.slane %v3626, 4
    %v4527 = vsel %vm4504, %v4515, %v4526
    %v4528 = vrot.slane %v4179, 4
    %v4529 = vsel %vm4504, %v4518, %v4528
    %v4530 = vrot.slane %v2984, 4
    %v4531 = vsel %vm4504, %v4520, %v4530
    %v4532 = vrot.slane %v2986, 4
    %v4533 = vsel %vm4504, %v4522, %v4532
    %v4534 = vrot.slane %v3628, 4
    %v4535 = vsel %vm4504, %v4524, %v4534
    %v4536 = vrot.slane %v3630, 4
    %v4537 = vsel %vm4504, %v4526, %v4536
    %v4538 = vrot.slane %v4182, 4
    %v4539 = vsel %vm4504, %v4528, %v4538
    %v4540 = vrot.slane %v2990, 4
    %v4541 = vsel %vm4504, %v4530, %v4540
    %v4542 = vrot.slane %v2992, 4
    %v4543 = vsel %vm4504, %v4532, %v4542
    %v4544 = vrot.slane %v3634, 4
    %v4545 = vsel %vm4504, %v4534, %v4544
    %v4546 = vrot.slane %v3636, 4
    %v4547 = vsel %vm4504, %v4536, %v4546
    %v4548 = vrot.slane %v4187, 4
    %v4549 = vsel %vm4504, %v4538, %v4548
    %v4550 = vrot.slane %v2994, 4
    %v4551 = vsel %vm4504, %v4540, %v4550
    %v4552 = vrot.slane %v2996, 4
    %v4553 = vsel %vm4504, %v4542, %v4552
    %v4554 = vrot.slane %v3638, 4
    %v4555 = vsel %vm4504, %v4544, %v4554
    %v4556 = vrot.slane %v3640, 4
    %v4557 = vsel %vm4504, %v4546, %v4556
    %v4558 = vrot.slane %v4190, 4
    %v4559 = vsel %vm4504, %v4548, %v4558
    %v4560 = vrot.slane %v3000, 4
    %v4561 = vsel %vm4504, %v4550, %v4560
    %v4562 = vrot.slane %v3002, 4
    %v4563 = vsel %vm4504, %v4552, %v4562
    %v4564 = vrot.slane %v3644, 4
    %v4565 = vsel %vm4504, %v4554, %v4564
    %v4566 = vrot.slane %v3646, 4
    %v4567 = vsel %vm4504, %v4556, %v4566
    %v4568 = vrot.slane %v4195, 4
    %v4569 = vsel %vm4504, %v4558, %v4568
    %v4570 = vrot.slane %v3004, 4
    %v4571 = vsel %vm4504, %v4560, %v4570
    %v4572 = vrot.slane %v3006, 4
    %v4573 = vsel %vm4504, %v4562, %v4572
    %v4574 = vrot.slane %v3648, 4
    %v4575 = vsel %vm4504, %v4564, %v4574
    %v4576 = vrot.slane %v3650, 4
    %v4577 = vsel %vm4504, %v4566, %v4576
    %v4578 = vrot.slane %v4198, 4
    %v4579 = vsel %vm4504, %v4568, %v4578
    %v4580 = vrot.slane %v3010, 4
    %v4581 = vsel %vm4504, %v4570, %v4580
    %v4582 = vrot.slane %v3012, 4
    %v4583 = vsel %vm4504, %v4572, %v4582
    %v4584 = vrot.slane %v3654, 4
    %v4585 = vsel %vm4504, %v4574, %v4584
    %v4586 = vrot.slane %v3656, 4
    %v4587 = vsel %vm4504, %v4576, %v4586
    %v4588 = vrot.slane %v4203, 4
    %v4589 = vsel %vm4504, %v4578, %v4588
    %v4590 = vrot.slane %v3014, 4
    %v4591 = vsel %vm4504, %v4580, %v4590
    %v4592 = vrot.slane %v3016, 4
    %v4593 = vsel %vm4504, %v4582, %v4592
    %v4594 = vrot.slane %v3658, 4
    %v4595 = vsel %vm4504, %v4584, %v4594
    %v4596 = vrot.slane %v3660, 4
    %v4597 = vsel %vm4504, %v4586, %v4596
    %v4598 = vrot.slane %v4206, 4
    %v4599 = vsel %vm4504, %v4588, %v4598
    %v4600 = vrot.slane %v3020, 4
    %v4601 = vsel %vm4504, %v4590, %v4600
    %v4602 = vrot.slane %v3022, 4
    %v4603 = vsel %vm4504, %v4592, %v4602
    %v4604 = vrot.slane %v3664, 4
    %v4605 = vsel %vm4504, %v4594, %v4604
    %v4606 = vrot.slane %v3666, 4
    %v4607 = vsel %vm4504, %v4596, %v4606
    %v4608 = vrot.slane %v4211, 4
    %v4609 = vsel %vm4504, %v4598, %v4608
    %v4610 = vrot.slane %v3024, 4
    %v4611 = vsel %vm4504, %v4600, %v4610
    %v4612 = vrot.slane %v3026, 4
    %v4613 = vsel %vm4504, %v4602, %v4612
    %v4614 = vrot.slane %v3668, 4
    %v4615 = vsel %vm4504, %v4604, %v4614
    %v4616 = vrot.slane %v3670, 4
    %v4617 = vsel %vm4504, %v4606, %v4616
    %v4618 = vrot.slane %v4214, 4
    %v4619 = vsel %vm4504, %v4608, %v4618
    %v4620 = vrot.slane %v3030, 4
    %v4621 = vsel %vm4504, %v4610, %v4620
    %v4622 = vrot.slane %v3032, 4
    %v4623 = vsel %vm4504, %v4612, %v4622
    %v4624 = vrot.slane %v3674, 4
    %v4625 = vsel %vm4504, %v4614, %v4624
    %v4626 = vrot.slane %v3676, 4
    %v4627 = vsel %vm4504, %v4616, %v4626
    %v4628 = vrot.slane %v4219, 4
    %v4629 = vsel %vm4504, %v4618, %v4628
    %s4695 = scalar_lea.vmem [#allocation2], 600
    %4696 = vst [vmem:[%s4695 + $0x28] sm:$0xff] %v4507
    %4697 = vst [vmem:[%s4695 + $0x30] sm:$0xff] %v4510
    %4698 = vst [vmem:[%s4695 + $0x38] sm:$0xff] %v4513
    %4699 = vst [vmem:[%s4695 + $0x40] sm:$0xff] %v4516
    %4700 = vst [vmem:[%s4695 + $0x48] sm:$0xff] %v4519
    %4701 = vst [vmem:[%s4695 + $0x50] sm:$0xff] %v4521
    %4702 = vst [vmem:[%s4695 + $0x58] sm:$0xff] %v4523
    %4703 = vst [vmem:[%s4695 + $0x60] sm:$0xff] %v4525
    %4704 = vst [vmem:[%s4695 + $0x68] sm:$0xff] %v4527
    %4705 = vst [vmem:[%s4695 + $0x70] sm:$0xff] %v4529
    %4706 = vst [vmem:[%s4695 + $0x78] sm:$0xff] %v4531
    %4707 = vst [vmem:[%s4695 + $0x80] sm:$0xff] %v4533
    %4708 = vst [vmem:[%s4695 + $0x88] sm:$0xff] %v4535
    %4709 = vst [vmem:[%s4695 + $0x90] sm:$0xff] %v4537
    %4710 = vst [vmem:[%s4695 + $0x98] sm:$0xff] %v4539
    %4711 = vst [vmem:[%s4695 + $0xa0] sm:$0xff] %v4541
    %4712 = vst [vmem:[%s4695 + $0xa8] sm:$0xff] %v4543
    %4713 = vst [vmem:[%s4695 + $0xb0] sm:$0xff] %v4545
    %4714 = vst [vmem:[%s4695 + $0xb8] sm:$0xff] %v4547
    %4715 = vst [vmem:[%s4695 + $0xc0] sm:$0xff] %v4549
    %4716 = vst [vmem:[%s4695 + $0xc8] sm:$0xff] %v4551
    %4717 = vst [vmem:[%s4695 + $0xd0] sm:$0xff] %v4553
    %4718 = vst [vmem:[%s4695 + $0xd8] sm:$0xff] %v4555
    %4719 = vst [vmem:[%s4695 + $0xe0] sm:$0xff] %v4557
    %4720 = vst [vmem:[%s4695 + $0xe8] sm:$0xff] %v4559
    %4721 = vst [vmem:[%s4695 + $0xf0] sm:$0xff] %v4561
    %4722 = vst [vmem:[%s4695 + $0xf8] sm:$0xff] %v4563
    %4723 = vst [vmem:[%s4695 + $0x100] sm:$0xff] %v4565
    %4724 = vst [vmem:[%s4695 + $0x108] sm:$0xff] %v4567
    %4725 = vst [vmem:[%s4695 + $0x110] sm:$0xff] %v4569
    %4726 = vst [vmem:[%s4695 + $0x118] sm:$0xff] %v4571
    %4727 = vst [vmem:[%s4695 + $0x120] sm:$0xff] %v4573
    %4728 = vst [vmem:[%s4695 + $0x128] sm:$0xff] %v4575
    %4729 = vst [vmem:[%s4695 + $0x130] sm:$0xff] %v4577
    %4730 = vst [vmem:[%s4695 + $0x138] sm:$0xff] %v4579
    %4731 = vst [vmem:[%s4695 + $0x140] sm:$0xff] %v4581
    %4732 = vst [vmem:[%s4695 + $0x148] sm:$0xff] %v4583
    %4733 = vst [vmem:[%s4695 + $0x150] sm:$0xff] %v4585
    %4734 = vst [vmem:[%s4695 + $0x158] sm:$0xff] %v4587
    %4735 = vst [vmem:[%s4695 + $0x160] sm:$0xff] %v4589
    %4736 = vst [vmem:[%s4695 + $0x168] sm:$0xff] %v4591
    %4737 = vst [vmem:[%s4695 + $0x170] sm:$0xff] %v4593
    %4738 = vst [vmem:[%s4695 + $0x178] sm:$0xff] %v4595
    %4739 = vst [vmem:[%s4695 + $0x180] sm:$0xff] %v4597
    %4740 = vst [vmem:[%s4695 + $0x188] sm:$0xff] %v4599
    %4741 = vst [vmem:[%s4695 + $0x190] sm:$0xff] %v4601
    %4742 = vst [vmem:[%s4695 + $0x198] sm:$0xff] %v4603
    %4743 = vst [vmem:[%s4695 + $0x1a0] sm:$0xff] %v4605
    %4744 = vst [vmem:[%s4695 + $0x1a8] sm:$0xff] %v4607
    %4745 = vst [vmem:[%s4695 + $0x1b0] sm:$0xff] %v4609
    %4746 = vst [vmem:[%s4695 + $0x1b8] sm:$0xff] %v4611
    %4747 = vst [vmem:[%s4695 + $0x1c0] sm:$0xff] %v4613
    %4748 = vst [vmem:[%s4695 + $0x1c8] sm:$0xff] %v4615
    %4749 = vst [vmem:[%s4695 + $0x1d0] sm:$0xff] %v4617
    %4750 = vst [vmem:[%s4695 + $0x1d8] sm:$0xff] %v4619
    %4751 = vst [vmem:[%s4695 + $0x1e0] sm:$0xff] %v4621
    %4752 = vst [vmem:[%s4695 + $0x1e8] sm:$0xff] %v4623
    %4753 = vst [vmem:[%s4695 + $0x1f0] sm:$0xff] %v4625
    %4754 = vst [vmem:[%s4695 + $0x1f8] sm:$0xff] %v4627
    %4755 = vst [vmem:[%s4695 + $0x200] sm:$0xff] %v4629
    %4756 = vst [vmem:[%s4695 + $0x208] sm:$0xf] %v4620
    %4757 = vst [vmem:[%s4695 + $0x210] sm:$0xf] %v4622
    %4758 = vst [vmem:[%s4695 + $0x218] sm:$0xf] %v4624
    %4759 = vst [vmem:[%s4695 + $0x220] sm:$0xf] %v4626
    %4760 = vst [vmem:[%s4695 + $0x228] sm:$0xf] %v4628
    %v4761 = vld [vmem:[#allocation2] sm:$0xc0]
    %v4762 = vld [vmem:[#allocation2 + $0x28] sm:$0xff]
    %v4763 = vld [vmem:[#allocation2 + $0x50] sm:$0xff]
    %v4764 = vld [vmem:[#allocation2 + $0x78] sm:$0xff]
    %v4765 = vld [vmem:[#allocation2 + $0xa0] sm:$0xff]
    %v4766 = vld [vmem:[#allocation2 + $0xc8] sm:$0xff]
    %v4767 = vld [vmem:[#allocation2 + $0xf0] sm:$0xff]
    %v4768 = vld [vmem:[#allocation2 + $0x118] sm:$0xff]
    %v4769 = vld [vmem:[#allocation2 + $0x140] sm:$0xff]
    %v4770 = vld [vmem:[#allocation2 + $0x168] sm:$0xff]
    %v4771 = vld [vmem:[#allocation2 + $0x190] sm:$0xff]
    %v4772 = vld [vmem:[#allocation2 + $0x1b8] sm:$0xff]
    %v4773 = vld [vmem:[#allocation2 + $0x1e0] sm:$0xff]
    %v4774 = vld [vmem:[#allocation2 + $0x208] sm:$0x3]
    %v4775 = vld [vmem:[#allocation2 + $0x8] sm:$0x80]
    %v4776 = vld [vmem:[#allocation2 + $0x30] sm:$0xff]
    %v4777 = vld [vmem:[#allocation2 + $0x58] sm:$0xff]
    %v4778 = vld [vmem:[#allocation2 + $0x80] sm:$0xff]
    %v4779 = vld [vmem:[#allocation2 + $0xa8] sm:$0xff]
    %v4780 = vld [vmem:[#allocation2 + $0xd0] sm:$0xff]
    %v4781 = vld [vmem:[#allocation2 + $0xf8] sm:$0xff]
    %v4782 = vld [vmem:[#allocation2 + $0x120] sm:$0xff]
    %v4783 = vld [vmem:[#allocation2 + $0x148] sm:$0xff]
    %v4784 = vld [vmem:[#allocation2 + $0x170] sm:$0xff]
    %v4785 = vld [vmem:[#allocation2 + $0x198] sm:$0xff]
    %v4786 = vld [vmem:[#allocation2 + $0x1c0] sm:$0xff]
    %v4787 = vld [vmem:[#allocation2 + $0x1e8] sm:$0xff]
    %v4788 = vld [vmem:[#allocation2 + $0x210] sm:$0x7]
    %vm4803 = vcmask 1046528
    %v4804 = vrot.slane %v4775, 1
    %v4805 = vrot.slane %v4776, 1
    %v4806 = vsel %vm4803, %v4804, %v4805
    %v4807 = vrot.slane %v4777, 1
    %v4808 = vsel %vm4803, %v4805, %v4807
    %v4809 = vrot.slane %v4778, 1
    %v4810 = vsel %vm4803, %v4807, %v4809
    %v4811 = vrot.slane %v4779, 1
    %v4812 = vsel %vm4803, %v4809, %v4811
    %v4813 = vrot.slane %v4780, 1
    %v4814 = vsel %vm4803, %v4811, %v4813
    %v4815 = vrot.slane %v4781, 1
    %v4816 = vsel %vm4803, %v4813, %v4815
    %v4817 = vrot.slane %v4782, 1
    %v4818 = vsel %vm4803, %v4815, %v4817
    %v4819 = vrot.slane %v4783, 1
    %v4820 = vsel %vm4803, %v4817, %v4819
    %v4821 = vrot.slane %v4784, 1
    %v4822 = vsel %vm4803, %v4819, %v4821
    %v4823 = vrot.slane %v4785, 1
    %v4824 = vsel %vm4803, %v4821, %v4823
    %v4825 = vrot.slane %v4786, 1
    %v4826 = vsel %vm4803, %v4823, %v4825
    %v4827 = vrot.slane %v4787, 1
    %v4828 = vsel %vm4803, %v4825, %v4827
    %v4829 = vrot.slane %v4788, 1
    %v4830 = vsel %vm4803, %v4827, %v4829
    %v4845 = vadd.f32 %v4761, %v4806
    %v4846 = vadd.f32 %v4762, %v4808
    %v4847 = vadd.f32 %v4763, %v4810
    %v4848 = vadd.f32 %v4764, %v4812
    %v4849 = vadd.f32 %v4765, %v4814
    %v4850 = vadd.f32 %v4766, %v4816
    %v4851 = vadd.f32 %v4767, %v4818
    %v4852 = vadd.f32 %v4768, %v4820
    %v4853 = vadd.f32 %v4769, %v4822
    %v4854 = vadd.f32 %v4770, %v4824
    %v4855 = vadd.f32 %v4771, %v4826
    %v4856 = vadd.f32 %v4772, %v4828
    %v4857 = vadd.f32 %v4773, %v4830
    %v4858 = vadd.f32 %v4774, %v4829
    %v4859 = vld [vmem:[#allocation2 + $0x38] sm:$0xff]
    %v4860 = vld [vmem:[#allocation2 + $0x60] sm:$0xff]
    %v4861 = vld [vmem:[#allocation2 + $0x88] sm:$0xff]
    %v4862 = vld [vmem:[#allocation2 + $0xb0] sm:$0xff]
    %v4863 = vld [vmem:[#allocation2 + $0xd8] sm:$0xff]
    %v4864 = vld [vmem:[#allocation2 + $0x100] sm:$0xff]
    %v4865 = vld [vmem:[#allocation2 + $0x128] sm:$0xff]
    %v4866 = vld [vmem:[#allocation2 + $0x150] sm:$0xff]
    %v4867 = vld [vmem:[#allocation2 + $0x178] sm:$0xff]
    %v4868 = vld [vmem:[#allocation2 + $0x1a0] sm:$0xff]
    %v4869 = vld [vmem:[#allocation2 + $0x1c8] sm:$0xff]
    %v4870 = vld [vmem:[#allocation2 + $0x1f0] sm:$0xff]
    %v4871 = vld [vmem:[#allocation2 + $0x218] sm:$0xf]
    %vm4885 = vcmask 1045504
    %v4886 = vrot.slane %v4859, 2
    %v4887 = vrot.slane %v4860, 2
    %v4888 = vsel %vm4885, %v4886, %v4887
    %v4889 = vrot.slane %v4861, 2
    %v4890 = vsel %vm4885, %v4887, %v4889
    %v4891 = vrot.slane %v4862, 2
    %v4892 = vsel %vm4885, %v4889, %v4891
    %v4893 = vrot.slane %v4863, 2
    %v4894 = vsel %vm4885, %v4891, %v4893
    %v4895 = vrot.slane %v4864, 2
    %v4896 = vsel %vm4885, %v4893, %v4895
    %v4897 = vrot.slane %v4865, 2
    %v4898 = vsel %vm4885, %v4895, %v4897
    %v4899 = vrot.slane %v4866, 2
    %v4900 = vsel %vm4885, %v4897, %v4899
    %v4901 = vrot.slane %v4867, 2
    %v4902 = vsel %vm4885, %v4899, %v4901
    %v4903 = vrot.slane %v4868, 2
    %v4904 = vsel %vm4885, %v4901, %v4903
    %v4905 = vrot.slane %v4869, 2
    %v4906 = vsel %vm4885, %v4903, %v4905
    %v4907 = vrot.slane %v4870, 2
    %v4908 = vsel %vm4885, %v4905, %v4907
    %v4909 = vrot.slane %v4871, 2
    %v4910 = vsel %vm4885, %v4907, %v4909
    %v4925 = vadd.f32 %v4845, %v4886
    %v4926 = vadd.f32 %v4846, %v4888
    %v4927 = vadd.f32 %v4847, %v4890
    %v4928 = vadd.f32 %v4848, %v4892
    %v4929 = vadd.f32 %v4849, %v4894
    %v4930 = vadd.f32 %v4850, %v4896
    %v4931 = vadd.f32 %v4851, %v4898
    %v4932 = vadd.f32 %v4852, %v4900
    %v4933 = vadd.f32 %v4853, %v4902
    %v4934 = vadd.f32 %v4854, %v4904
    %v4935 = vadd.f32 %v4855, %v4906
    %v4936 = vadd.f32 %v4856, %v4908
    %v4937 = vadd.f32 %v4857, %v4910
    %v4938 = vadd.f32 %v4858, %v4909
    %v4939 = vld [vmem:[#allocation2 + $0x40] sm:$0xfe]
    %v4940 = vld [vmem:[#allocation2 + $0x68] sm:$0xff]
    %v4941 = vld [vmem:[#allocation2 + $0x90] sm:$0xff]
    %v4942 = vld [vmem:[#allocation2 + $0xb8] sm:$0xff]
    %v4943 = vld [vmem:[#allocation2 + $0xe0] sm:$0xff]
    %v4944 = vld [vmem:[#allocation2 + $0x108] sm:$0xff]
    %v4945 = vld [vmem:[#allocation2 + $0x130] sm:$0xff]
    %v4946 = vld [vmem:[#allocation2 + $0x158] sm:$0xff]
    %v4947 = vld [vmem:[#allocation2 + $0x180] sm:$0xff]
    %v4948 = vld [vmem:[#allocation2 + $0x1a8] sm:$0xff]
    %v4949 = vld [vmem:[#allocation2 + $0x1d0] sm:$0xff]
    %v4950 = vld [vmem:[#allocation2 + $0x1f8] sm:$0xff]
    %v4951 = vld [vmem:[#allocation2 + $0x220] sm:$0x1f]
    %vm4965 = vcmask 1044480
    %v4966 = vrot.slane %v4939, 3
    %v4967 = vrot.slane %v4940, 3
    %v4968 = vsel %vm4965, %v4966, %v4967
    %v4969 = vrot.slane %v4941, 3
    %v4970 = vsel %vm4965, %v4967, %v4969
    %v4971 = vrot.slane %v4942, 3
    %v4972 = vsel %vm4965, %v4969, %v4971
    %v4973 = vrot.slane %v4943, 3
    %v4974 = vsel %vm4965, %v4971, %v4973
    %v4975 = vrot.slane %v4944, 3
    %v4976 = vsel %vm4965, %v4973, %v4975
    %v4977 = vrot.slane %v4945, 3
    %v4978 = vsel %vm4965, %v4975, %v4977
    %v4979 = vrot.slane %v4946, 3
    %v4980 = vsel %vm4965, %v4977, %v4979
    %v4981 = vrot.slane %v4947, 3
    %v4982 = vsel %vm4965, %v4979, %v4981
    %v4983 = vrot.slane %v4948, 3
    %v4984 = vsel %vm4965, %v4981, %v4983
    %v4985 = vrot.slane %v4949, 3
    %v4986 = vsel %vm4965, %v4983, %v4985
    %v4987 = vrot.slane %v4950, 3
    %v4988 = vsel %vm4965, %v4985, %v4987
    %v4989 = vrot.slane %v4951, 3
    %v4990 = vsel %vm4965, %v4987, %v4989
    %v5005 = vadd.f32 %v4925, %v4966
    %v5006 = vadd.f32 %v4926, %v4968
    %v5007 = vadd.f32 %v4927, %v4970
    %v5008 = vadd.f32 %v4928, %v4972
    %v5009 = vadd.f32 %v4929, %v4974
    %v5010 = vadd.f32 %v4930, %v4976
    %v5011 = vadd.f32 %v4931, %v4978
    %v5012 = vadd.f32 %v4932, %v4980
    %v5013 = vadd.f32 %v4933, %v4982
    %v5014 = vadd.f32 %v4934, %v4984
    %v5015 = vadd.f32 %v4935, %v4986
    %v5016 = vadd.f32 %v4936, %v4988
    %v5017 = vadd.f32 %v4937, %v4990
    %v5018 = vadd.f32 %v4938, %v4989
    %v5019 = vld [vmem:[#allocation2 + $0x48] sm:$0xfc]
    %v5020 = vld [vmem:[#allocation2 + $0x70] sm:$0xff]
    %v5021 = vld [vmem:[#allocation2 + $0x98] sm:$0xff]
    %v5022 = vld [vmem:[#allocation2 + $0xc0] sm:$0xff]
    %v5023 = vld [vmem:[#allocation2 + $0xe8] sm:$0xff]
    %v5024 = vld [vmem:[#allocation2 + $0x110] sm:$0xff]
    %v5025 = vld [vmem:[#allocation2 + $0x138] sm:$0xff]
    %v5026 = vld [vmem:[#allocation2 + $0x160] sm:$0xff]
    %v5027 = vld [vmem:[#allocation2 + $0x188] sm:$0xff]
    %v5028 = vld [vmem:[#allocation2 + $0x1b0] sm:$0xff]
    %v5029 = vld [vmem:[#allocation2 + $0x1d8] sm:$0xff]
    %v5030 = vld [vmem:[#allocation2 + $0x200] sm:$0xff]
    %v5031 = vld [vmem:[#allocation2 + $0x228] sm:$0x3f]
    %v5045 = vrot.slane %v5019, 4
    %v5046 = vrot.slane %v5020, 4
    %v5047 = vsel %vm4504, %v5045, %v5046
    %v5048 = vrot.slane %v5021, 4
    %v5049 = vsel %vm4504, %v5046, %v5048
    %v5050 = vrot.slane %v5022, 4
    %v5051 = vsel %vm4504, %v5048, %v5050
    %v5052 = vrot.slane %v5023, 4
    %v5053 = vsel %vm4504, %v5050, %v5052
    %v5054 = vrot.slane %v5024, 4
    %v5055 = vsel %vm4504, %v5052, %v5054
    %v5056 = vrot.slane %v5025, 4
    %v5057 = vsel %vm4504, %v5054, %v5056
    %v5058 = vrot.slane %v5026, 4
    %v5059 = vsel %vm4504, %v5056, %v5058
    %v5060 = vrot.slane %v5027, 4
    %v5061 = vsel %vm4504, %v5058, %v5060
    %v5062 = vrot.slane %v5028, 4
    %v5063 = vsel %vm4504, %v5060, %v5062
    %v5064 = vrot.slane %v5029, 4
    %v5065 = vsel %vm4504, %v5062, %v5064
    %v5066 = vrot.slane %v5030, 4
    %v5067 = vsel %vm4504, %v5064, %v5066
    %v5068 = vrot.slane %v5031, 4
    %v5069 = vsel %vm4504, %v5066, %v5068
    %v5084 = vadd.f32 %v5005, %v5045
    %v5085 = vadd.f32 %v5006, %v5047
    %v5086 = vadd.f32 %v5007, %v5049
    %v5087 = vadd.f32 %v5008, %v5051
    %v5088 = vadd.f32 %v5009, %v5053
    %v5089 = vadd.f32 %v5010, %v5055
    %v5090 = vadd.f32 %v5011, %v5057
    %v5091 = vadd.f32 %v5012, %v5059
    %v5092 = vadd.f32 %v5013, %v5061
    %v5093 = vadd.f32 %v5014, %v5063
    %v5094 = vadd.f32 %v5015, %v5065
    %v5095 = vadd.f32 %v5016, %v5067
    %v5096 = vadd.f32 %v5017, %v5069
    %v5097 = vadd.f32 %v5018, %v5068
    %vm5112 = vcmask 1041408
    %v5113 = vrot.slane %v5084, 6
    %v5114 = vrot.slane %v5085, 6
    %v5115 = vsel %vm5112, %v5113, %v5114
    %v5116 = vrot.slane %v5086, 6
    %v5117 = vsel %vm5112, %v5114, %v5116
    %v5118 = vrot.slane %v5087, 6
    %v5119 = vsel %vm5112, %v5116, %v5118
    %v5120 = vrot.slane %v5088, 6
    %v5121 = vsel %vm5112, %v5118, %v5120
    %v5122 = vrot.slane %v5089, 6
    %v5123 = vsel %vm5112, %v5120, %v5122
    %v5124 = vrot.slane %v5090, 6
    %v5125 = vsel %vm5112, %v5122, %v5124
    %v5126 = vrot.slane %v5091, 6
    %v5127 = vsel %vm5112, %v5124, %v5126
    %v5128 = vrot.slane %v5092, 6
    %v5129 = vsel %vm5112, %v5126, %v5128
    %v5130 = vrot.slane %v5093, 6
    %v5131 = vsel %vm5112, %v5128, %v5130
    %v5132 = vrot.slane %v5094, 6
    %v5133 = vsel %vm5112, %v5130, %v5132
    %v5134 = vrot.slane %v5095, 6
    %v5135 = vsel %vm5112, %v5132, %v5134
    %v5136 = vrot.slane %v5096, 6
    %v5137 = vsel %vm5112, %v5134, %v5136
    %v5138 = vrot.slane %v5097, 6
    %v5139 = vsel %vm5112, %v5136, %v5138
    %v5153 = vadd.f32 %v5115, %v5117
    %v5154 = vadd.f32 %v5153, %v5119
    %v5155 = vadd.f32 %v5154, %v5121
    %v5156 = vadd.f32 %v5155, %v5123
    %v5157 = vadd.f32 %v5156, %v5125
    %v5158 = vadd.f32 %v5157, %v5127
    %v5159 = vadd.f32 %v5158, %v5129
    %v5160 = vadd.f32 %v5159, %v5131
    %v5161 = vadd.f32 %v5160, %v5133
    %v5162 = vadd.f32 %v5161, %v5135
    %v5163 = vadd.f32 %v5162, %v5137
    %v5164 = vsel %vm4504, %v5139, 0.0
    %v5165 = vadd.f32 %v5163, %v5164
    %v5166 = vrot.slane %v5165, 4
    %v5167 = vadd.f32 %v5165, %v5166
    %v5168 = vrot.slane %v5167, 2
    %v5169 = vadd.f32 %v5167, %v5168
    %v5170 = vrot.slane %v5169, 1
    %v5171 = vadd.f32 %v5169, %v5170
    %v5172 = vadd.f32 %v5171, 0.0
    %v5173 = vmul.f32 %v5084, %v5084
    %v5174 = vmul.f32 %v5085, %v5085
    %v5175 = vmul.f32 %v5086, %v5086
    %v5176 = vmul.f32 %v5087, %v5087
    %v5177 = vmul.f32 %v5088, %v5088
    %v5178 = vmul.f32 %v5089, %v5089
    %v5179 = vmul.f32 %v5090, %v5090
    %v5180 = vmul.f32 %v5091, %v5091
    %v5181 = vmul.f32 %v5092, %v5092
    %v5182 = vmul.f32 %v5093, %v5093
    %v5183 = vmul.f32 %v5094, %v5094
    %v5184 = vmul.f32 %v5095, %v5095
    %v5185 = vmul.f32 %v5096, %v5096
    %v5186 = vmul.f32 %v5097, %v5097
    %v5201 = vrot.slane %v5173, 6
    %v5202 = vrot.slane %v5174, 6
    %v5203 = vsel %vm5112, %v5201, %v5202
    %v5204 = vrot.slane %v5175, 6
    %v5205 = vsel %vm5112, %v5202, %v5204
    %v5206 = vrot.slane %v5176, 6
    %v5207 = vsel %vm5112, %v5204, %v5206
    %v5208 = vrot.slane %v5177, 6
    %v5209 = vsel %vm5112, %v5206, %v5208
    %v5210 = vrot.slane %v5178, 6
    %v5211 = vsel %vm5112, %v5208, %v5210
    %v5212 = vrot.slane %v5179, 6
    %v5213 = vsel %vm5112, %v5210, %v5212
    %v5214 = vrot.slane %v5180, 6
    %v5215 = vsel %vm5112, %v5212, %v5214
    %v5216 = vrot.slane %v5181, 6
    %v5217 = vsel %vm5112, %v5214, %v5216
    %v5218 = vrot.slane %v5182, 6
    %v5219 = vsel %vm5112, %v5216, %v5218
    %v5220 = vrot.slane %v5183, 6
    %v5221 = vsel %vm5112, %v5218, %v5220
    %v5222 = vrot.slane %v5184, 6
    %v5223 = vsel %vm5112, %v5220, %v5222
    %v5224 = vrot.slane %v5185, 6
    %v5225 = vsel %vm5112, %v5222, %v5224
    %v5226 = vrot.slane %v5186, 6
    %v5227 = vsel %vm5112, %v5224, %v5226
    %v5241 = vadd.f32 %v5203, %v5205
    %v5242 = vadd.f32 %v5241, %v5207
    %v5243 = vadd.f32 %v5242, %v5209
    %v5244 = vadd.f32 %v5243, %v5211
    %v5245 = vadd.f32 %v5244, %v5213
    %v5246 = vadd.f32 %v5245, %v5215
    %v5247 = vadd.f32 %v5246, %v5217
    %v5248 = vadd.f32 %v5247, %v5219
    %v5249 = vadd.f32 %v5248, %v5221
    %v5250 = vadd.f32 %v5249, %v5223
    %v5251 = vadd.f32 %v5250, %v5225
    %v5252 = vsel %vm4504, %v5227, 0.0
    %v5253 = vadd.f32 %v5251, %v5252
    %v5254 = vrot.slane %v5253, 4
    %v5255 = vadd.f32 %v5253, %v5254
    %v5256 = vrot.slane %v5255, 2
    %v5257 = vadd.f32 %v5255, %v5256
    %v5258 = vrot.slane %v5257, 1
    %v5259 = vadd.f32 %v5257, %v5258
    %v5260 = vadd.f32 %v5259, 0.0
    %vm5261 = vcmask 1047558
    %v5262 = vsel %vm5261, %v5084, -inf
    %v5263 = vmax.f32 %v5262, %v5088
    %v5264 = vmax.f32 %v5085, %v5089
    %v5265 = vmax.f32 %v5086, %v5090
    %v5266 = vmax.f32 %v5087, %v5091
    %v5267 = vmax.f32 %v5263, %v5092
    %v5268 = vmax.f32 %v5264, %v5093
    %v5269 = vmax.f32 %v5265, %v5094
    %v5270 = vmax.f32 %v5266, %v5095
    %v5271 = vmax.f32 %v5267, %v5096
    %v5272 = vsel %vm5112, %v5097, -inf
    %v5273 = vmax.f32 %v5268, %v5272
    %v5274 = vmax.f32 %v5271, %v5273
    %v5275 = vmax.f32 %v5269, %v5270
    %v5276 = vmax.f32 %v5274, %v5275
    %v5277 = vrot.slane %v5276, 4
    %v5278 = vmax.f32 %v5276, %v5277
    %v5279 = vrot.slane %v5278, 2
    %v5280 = vmax.f32 %v5278, %v5279
    %v5281 = vrot.slane %v5280, 1
    %v5282 = vmax.f32 %v5280, %v5281
    %v5283 = vsel %vm5261, %v5084, inf
    %v5284 = vmin.f32 %v5283, %v5088
    %v5285 = vmin.f32 %v5085, %v5089
    %v5286 = vmin.f32 %v5086, %v5090
    %v5287 = vmin.f32 %v5087, %v5091
    %v5288 = vmin.f32 %v5284, %v5092
    %v5289 = vmin.f32 %v5285, %v5093
    %v5290 = vmin.f32 %v5286, %v5094
    %v5291 = vmin.f32 %v5287, %v5095
    %v5292 = vmin.f32 %v5288, %v5096
    %v5293 = vsel %vm5112, %v5097, inf
    %v5294 = vmin.f32 %v5289, %v5293
    %v5295 = vmin.f32 %v5292, %v5294
    %v5296 = vmin.f32 %v5290, %v5291
    %v5297 = vmin.f32 %v5295, %v5296
    %v5298 = vrot.slane %v5297, 4
    %v5299 = vmin.f32 %v5297, %v5298
    %v5300 = vrot.slane %v5299, 2
    %v5301 = vmin.f32 %v5299, %v5300
    %v5302 = vrot.slane %v5301, 1
    %v5303 = vmin.f32 %v5301, %v5302
    %v5304 = vld [vmem:[%s4695] sm:$0xc0]
    %v5305 = vld [vmem:[%s4695 + $0x28] sm:$0xff]
    %v5306 = vld [vmem:[%s4695 + $0x50] sm:$0xff]
    %v5307 = vld [vmem:[%s4695 + $0x78] sm:$0xff]
    %v5308 = vld [vmem:[%s4695 + $0xa0] sm:$0xff]
    %v5309 = vld [vmem:[%s4695 + $0xc8] sm:$0xff]
    %v5310 = vld [vmem:[%s4695 + $0xf0] sm:$0xff]
    %v5311 = vld [vmem:[%s4695 + $0x118] sm:$0xff]
    %v5312 = vld [vmem:[%s4695 + $0x140] sm:$0xff]
    %v5313 = vld [vmem:[%s4695 + $0x168] sm:$0xff]
    %v5314 = vld [vmem:[%s4695 + $0x190] sm:$0xff]
    %v5315 = vld [vmem:[%s4695 + $0x1b8] sm:$0xff]
    %v5316 = vld [vmem:[%s4695 + $0x1e0] sm:$0xff]
    %v5317 = vld [vmem:[%s4695 + $0x208] sm:$0x3]
    %v5318 = vld [vmem:[%s4695 + $0x8] sm:$0x80]
    %v5319 = vld [vmem:[%s4695 + $0x30] sm:$0xff]
    %v5320 = vld [vmem:[%s4695 + $0x58] sm:$0xff]
    %v5321 = vld [vmem:[%s4695 + $0x80] sm:$0xff]
    %v5322 = vld [vmem:[%s4695 + $0xa8] sm:$0xff]
    %v5323 = vld [vmem:[%s4695 + $0xd0] sm:$0xff]
    %v5324 = vld [vmem:[%s4695 + $0xf8] sm:$0xff]
    %v5325 = vld [vmem:[%s4695 + $0x120] sm:$0xff]
    %v5326 = vld [vmem:[%s4695 + $0x148] sm:$0xff]
    %v5327 = vld [vmem:[%s4695 + $0x170] sm:$0xff]
    %v5328 = vld [vmem:[%s4695 + $0x198] sm:$0xff]
    %v5329 = vld [vmem:[%s4695 + $0x1c0] sm:$0xff]
    %v5330 = vld [vmem:[%s4695 + $0x1e8] sm:$0xff]
    %v5331 = vld [vmem:[%s4695 + $0x210] sm:$0x7]
    %v5346 = vrot.slane %v5318, 1
    %v5347 = vrot.slane %v5319, 1
    %v5348 = vsel %vm4803, %v5346, %v5347
    %v5349 = vrot.slane %v5320, 1
    %v5350 = vsel %vm4803, %v5347, %v5349
    %v5351 = vrot.slane %v5321, 1
    %v5352 = vsel %vm4803, %v5349, %v5351
    %v5353 = vrot.slane %v5322, 1
    %v5354 = vsel %vm4803, %v5351, %v5353
    %v5355 = vrot.slane %v5323, 1
    %v5356 = vsel %vm4803, %v5353, %v5355
    %v5357 = vrot.slane %v5324, 1
    %v5358 = vsel %vm4803, %v5355, %v5357
    %v5359 = vrot.slane %v5325, 1
    %v5360 = vsel %vm4803, %v5357, %v5359
    %v5361 = vrot.slane %v5326, 1
    %v5362 = vsel %vm4803, %v5359, %v5361
    %v5363 = vrot.slane %v5327, 1
    %v5364 = vsel %vm4803, %v5361, %v5363
    %v5365 = vrot.slane %v5328, 1
    %v5366 = vsel %vm4803, %v5363, %v5365
    %v5367 = vrot.slane %v5329, 1
    %v5368 = vsel %vm4803, %v5365, %v5367
    %v5369 = vrot.slane %v5330, 1
    %v5370 = vsel %vm4803, %v5367, %v5369
    %v5371 = vrot.slane %v5331, 1
    %v5372 = vsel %vm4803, %v5369, %v5371
    %v5387 = vadd.f32 %v5304, %v5348
    %v5388 = vadd.f32 %v5305, %v5350
    %v5389 = vadd.f32 %v5306, %v5352
    %v5390 = vadd.f32 %v5307, %v5354
    %v5391 = vadd.f32 %v5308, %v5356
    %v5392 = vadd.f32 %v5309, %v5358
    %v5393 = vadd.f32 %v5310, %v5360
    %v5394 = vadd.f32 %v5311, %v5362
    %v5395 = vadd.f32 %v5312, %v5364
    %v5396 = vadd.f32 %v5313, %v5366
    %v5397 = vadd.f32 %v5314, %v5368
    %v5398 = vadd.f32 %v5315, %v5370
    %v5399 = vadd.f32 %v5316, %v5372
    %v5400 = vadd.f32 %v5317, %v5371
    %v5401 = vld [vmem:[%s4695 + $0x38] sm:$0xff]
    %v5402 = vld [vmem:[%s4695 + $0x60] sm:$0xff]
    %v5403 = vld [vmem:[%s4695 + $0x88] sm:$0xff]
    %v5404 = vld [vmem:[%s4695 + $0xb0] sm:$0xff]
    %v5405 = vld [vmem:[%s4695 + $0xd8] sm:$0xff]
    %v5406 = vld [vmem:[%s4695 + $0x100] sm:$0xff]
    %v5407 = vld [vmem:[%s4695 + $0x128] sm:$0xff]
    %v5408 = vld [vmem:[%s4695 + $0x150] sm:$0xff]
    %v5409 = vld [vmem:[%s4695 + $0x178] sm:$0xff]
    %v5410 = vld [vmem:[%s4695 + $0x1a0] sm:$0xff]
    %v5411 = vld [vmem:[%s4695 + $0x1c8] sm:$0xff]
    %v5412 = vld [vmem:[%s4695 + $0x1f0] sm:$0xff]
    %v5413 = vld [vmem:[%s4695 + $0x218] sm:$0xf]
    %v5427 = vrot.slane %v5401, 2
    %v5428 = vrot.slane %v5402, 2
    %v5429 = vsel %vm4885, %v5427, %v5428
    %v5430 = vrot.slane %v5403, 2
    %v5431 = vsel %vm4885, %v5428, %v5430
    %v5432 = vrot.slane %v5404, 2
    %v5433 = vsel %vm4885, %v5430, %v5432
    %v5434 = vrot.slane %v5405, 2
    %v5435 = vsel %vm4885, %v5432, %v5434
    %v5436 = vrot.slane %v5406, 2
    %v5437 = vsel %vm4885, %v5434, %v5436
    %v5438 = vrot.slane %v5407, 2
    %v5439 = vsel %vm4885, %v5436, %v5438
    %v5440 = vrot.slane %v5408, 2
    %v5441 = vsel %vm4885, %v5438, %v5440
    %v5442 = vrot.slane %v5409, 2
    %v5443 = vsel %vm4885, %v5440, %v5442
    %v5444 = vrot.slane %v5410, 2
    %v5445 = vsel %vm4885, %v5442, %v5444
    %v5446 = vrot.slane %v5411, 2
    %v5447 = vsel %vm4885, %v5444, %v5446
    %v5448 = vrot.slane %v5412, 2
    %v5449 = vsel %vm4885, %v5446, %v5448
    %v5450 = vrot.slane %v5413, 2
    %v5451 = vsel %vm4885, %v5448, %v5450
    %v5466 = vadd.f32 %v5387, %v5427
    %v5467 = vadd.f32 %v5388, %v5429
    %v5468 = vadd.f32 %v5389, %v5431
    %v5469 = vadd.f32 %v5390, %v5433
    %v5470 = vadd.f32 %v5391, %v5435
    %v5471 = vadd.f32 %v5392, %v5437
    %v5472 = vadd.f32 %v5393, %v5439
    %v5473 = vadd.f32 %v5394, %v5441
    %v5474 = vadd.f32 %v5395, %v5443
    %v5475 = vadd.f32 %v5396, %v5445
    %v5476 = vadd.f32 %v5397, %v5447
    %v5477 = vadd.f32 %v5398, %v5449
    %v5478 = vadd.f32 %v5399, %v5451
    %v5479 = vadd.f32 %v5400, %v5450
    %v5480 = vld [vmem:[%s4695 + $0x40] sm:$0xfe]
    %v5481 = vld [vmem:[%s4695 + $0x68] sm:$0xff]
    %v5482 = vld [vmem:[%s4695 + $0x90] sm:$0xff]
    %v5483 = vld [vmem:[%s4695 + $0xb8] sm:$0xff]
    %v5484 = vld [vmem:[%s4695 + $0xe0] sm:$0xff]
    %v5485 = vld [vmem:[%s4695 + $0x108] sm:$0xff]
    %v5486 = vld [vmem:[%s4695 + $0x130] sm:$0xff]
    %v5487 = vld [vmem:[%s4695 + $0x158] sm:$0xff]
    %v5488 = vld [vmem:[%s4695 + $0x180] sm:$0xff]
    %v5489 = vld [vmem:[%s4695 + $0x1a8] sm:$0xff]
    %v5490 = vld [vmem:[%s4695 + $0x1d0] sm:$0xff]
    %v5491 = vld [vmem:[%s4695 + $0x1f8] sm:$0xff]
    %v5492 = vld [vmem:[%s4695 + $0x220] sm:$0x1f]
    %v5506 = vrot.slane %v5480, 3
    %v5507 = vrot.slane %v5481, 3
    %v5508 = vsel %vm4965, %v5506, %v5507
    %v5509 = vrot.slane %v5482, 3
    %v5510 = vsel %vm4965, %v5507, %v5509
    %v5511 = vrot.slane %v5483, 3
    %v5512 = vsel %vm4965, %v5509, %v5511
    %v5513 = vrot.slane %v5484, 3
    %v5514 = vsel %vm4965, %v5511, %v5513
    %v5515 = vrot.slane %v5485, 3
    %v5516 = vsel %vm4965, %v5513, %v5515
    %v5517 = vrot.slane %v5486, 3
    %v5518 = vsel %vm4965, %v5515, %v5517
    %v5519 = vrot.slane %v5487, 3
    %v5520 = vsel %vm4965, %v5517, %v5519
    %v5521 = vrot.slane %v5488, 3
    %v5522 = vsel %vm4965, %v5519, %v5521
    %v5523 = vrot.slane %v5489, 3
    %v5524 = vsel %vm4965, %v5521, %v5523
    %v5525 = vrot.slane %v5490, 3
    %v5526 = vsel %vm4965, %v5523, %v5525
    %v5527 = vrot.slane %v5491, 3
    %v5528 = vsel %vm4965, %v5525, %v5527
    %v5529 = vrot.slane %v5492, 3
    %v5530 = vsel %vm4965, %v5527, %v5529
    %v5545 = vadd.f32 %v5466, %v5506
    %v5546 = vadd.f32 %v5467, %v5508
    %v5547 = vadd.f32 %v5468, %v5510
    %v5548 = vadd.f32 %v5469, %v5512
    %v5549 = vadd.f32 %v5470, %v5514
    %v5550 = vadd.f32 %v5471, %v5516
    %v5551 = vadd.f32 %v5472, %v5518
    %v5552 = vadd.f32 %v5473, %v5520
    %v5553 = vadd.f32 %v5474, %v5522
    %v5554 = vadd.f32 %v5475, %v5524
    %v5555 = vadd.f32 %v5476, %v5526
    %v5556 = vadd.f32 %v5477, %v5528
    %v5557 = vadd.f32 %v5478, %v5530
    %v5558 = vadd.f32 %v5479, %v5529
    %v5559 = vld [vmem:[%s4695 + $0x48] sm:$0xfc]
    %v5560 = vld [vmem:[%s4695 + $0x70] sm:$0xff]
    %v5561 = vld [vmem:[%s4695 + $0x98] sm:$0xff]
    %v5562 = vld [vmem:[%s4695 + $0xc0] sm:$0xff]
    %v5563 = vld [vmem:[%s4695 + $0xe8] sm:$0xff]
    %v5564 = vld [vmem:[%s4695 + $0x110] sm:$0xff]
    %v5565 = vld [vmem:[%s4695 + $0x138] sm:$0xff]
    %v5566 = vld [vmem:[%s4695 + $0x160] sm:$0xff]
    %v5567 = vld [vmem:[%s4695 + $0x188] sm:$0xff]
    %v5568 = vld [vmem:[%s4695 + $0x1b0] sm:$0xff]
    %v5569 = vld [vmem:[%s4695 + $0x1d8] sm:$0xff]
    %v5570 = vld [vmem:[%s4695 + $0x200] sm:$0xff]
    %v5571 = vld [vmem:[%s4695 + $0x228] sm:$0x3f]
    %v5585 = vrot.slane %v5559, 4
    %v5586 = vrot.slane %v5560, 4
    %v5587 = vsel %vm4504, %v5585, %v5586
    %v5588 = vrot.slane %v5561, 4
    %v5589 = vsel %vm4504, %v5586, %v5588
    %v5590 = vrot.slane %v5562, 4
    %v5591 = vsel %vm4504, %v5588, %v5590
    %v5592 = vrot.slane %v5563, 4
    %v5593 = vsel %vm4504, %v5590, %v5592
    %v5594 = vrot.slane %v5564, 4
    %v5595 = vsel %vm4504, %v5592, %v5594
    %v5596 = vrot.slane %v5565, 4
    %v5597 = vsel %vm4504, %v5594, %v5596
    %v5598 = vrot.slane %v5566, 4
    %v5599 = vsel %vm4504, %v5596, %v5598
    %v5600 = vrot.slane %v5567, 4
    %v5601 = vsel %vm4504, %v5598, %v5600
    %v5602 = vrot.slane %v5568, 4
    %v5603 = vsel %vm4504, %v5600, %v5602
    %v5604 = vrot.slane %v5569, 4
    %v5605 = vsel %vm4504, %v5602, %v5604
    %v5606 = vrot.slane %v5570, 4
    %v5607 = vsel %vm4504, %v5604, %v5606
    %v5608 = vrot.slane %v5571, 4
    %v5609 = vsel %vm4504, %v5606, %v5608
    %v5624 = vadd.f32 %v5545, %v5585
    %v5625 = vadd.f32 %v5546, %v5587
    %v5626 = vadd.f32 %v5547, %v5589
    %v5627 = vadd.f32 %v5548, %v5591
    %v5628 = vadd.f32 %v5549, %v5593
    %v5629 = vadd.f32 %v5550, %v5595
    %v5630 = vadd.f32 %v5551, %v5597
    %v5631 = vadd.f32 %v5552, %v5599
    %v5632 = vadd.f32 %v5553, %v5601
    %v5633 = vadd.f32 %v5554, %v5603
    %v5634 = vadd.f32 %v5555, %v5605
    %v5635 = vadd.f32 %v5556, %v5607
    %v5636 = vadd.f32 %v5557, %v5609
    %v5637 = vadd.f32 %v5558, %v5608
    %v5652 = vrot.slane %v5624, 6
    %v5653 = vrot.slane %v5625, 6
    %v5654 = vsel %vm5112, %v5652, %v5653
    %v5655 = vrot.slane %v5626, 6
    %v5656 = vsel %vm5112, %v5653, %v5655
    %v5657 = vrot.slane %v5627, 6
    %v5658 = vsel %vm5112, %v5655, %v5657
    %v5659 = vrot.slane %v5628, 6
    %v5660 = vsel %vm5112, %v5657, %v5659
    %v5661 = vrot.slane %v5629, 6
    %v5662 = vsel %vm5112, %v5659, %v5661
    %v5663 = vrot.slane %v5630, 6
    %v5664 = vsel %vm5112, %v5661, %v5663
    %v5665 = vrot.slane %v5631, 6
    %v5666 = vsel %vm5112, %v5663, %v5665
    %v5667 = vrot.slane %v5632, 6
    %v5668 = vsel %vm5112, %v5665, %v5667
    %v5669 = vrot.slane %v5633, 6
    %v5670 = vsel %vm5112, %v5667, %v5669
    %v5671 = vrot.slane %v5634, 6
    %v5672 = vsel %vm5112, %v5669, %v5671
    %v5673 = vrot.slane %v5635, 6
    %v5674 = vsel %vm5112, %v5671, %v5673
    %v5675 = vrot.slane %v5636, 6
    %v5676 = vsel %vm5112, %v5673, %v5675
    %v5677 = vrot.slane %v5637, 6
    %v5678 = vsel %vm5112, %v5675, %v5677
    %v5692 = vadd.f32 %v5654, %v5656
    %v5693 = vadd.f32 %v5692, %v5658
    %v5694 = vadd.f32 %v5693, %v5660
    %v5695 = vadd.f32 %v5694, %v5662
    %v5696 = vadd.f32 %v5695, %v5664
    %v5697 = vadd.f32 %v5696, %v5666
    %v5698 = vadd.f32 %v5697, %v5668
    %v5699 = vadd.f32 %v5698, %v5670
    %v5700 = vadd.f32 %v5699, %v5672
    %v5701 = vadd.f32 %v5700, %v5674
    %v5702 = vadd.f32 %v5701, %v5676
    %v5703 = vsel %vm4504, %v5678, 0.0
    %v5704 = vadd.f32 %v5702, %v5703
    %v5705 = vrot.slane %v5704, 4
    %v5706 = vadd.f32 %v5704, %v5705
    %v5707 = vrot.slane %v5706, 2
    %v5708 = vadd.f32 %v5706, %v5707
    %v5709 = vrot.slane %v5708, 1
    %v5710 = vadd.f32 %v5708, %v5709
    %v5711 = vadd.f32 %v5172, %v5710
    %v5712 = vmul.f32 %v5624, %v5624
    %v5713 = vmul.f32 %v5625, %v5625
    %v5714 = vmul.f32 %v5626, %v5626
    %v5715 = vmul.f32 %v5627, %v5627
    %v5716 = vmul.f32 %v5628, %v5628
    %v5717 = vmul.f32 %v5629, %v5629
    %v5718 = vmul.f32 %v5630, %v5630
    %v5719 = vmul.f32 %v5631, %v5631
    %v5720 = vmul.f32 %v5632, %v5632
    %v5721 = vmul.f32 %v5633, %v5633
    %v5722 = vmul.f32 %v5634, %v5634
    %v5723 = vmul.f32 %v5635, %v5635
    %v5724 = vmul.f32 %v5636, %v5636
    %v5725 = vmul.f32 %v5637, %v5637
    %v5740 = vrot.slane %v5712, 6
    %v5741 = vrot.slane %v5713, 6
    %v5742 = vsel %vm5112, %v5740, %v5741
    %v5743 = vrot.slane %v5714, 6
    %v5744 = vsel %vm5112, %v5741, %v5743
    %v5745 = vrot.slane %v5715, 6
    %v5746 = vsel %vm5112, %v5743, %v5745
    %v5747 = vrot.slane %v5716, 6
    %v5748 = vsel %vm5112, %v5745, %v5747
    %v5749 = vrot.slane %v5717, 6
    %v5750 = vsel %vm5112, %v5747, %v5749
    %v5751 = vrot.slane %v5718, 6
    %v5752 = vsel %vm5112, %v5749, %v5751
    %v5753 = vrot.slane %v5719, 6
    %v5754 = vsel %vm5112, %v5751, %v5753
    %v5755 = vrot.slane %v5720, 6
    %v5756 = vsel %vm5112, %v5753, %v5755
    %v5757 = vrot.slane %v5721, 6
    %v5758 = vsel %vm5112, %v5755, %v5757
    %v5759 = vrot.slane %v5722, 6
    %v5760 = vsel %vm5112, %v5757, %v5759
    %v5761 = vrot.slane %v5723, 6
    %v5762 = vsel %vm5112, %v5759, %v5761
    %v5763 = vrot.slane %v5724, 6
    %v5764 = vsel %vm5112, %v5761, %v5763
    %v5765 = vrot.slane %v5725, 6
    %v5766 = vsel %vm5112, %v5763, %v5765
    %v5780 = vadd.f32 %v5742, %v5744
    %v5781 = vadd.f32 %v5780, %v5746
    %v5782 = vadd.f32 %v5781, %v5748
    %v5783 = vadd.f32 %v5782, %v5750
    %v5784 = vadd.f32 %v5783, %v5752
    %v5785 = vadd.f32 %v5784, %v5754
    %v5786 = vadd.f32 %v5785, %v5756
    %v5787 = vadd.f32 %v5786, %v5758
    %v5788 = vadd.f32 %v5787, %v5760
    %v5789 = vadd.f32 %v5788, %v5762
    %v5790 = vadd.f32 %v5789, %v5764
    %v5791 = vsel %vm4504, %v5766, 0.0
    %v5792 = vadd.f32 %v5790, %v5791
    %v5793 = vrot.slane %v5792, 4
    %v5794 = vadd.f32 %v5792, %v5793
    %v5795 = vrot.slane %v5794, 2
    %v5796 = vadd.f32 %v5794, %v5795
    %v5797 = vrot.slane %v5796, 1
    %v5798 = vadd.f32 %v5796, %v5797
    %v5799 = vadd.f32 %v5260, %v5798
    %v5800 = vsel %vm5261, %v5624, -inf
    %v5801 = vmax.f32 %v5800, %v5628
    %v5802 = vmax.f32 %v5625, %v5629
    %v5803 = vmax.f32 %v5626, %v5630
    %v5804 = vmax.f32 %v5627, %v5631
    %v5805 = vmax.f32 %v5801, %v5632
    %v5806 = vmax.f32 %v5802, %v5633
    %v5807 = vmax.f32 %v5803, %v5634
    %v5808 = vmax.f32 %v5804, %v5635
    %v5809 = vmax.f32 %v5805, %v5636
    %v5810 = vsel %vm5112, %v5637, -inf
    %v5811 = vmax.f32 %v5806, %v5810
    %v5812 = vmax.f32 %v5809, %v5811
    %v5813 = vmax.f32 %v5807, %v5808
    %v5814 = vmax.f32 %v5812, %v5813
    %v5815 = vrot.slane %v5814, 4
    %v5816 = vmax.f32 %v5814, %v5815
    %v5817 = vrot.slane %v5816, 2
    %v5818 = vmax.f32 %v5816, %v5817
    %v5819 = vrot.slane %v5818, 1
    %v5820 = vmax.f32 %v5818, %v5819
    %v5821 = vsel %vm5261, %v5624, inf
    %v5822 = vmin.f32 %v5821, %v5628
    %v5823 = vmin.f32 %v5625, %v5629
    %v5824 = vmin.f32 %v5626, %v5630
    %v5825 = vmin.f32 %v5627, %v5631
    %v5826 = vmin.f32 %v5822, %v5632
    %v5827 = vmin.f32 %v5823, %v5633
    %v5828 = vmin.f32 %v5824, %v5634
    %v5829 = vmin.f32 %v5825, %v5635
    %v5830 = vmin.f32 %v5826, %v5636
    %v5831 = vsel %vm5112, %v5637, inf
    %v5832 = vmin.f32 %v5827, %v5831
    %v5833 = vmin.f32 %v5830, %v5832
    %v5834 = vmin.f32 %v5828, %v5829
    %v5835 = vmin.f32 %v5833, %v5834
    %v5836 = vrot.slane %v5835, 4
    %v5837 = vmin.f32 %v5835, %v5836
    %v5838 = vrot.slane %v5837, 2
    %v5839 = vmin.f32 %v5837, %v5838
    %v5840 = vrot.slane %v5839, 1
    %v5841 = vmin.f32 %v5839, %v5840
    %vm5842 = vcmask 1040384
    %v5843 = vsel %vm5842, %v5282, %v5820
    %v5844 = vsel %vm5842, %v5303, %v5841
    %v5845 = vmul.f32 %v5711, 0.005
    %v5846 = vmul.f32 %v5799, 0.005
    %v5847 = vmul.f32 %v5845, %v5845
    %v5848 = vsub.f32 %v5846, %v5847
    %v5849 = vmax.f32 %v5848, 0.0
    %v5850 = vld [vmem:[%s2] sm:$0x1]
    %v5851 = vadd.f32 %v5849, 1e-05
    %v5852 = vrsqrt.pop %v5851
    %v5853 = vmul.f32 %v5850, %v5852
    %v5854 = vld [vmem:[%s3] sm:$0x1]
    %v5855 = vmul.f32 %v5845, %v5853
    %v5856 = vsub.f32 %v5854, %v5855
    %vm5857 = vcmp.ge.f32.partialorder %v5853, 0.0
    %v5858 = vsel %vm5857, 1, 0
    %v5859 = vlaneseq
    %v5860 = vshrl.u32 %v5859, 7
    %v5861 = vsub.s32 0, %v5860
    %v5862 = vrot.slane %v5858, %v5861
    %vm5863 = vcmp.eq.s32.totalorder %v5862, 1
    %v5864 = vsel %vm5863, %v5843, %v5844
    %v5866 = vlaneseq
    %v5867 = vshrl.u32 %v5866, 7
    %v5868 = vsub.s32 0, %v5867
    %v5869 = vrot.slane %v5853, %v5868
    %v5871 = vmul.f32 %v5864, %v5869
    %v5873 = vlaneseq
    %v5874 = vshrl.u32 %v5873, 7
    %v5875 = vsub.s32 0, %v5874
    %v5876 = vrot.slane %v5856, %v5875
    %v5878 = vadd.f32 %v5871, %v5876
    %v5879 = vmax.f32 %v5878, 0.0
    %v5880 = vld [vmem:[%s4] sm:$0x1]
    %v5881 = vld [vmem:[%s4 + $0x1] sm:$0x1]
    %v5882 = vld [vmem:[%s5] sm:$0xff]
    %v5883 = vld [vmem:[%s5 + $0x8] sm:$0xff]
    %v5884 = vld [vmem:[%s5 + $0x10] sm:$0xff]
    %v5885 = vld [vmem:[%s5 + $0x18] sm:$0xff]
    %v5886 = vld [vmem:[%s5 + $0x20] sm:$0xf]
    %v5887 = vld [vmem:[%s5 + $0x28] sm:$0xf]
    %v5888 = vld [vmem:[%s5 + $0x30] sm:$0xf]
    %v5889 = vld [vmem:[%s5 + $0x38] sm:$0xf]
    %v5890 = vld [vmem:[%s6] sm:$0xff]
    %v5891 = vld [vmem:[%s6 + $0x8] sm:$0xff]
    %v5892 = vld [vmem:[%s6 + $0x10] sm:$0xff]
    %v5893 = vld [vmem:[%s6 + $0x18] sm:$0xff]
    %v5894 = vld [vmem:[%s6 + $0x20] sm:$0xff]
    %v5895 = vld [vmem:[%s6 + $0x28] sm:$0xff]
    %v5896 = vld [vmem:[%s6 + $0x30] sm:$0xff]
    %v5897 = vld [vmem:[%s6 + $0x38] sm:$0xff]
    %v5898 = vld [vmem:[%s6 + $0x40] sm:$0xff]
    %v5899 = vld [vmem:[%s6 + $0x48] sm:$0xff]
    %v5900 = vld [vmem:[%s6 + $0x50] sm:$0xff]
    %v5901 = vld [vmem:[%s6 + $0x58] sm:$0xff]
    %v5902 = vld [vmem:[%s6 + $0x60] sm:$0xff]
    %v5903 = vld [vmem:[%s6 + $0x68] sm:$0xff]
    %v5904 = vld [vmem:[%s6 + $0x70] sm:$0xff]
    %v5905 = vld [vmem:[%s6 + $0x78] sm:$0xff]
    %v5906 = vld [vmem:[%s6 + $0x80] sm:$0xff]
    %v5907 = vld [vmem:[%s6 + $0x88] sm:$0xff]
    %v5908 = vld [vmem:[%s6 + $0x90] sm:$0xff]
    %v5909 = vld [vmem:[%s6 + $0x98] sm:$0xff]
    %v5910 = vld [vmem:[%s6 + $0xa0] sm:$0xff]
    %v5911 = vld [vmem:[%s6 + $0xa8] sm:$0xff]
    %v5912 = vld [vmem:[%s6 + $0xb0] sm:$0xff]
    %v5913 = vld [vmem:[%s6 + $0xb8] sm:$0xff]
    %v5914 = vld [vmem:[%s6 + $0xc0] sm:$0xff]
    %v5915 = vld [vmem:[%s6 + $0xc8] sm:$0xff]
    %v5916 = vld [vmem:[%s6 + $0xd0] sm:$0xff]
    %v5917 = vld [vmem:[%s6 + $0xd8] sm:$0xff]
    %v5918 = vld [vmem:[%s6 + $0xe0] sm:$0xff]
    %v5919 = vld [vmem:[%s6 + $0xe8] sm:$0xff]
    %v5920 = vld [vmem:[%s6 + $0xf0] sm:$0xff]
    %v5921 = vld [vmem:[%s6 + $0xf8] sm:$0xff]
    %v5922 = vld [vmem:[%s6 + $0x100] sm:$0xff]
    %v5923 = vld [vmem:[%s6 + $0x108] sm:$0xff]
    %v5924 = vld [vmem:[%s6 + $0x110] sm:$0xff]
    %v5925 = vld [vmem:[%s6 + $0x118] sm:$0xff]
    %v5926 = vld [vmem:[%s6 + $0x120] sm:$0xff]
    %v5927 = vld [vmem:[%s6 + $0x128] sm:$0xff]
    %v5928 = vld [vmem:[%s6 + $0x130] sm:$0xff]
    %v5929 = vld [vmem:[%s6 + $0x138] sm:$0xff]
    %v5930 = vld [vmem:[%s6 + $0x140] sm:$0xff]
    %v5931 = vld [vmem:[%s6 + $0x148] sm:$0xff]
    %v5932 = vld [vmem:[%s6 + $0x150] sm:$0xff]
    %v5933 = vld [vmem:[%s6 + $0x158] sm:$0xff]
    %v5934 = vld [vmem:[%s6 + $0x160] sm:$0xff]
    %v5935 = vld [vmem:[%s6 + $0x168] sm:$0xff]
    %v5936 = vld [vmem:[%s6 + $0x170] sm:$0xff]
    %v5937 = vld [vmem:[%s6 + $0x178] sm:$0xff]
    %v5938 = vld [vmem:[%s6 + $0x180] sm:$0xff]
    %v5939 = vld [vmem:[%s6 + $0x188] sm:$0xff]
    %v5940 = vld [vmem:[%s6 + $0x190] sm:$0xff]
    %v5941 = vld [vmem:[%s6 + $0x198] sm:$0xff]
    %v5942 = vld [vmem:[%s6 + $0x1a0] sm:$0xff]
    %v5943 = vld [vmem:[%s6 + $0x1a8] sm:$0xff]
    %v5944 = vld [vmem:[%s6 + $0x1b0] sm:$0xff]
    %v5945 = vld [vmem:[%s6 + $0x1b8] sm:$0xff]
    %v5946 = vld [vmem:[%s6 + $0x1c0] sm:$0xff]
    %v5947 = vld [vmem:[%s6 + $0x1c8] sm:$0xff]
    %v5948 = vld [vmem:[%s6 + $0x1d0] sm:$0xff]
    %v5949 = vld [vmem:[%s6 + $0x1d8] sm:$0xff]
    %v5950 = vld [vmem:[%s6 + $0x1e0] sm:$0xff]
    %v5951 = vld [vmem:[%s6 + $0x1e8] sm:$0xff]
    %v5952 = vld [vmem:[%s6 + $0x1f0] sm:$0xff]
    %v5953 = vld [vmem:[%s6 + $0x1f8] sm:$0xff]
    %5954 = vmatprep.subr.mxu0 %v5951
    %5955 = vmatpush1.msra.mxu0 %v5950
    %5956 = vmatprep.subr.mxu0 %v5947
    %5957 = vmatpush1.msra.mxu0 %v5946
    %5958 = vmatprep.subr.mxu0 %v5943
    %5959 = vmatpush1.msra.mxu0 %v5942
    %5960 = vmatprep.subr.mxu0 %v5939
    %5961 = vmatpush1.msra.mxu0 %v5938
    %5962 = vmatprep.subr.mxu0 %v5935
    %5963 = vmatpush1.msra.mxu0 %v5934
    %5964 = vmatprep.subr.mxu0 %v5931
    %5965 = vmatpush1.msra.mxu0 %v5930
    %5966 = vmatprep.subr.mxu0 %v5927
    %5967 = vmatpush1.msra.mxu0 %v5926
    %5968 = vmatprep.subr.mxu0 %v5923
    %5969 = vmatpush1.msra.mxu0 %v5922
    %5970 = vmatprep.subr.mxu0 %v5919
    %5971 = vmatpush1.msra.mxu0 %v5918
    %5972 = vmatprep.subr.mxu0 %v5915
    %5973 = vmatpush1.msra.mxu0 %v5914
    %5974 = vmatprep.subr.mxu0 %v5911
    %5975 = vmatpush1.msra.mxu0 %v5910
    %5976 = vmatprep.subr.mxu0 %v5907
    %5977 = vmatpush1.msra.mxu0 %v5906
    %5978 = vmatprep.subr.mxu0 %v5903
    %5979 = vmatpush1.msra.mxu0 %v5902
    %5980 = vmatprep.subr.mxu0 %v5899
    %5981 = vmatpush1.msra.mxu0 %v5898
    %5982 = vmatprep.subr.mxu0 %v5895
    %5983 = vmatpush1.msra.mxu0 %v5894
    %5984 = vmatprep.subr.mxu0 %v5891
    %5985 = vmatpush1.msra.mxu0 %v5890
    %5986 = vmatprep.subr.mxu0 0.0
    %5987 = vmatpush2.msra.mxu0 0.0
    %5988 = vmatprep.subr.mxu0 0.0
    %5989 = vmatpush2.msra.mxu0 0.0
    %5990 = vmatprep.subr.mxu0 0.0
    %5991 = vmatpush2.msra.mxu0 0.0
    %5992 = vmatprep.subr.mxu0 0.0
    %5993 = vmatpush2.msra.mxu0 0.0
    %5994 = vmatprep.subr.mxu0 0.0
    %5995 = vmatpush2.msra.mxu0 0.0
    %5996 = vmatprep.subr.mxu0 0.0
    %5997 = vmatpush2.msra.mxu0 0.0
    %5998 = vmatprep.subr.mxu0 0.0
    %5999 = vmatpush2.msra.mxu0 0.0
    %6000 = vmatprep.subr.mxu0 0.0
    %6001 = vmatpush2.msra.mxu0 0.0
    %6002 = vmatprep.subr.mxu0 0.0
    %6003 = vmatpush2.msra.mxu0 0.0
    %6004 = vmatprep.subr.mxu0 0.0
    %6005 = vmatpush2.msra.mxu0 0.0
    %6006 = vmatprep.subr.mxu0 0.0
    %6007 = vmatpush2.msra.mxu0 0.0
    %6008 = vmatprep.subr.mxu0 0.0
    %6009 = vmatpush2.msra.mxu0 0.0
    %6010 = vmatprep.subr.mxu0 0.0
    %6011 = vmatpush2.msra.mxu0 0.0
    %6012 = vmatprep.subr.mxu0 0.0
    %6013 = vmatpush2.msra.mxu0 0.0
    %6014 = vmatprep.subr.mxu0 0.0
    %6015 = vmatpush2.msra.mxu0 0.0
    %6016 = vmatprep.subr.mxu0 0.0
    %6017 = vmatpush2.msra.mxu0 0.0
    %6018 = vmatprep.mubr.f32.mxu0 0.0
    %6019 = vmatmul.mubr.f32.gmra.mxu0 0.0
    %v6020 = vpop.f32.mrf.mxu0
    %v6021 = vadd.f32 0.0, %v6020
    %v6022 = vpop.f32.mrf.mxu0
    %v6023 = vadd.f32 0.0, %v6022
    %6024 = vdwg.mxu0
    %6025 = vmatprep.subr.mxu0 %v5953
    %6026 = vmatpush1.msra.mxu0 %v5952
    %6027 = vmatprep.subr.mxu0 %v5949
    %6028 = vmatpush1.msra.mxu0 %v5948
    %6029 = vmatprep.subr.mxu0 %v5945
    %6030 = vmatpush1.msra.mxu0 %v5944
    %6031 = vmatprep.subr.mxu0 %v5941
    %6032 = vmatpush1.msra.mxu0 %v5940
    %6033 = vmatprep.subr.mxu0 %v5937
    %6034 = vmatpush1.msra.mxu0 %v5936
    %6035 = vmatprep.subr.mxu0 %v5933
    %6036 = vmatpush1.msra.mxu0 %v5932
    %6037 = vmatprep.subr.mxu0 %v5929
    %6038 = vmatpush1.msra.mxu0 %v5928
    %6039 = vmatprep.subr.mxu0 %v5925
    %6040 = vmatpush1.msra.mxu0 %v5924
    %6041 = vmatprep.subr.mxu0 %v5921
    %6042 = vmatpush1.msra.mxu0 %v5920
    %6043 = vmatprep.subr.mxu0 %v5917
    %6044 = vmatpush1.msra.mxu0 %v5916
    %6045 = vmatprep.subr.mxu0 %v5913
    %6046 = vmatpush1.msra.mxu0 %v5912
    %6047 = vmatprep.subr.mxu0 %v5909
    %6048 = vmatpush1.msra.mxu0 %v5908
    %6049 = vmatprep.subr.mxu0 %v5905
    %6050 = vmatpush1.msra.mxu0 %v5904
    %6051 = vmatprep.subr.mxu0 %v5901
    %6052 = vmatpush1.msra.mxu0 %v5900
    %6053 = vmatprep.subr.mxu0 %v5897
    %6054 = vmatpush1.msra.mxu0 %v5896
    %6055 = vmatprep.subr.mxu0 %v5893
    %6056 = vmatpush1.msra.mxu0 %v5892
    %6057 = vmatprep.subr.mxu0 0.0
    %6058 = vmatpush2.msra.mxu0 0.0
    %6059 = vmatprep.subr.mxu0 0.0
    %6060 = vmatpush2.msra.mxu0 0.0
    %6061 = vmatprep.subr.mxu0 0.0
    %6062 = vmatpush2.msra.mxu0 0.0
    %6063 = vmatprep.subr.mxu0 0.0
    %6064 = vmatpush2.msra.mxu0 0.0
    %6065 = vmatprep.subr.mxu0 0.0
    %6066 = vmatpush2.msra.mxu0 0.0
    %6067 = vmatprep.subr.mxu0 0.0
    %6068 = vmatpush2.msra.mxu0 0.0
    %6069 = vmatprep.subr.mxu0 0.0
    %6070 = vmatpush2.msra.mxu0 0.0
    %6071 = vmatprep.subr.mxu0 0.0
    %6072 = vmatpush2.msra.mxu0 0.0
    %6073 = vmatprep.subr.mxu0 0.0
    %6074 = vmatpush2.msra.mxu0 0.0
    %6075 = vmatprep.subr.mxu0 0.0
    %6076 = vmatpush2.msra.mxu0 0.0
    %6077 = vmatprep.subr.mxu0 0.0
    %6078 = vmatpush2.msra.mxu0 0.0
    %6079 = vmatprep.subr.mxu0 0.0
    %6080 = vmatpush2.msra.mxu0 0.0
    %6081 = vmatprep.subr.mxu0 0.0
    %6082 = vmatpush2.msra.mxu0 0.0
    %6083 = vmatprep.subr.mxu0 0.0
    %6084 = vmatpush2.msra.mxu0 0.0
    %6085 = vmatprep.subr.mxu0 0.0
    %6086 = vmatpush2.msra.mxu0 0.0
    %6087 = vmatprep.subr.mxu0 0.0
    %6088 = vmatpush2.msra.mxu0 0.0
    %6089 = vmatprep.mubr.f32.mxu0 0.0
    %6090 = vmatmul.mubr.f32.gmra.mxu0 0.0
    %v6091 = vpop.f32.mrf.mxu0
    %v6092 = vadd.f32 0.0, %v6091
    %v6093 = vpop.f32.mrf.mxu0
    %v6094 = vadd.f32 0.0, %v6093
    %6095 = vdwg.mxu0
    %v6098 = vcombine.low %v5880, %v5881
    %v6100 = vunpack.c.l.s4 1966171168
    %v6101 = vunpack.c.0.s8 %v6100
    %v6102 = vlaneseq
    %v6103 = vshrl.u32 %v6102, 7
    %v6104 = vsub.s32 %v6101, %v6103
    %v6105 = vrot.slane %v6098, %v6104
    %v6107 = vunpack.c.l.s4 1966171168
    %v6108 = vunpack.c.0.s8 %v6107
    %v6109 = vlaneseq
    %v6110 = vshrl.u32 %v6109, 7
    %v6111 = vsub.s32 %v6108, %v6110
    %v6112 = vrot.slane %v6105, %v6111
    %vm6113 = vcmask 97280
    %v6114 = vsel %vm6113, %v6112, 0
    %v6117 = vsel %vm4504, %v5886, 0
    %v6120 = vsel %vm4504, %v5887, 0
    %v6123 = vsel %vm4504, %v5888, 0
    %v6126 = vsel %vm4504, %v5889, 0
    %6128 = vmatprep.subr.mxu0 0.0
    %6129 = vmatpush1.msra.mxu0 0.0
    %6130 = vmatprep.subr.mxu0 0.0
    %6131 = vmatpush1.msra.mxu0 0.0
    %6132 = vmatprep.subr.mxu0 0.0
    %6133 = vmatpush1.msra.mxu0 0.0
    %6134 = vmatprep.subr.mxu0 0.0
    %6135 = vmatpush1.msra.mxu0 0.0
    %6136 = vmatprep.subr.mxu0 0.0
    %6137 = vmatpush1.msra.mxu0 0.0
    %6138 = vmatprep.subr.mxu0 0.0
    %6139 = vmatpush1.msra.mxu0 0.0
    %6140 = vmatprep.subr.mxu0 0.0
    %6141 = vmatpush1.msra.mxu0 0.0
    %6142 = vmatprep.subr.mxu0 0.0
    %6143 = vmatpush1.msra.mxu0 0.0
    %6144 = vmatprep.subr.mxu0 0.0
    %6145 = vmatpush1.msra.mxu0 0.0
    %6146 = vmatprep.subr.mxu0 0.0
    %6147 = vmatpush1.msra.mxu0 0.0
    %6148 = vmatprep.subr.mxu0 0.0
    %6149 = vmatpush1.msra.mxu0 0.0
    %6150 = vmatprep.subr.mxu0 0.0
    %6151 = vmatpush1.msra.mxu0 0.0
    %6152 = vmatprep.subr.mxu0 0.0
    %6153 = vmatpush1.msra.mxu0 0.0
    %6154 = vmatprep.subr.mxu0 0.0
    %6155 = vmatpush1.msra.mxu0 0.0
    %6156 = vmatprep.subr.mxu0 %v6120
    %6157 = vmatpush1.msra.mxu0 %v6117
    %6158 = vmatprep.subr.mxu0 %v5883
    %6159 = vmatpush1.msra.mxu0 %v5882
    %6160 = vmatprep.subr.mxu0 0.0
    %6161 = vmatpush2.msra.mxu0 0.0
    %6162 = vmatprep.subr.mxu0 0.0
    %6163 = vmatpush2.msra.mxu0 0.0
    %6164 = vmatprep.subr.mxu0 0.0
    %6165 = vmatpush2.msra.mxu0 0.0
    %6166 = vmatprep.subr.mxu0 0.0
    %6167 = vmatpush2.msra.mxu0 0.0
    %6168 = vmatprep.subr.mxu0 0.0
    %6169 = vmatpush2.msra.mxu0 0.0
    %6170 = vmatprep.subr.mxu0 0.0
    %6171 = vmatpush2.msra.mxu0 0.0
    %6172 = vmatprep.subr.mxu0 0.0
    %6173 = vmatpush2.msra.mxu0 0.0
    %6174 = vmatprep.subr.mxu0 0.0
    %6175 = vmatpush2.msra.mxu0 0.0
    %6176 = vmatprep.subr.mxu0 0.0
    %6177 = vmatpush2.msra.mxu0 0.0
    %6178 = vmatprep.subr.mxu0 0.0
    %6179 = vmatpush2.msra.mxu0 0.0
    %6180 = vmatprep.subr.mxu0 0.0
    %6181 = vmatpush2.msra.mxu0 0.0
    %6182 = vmatprep.subr.mxu0 0.0
    %6183 = vmatpush2.msra.mxu0 0.0
    %6184 = vmatprep.subr.mxu0 0.0
    %6185 = vmatpush2.msra.mxu0 0.0
    %6186 = vmatprep.subr.mxu0 0.0
    %6187 = vmatpush2.msra.mxu0 0.0
    %6188 = vmatprep.subr.mxu0 0.0
    %6189 = vmatpush2.msra.mxu0 0.0
    %6190 = vmatprep.subr.mxu0 0.0
    %6191 = vmatpush2.msra.mxu0 0.0
    %6192 = vmatprep.mubr.f32.mxu0 0.0
    %6193 = vmatmul.mubr.f32.gmra.mxu0 %v6114
    %v6194 = vpop.f32.mrf.mxu0
    %v6195 = vadd.f32 %v6021, %v6194
    %v6196 = vpop.f32.mrf.mxu0
    %v6197 = vadd.f32 %v6023, %v6196
    %6198 = vdwg.mxu0
    %6199 = vmatprep.subr.mxu0 0.0
    %6200 = vmatpush1.msra.mxu0 0.0
    %6201 = vmatprep.subr.mxu0 0.0
    %6202 = vmatpush1.msra.mxu0 0.0
    %6203 = vmatprep.subr.mxu0 0.0
    %6204 = vmatpush1.msra.mxu0 0.0
    %6205 = vmatprep.subr.mxu0 0.0
    %6206 = vmatpush1.msra.mxu0 0.0
    %6207 = vmatprep.subr.mxu0 0.0
    %6208 = vmatpush1.msra.mxu0 0.0
    %6209 = vmatprep.subr.mxu0 0.0
    %6210 = vmatpush1.msra.mxu0 0.0
    %6211 = vmatprep.subr.mxu0 0.0
    %6212 = vmatpush1.msra.mxu0 0.0
    %6213 = vmatprep.subr.mxu0 0.0
    %6214 = vmatpush1.msra.mxu0 0.0
    %6215 = vmatprep.subr.mxu0 0.0
    %6216 = vmatpush1.msra.mxu0 0.0
    %6217 = vmatprep.subr.mxu0 0.0
    %6218 = vmatpush1.msra.mxu0 0.0
    %6219 = vmatprep.subr.mxu0 0.0
    %6220 = vmatpush1.msra.mxu0 0.0
    %6221 = vmatprep.subr.mxu0 0.0
    %6222 = vmatpush1.msra.mxu0 0.0
    %6223 = vmatprep.subr.mxu0 0.0
    %6224 = vmatpush1.msra.mxu0 0.0
    %6225 = vmatprep.subr.mxu0 0.0
    %6226 = vmatpush1.msra.mxu0 0.0
    %6227 = vmatprep.subr.mxu0 %v6126
    %6228 = vmatpush1.msra.mxu0 %v6123
    %6229 = vmatprep.subr.mxu0 %v5885
    %6230 = vmatpush1.msra.mxu0 %v5884
    %6231 = vmatprep.subr.mxu0 0.0
    %6232 = vmatpush2.msra.mxu0 0.0
    %6233 = vmatprep.subr.mxu0 0.0
    %6234 = vmatpush2.msra.mxu0 0.0
    %6235 = vmatprep.subr.mxu0 0.0
    %6236 = vmatpush2.msra.mxu0 0.0
    %6237 = vmatprep.subr.mxu0 0.0
    %6238 = vmatpush2.msra.mxu0 0.0
    %6239 = vmatprep.subr.mxu0 0.0
    %6240 = vmatpush2.msra.mxu0 0.0
    %6241 = vmatprep.subr.mxu0 0.0
    %6242 = vmatpush2.msra.mxu0 0.0
    %6243 = vmatprep.subr.mxu0 0.0
    %6244 = vmatpush2.msra.mxu0 0.0
    %6245 = vmatprep.subr.mxu0 0.0
    %6246 = vmatpush2.msra.mxu0 0.0
    %6247 = vmatprep.subr.mxu0 0.0
    %6248 = vmatpush2.msra.mxu0 0.0
    %6249 = vmatprep.subr.mxu0 0.0
    %6250 = vmatpush2.msra.mxu0 0.0
    %6251 = vmatprep.subr.mxu0 0.0
    %6252 = vmatpush2.msra.mxu0 0.0
    %6253 = vmatprep.subr.mxu0 0.0
    %6254 = vmatpush2.msra.mxu0 0.0
    %6255 = vmatprep.subr.mxu0 0.0
    %6256 = vmatpush2.msra.mxu0 0.0
    %6257 = vmatprep.subr.mxu0 0.0
    %6258 = vmatpush2.msra.mxu0 0.0
    %6259 = vmatprep.subr.mxu0 0.0
    %6260 = vmatpush2.msra.mxu0 0.0
    %6261 = vmatprep.subr.mxu0 0.0
    %6262 = vmatpush2.msra.mxu0 0.0
    %6263 = vmatprep.mubr.f32.mxu0 0.0
    %6264 = vmatmul.mubr.f32.gmra.mxu0 %v6114
    %v6265 = vpop.f32.mrf.mxu0
    %v6266 = vadd.f32 %v6092, %v6265
    %v6267 = vpop.f32.mrf.mxu0
    %v6268 = vadd.f32 %v6094, %v6267
    %6269 = vdwg.mxu0
    %v6270 = vld [vmem:[%s7] sm:$0xf]
    %v6272 = vlaneseq
    %v6273 = vshrl.u32 %v6272, 7
    %v6274 = vsub.s32 0, %v6273
    %v6275 = vrot.slane %v6270, %v6274
    %v6276 = vlaneseq
    %v6277 = vshrl.u32 %v6276, 7
    %v6278 = vsub.s32 1, %v6277
    %v6279 = vrot.slane %v6270, %v6278
    %v6280 = vlaneseq
    %v6281 = vshrl.u32 %v6280, 7
    %v6282 = vsub.s32 2, %v6281
    %v6283 = vrot.slane %v6270, %v6282
    %v6284 = vlaneseq
    %v6285 = vshrl.u32 %v6284, 7
    %v6286 = vsub.s32 3, %v6285
    %v6287 = vrot.slane %v6270, %v6286
    %v6292 = vadd.f32 %v6195, %v6275
    %v6293 = vadd.f32 %v6197, %v6279
    %v6294 = vadd.f32 %v6266, %v6283
    %v6295 = vadd.f32 %v6268, %v6287
    %v6296 = vxor.u32 %v6292, 2147483648
    %v6297 = vmul.f32 %v6296, 1.442695
    %v6298 = vpow.pop %v6297
    %v6299 = vadd.f32 %v6298, 1.0
    %v6300 = vrcp.pop %v6299
    %v6301 = vmul.f32 1.0, %v6300
    %v6302 = vxor.u32 %v6293, 2147483648
    %v6303 = vmul.f32 %v6302, 1.442695
    %v6304 = vpow.pop %v6303
    %v6305 = vadd.f32 %v6304, 1.0
    %v6306 = vrcp.pop %v6305
    %v6307 = vmul.f32 1.0, %v6306
    %v6308 = vtanh.pop %v6294
    %v6309 = vxor.u32 %v6295, 2147483648
    %v6310 = vmul.f32 %v6309, 1.442695
    %v6311 = vpow.pop %v6310
    %v6312 = vadd.f32 %v6311, 1.0
    %v6313 = vrcp.pop %v6312
    %v6314 = vmul.f32 1.0, %v6313
    %v6315 = vmul.f32 %v6307, 0.0
    %v6316 = vmul.f32 %v6301, %v6308
    %v6317 = vadd.f32 %v6315, %v6316
    %v6318 = vtanh.pop %v6317
    %v6319 = vmul.f32 %v6314, %v6318
    %v6320 = vld [vmem:[%s8] sm:$0x1]
    %v6321 = vmul.f32 %v6320, 1.442695
    %v6322 = vpow.pop %v6321
    %vm6323 = vcmask 8192
    %v6324 = vsel %vm6323, %v6322, 0.0
    %6325 = vadd.xlane.f32.xlu0 %v6324
    %v6326 = vpop.xlane.xlu0 %6325
    %v6327 = vrcp.pop %v6326
    %v6328 = vmul.f32 %v6322, %v6327
    %v6330 = vlaneseq
    %v6331 = vshrl.u32 %v6330, 7
    %v6332 = vsub.s32 0, %v6331
    %v6333 = vrot.slane %v6328, %v6332
    %6334 = vset.pattern.permute.xlu0 0
    %6335 = vperm.xlu0 %6334, %v6333
    %v6336 = vpop.permute.xlu0 %6335
    %v6338 = vmul.f32 %v5879, %v6336
    %6339 = vset.pattern.permute.xlu0 1
    %6340 = vperm.xlu0 %6339, %v6333
    %v6341 = vpop.permute.xlu0 %6340
    %v6343 = vmul.f32 %v6319, %v6341
    %v6344 = vadd.f32 %v6338, %v6343
    %v6345 = vld [vmem:[%s9] sm:$0xff]
    %v6346 = vld [vmem:[%s9 + $0x8] sm:$0xff]
    %v6347 = vld [vmem:[%s9 + $0x10] sm:$0xff]
    %v6348 = vld [vmem:[%s9 + $0x18] sm:$0xff]
    %v6349 = vld [vmem:[%s9 + $0x20] sm:$0xff]
    %v6350 = vld [vmem:[%s9 + $0x28] sm:$0xff]
    %v6351 = vld [vmem:[%s9 + $0x30] sm:$0xff]
    %v6352 = vld [vmem:[%s9 + $0x38] sm:$0xff]
    %v6353 = vld [vmem:[%s9 + $0x40] sm:$0xff]
    %v6354 = vld [vmem:[%s9 + $0x48] sm:$0xff]
    %v6355 = vld [vmem:[%s9 + $0x50] sm:$0xff]
    %v6356 = vld [vmem:[%s9 + $0x58] sm:$0xff]
    %v6357 = vld [vmem:[%s9 + $0x60] sm:$0xff]
    %v6358 = vld [vmem:[%s9 + $0x68] sm:$0xff]
    %v6359 = vld [vmem:[%s9 + $0x70] sm:$0xff]
    %v6360 = vld [vmem:[%s9 + $0x78] sm:$0xff]
    %v6361 = vld [vmem:[%s10] sm:$0x1]
    %v6363 = vlaneseq
    %v6364 = vshrl.u32 %v6363, 7
    %v6365 = vsub.s32 0, %v6364
    %v6366 = vrot.slane %v6361, %v6365
    %6368 = vmatprep.subr.mxu0 0.0
    %6369 = vmatpush1.msra.mxu0 %v6360
    %6370 = vmatprep.subr.mxu0 0.0
    %6371 = vmatpush1.msra.mxu0 %v6359
    %6372 = vmatprep.subr.mxu0 0.0
    %6373 = vmatpush1.msra.mxu0 %v6358
    %6374 = vmatprep.subr.mxu0 0.0
    %6375 = vmatpush1.msra.mxu0 %v6357
    %6376 = vmatprep.subr.mxu0 0.0
    %6377 = vmatpush1.msra.mxu0 %v6356
    %6378 = vmatprep.subr.mxu0 0.0
    %6379 = vmatpush1.msra.mxu0 %v6355
    %6380 = vmatprep.subr.mxu0 0.0
    %6381 = vmatpush1.msra.mxu0 %v6354
    %6382 = vmatprep.subr.mxu0 0.0
    %6383 = vmatpush1.msra.mxu0 %v6353
    %6384 = vmatprep.subr.mxu0 0.0
    %6385 = vmatpush1.msra.mxu0 %v6352
    %6386 = vmatprep.subr.mxu0 0.0
    %6387 = vmatpush1.msra.mxu0 %v6351
    %6388 = vmatprep.subr.mxu0 0.0
    %6389 = vmatpush1.msra.mxu0 %v6350
    %6390 = vmatprep.subr.mxu0 0.0
    %6391 = vmatpush1.msra.mxu0 %v6349
    %6392 = vmatprep.subr.mxu0 0.0
    %6393 = vmatpush1.msra.mxu0 %v6348
    %6394 = vmatprep.subr.mxu0 0.0
    %6395 = vmatpush1.msra.mxu0 %v6347
    %6396 = vmatprep.subr.mxu0 0.0
    %6397 = vmatpush1.msra.mxu0 %v6346
    %6398 = vmatprep.subr.mxu0 0.0
    %6399 = vmatpush1.msra.mxu0 %v6345
    %6400 = vmatprep.subr.mxu0 0.0
    %6401 = vmatpush2.msra.mxu0 0.0
    %6402 = vmatprep.subr.mxu0 0.0
    %6403 = vmatpush2.msra.mxu0 0.0
    %6404 = vmatprep.subr.mxu0 0.0
    %6405 = vmatpush2.msra.mxu0 0.0
    %6406 = vmatprep.subr.mxu0 0.0
    %6407 = vmatpush2.msra.mxu0 0.0
    %6408 = vmatprep.subr.mxu0 0.0
    %6409 = vmatpush2.msra.mxu0 0.0
    %6410 = vmatprep.subr.mxu0 0.0
    %6411 = vmatpush2.msra.mxu0 0.0
    %6412 = vmatprep.subr.mxu0 0.0
    %6413 = vmatpush2.msra.mxu0 0.0
    %6414 = vmatprep.subr.mxu0 0.0
    %6415 = vmatpush2.msra.mxu0 0.0
    %6416 = vmatprep.subr.mxu0 0.0
    %6417 = vmatpush2.msra.mxu0 0.0
    %6418 = vmatprep.subr.mxu0 0.0
    %6419 = vmatpush2.msra.mxu0 0.0
    %6420 = vmatprep.subr.mxu0 0.0
    %6421 = vmatpush2.msra.mxu0 0.0
    %6422 = vmatprep.subr.mxu0 0.0
    %6423 = vmatpush2.msra.mxu0 0.0
    %6424 = vmatprep.subr.mxu0 0.0
    %6425 = vmatpush2.msra.mxu0 0.0
    %6426 = vmatprep.subr.mxu0 0.0
    %6427 = vmatpush2.msra.mxu0 0.0
    %6428 = vmatprep.subr.mxu0 0.0
    %6429 = vmatpush2.msra.mxu0 0.0
    %6430 = vmatprep.subr.mxu0 0.0
    %6431 = vmatpush2.msra.mxu0 0.0
    %6432 = vmatprep.mubr.f32.mxu0 0.0
    %6433 = vmatmul.mubr.f32.gmra.mxu0 %v6344
    %v6434 = vpop.f32.mrf.mxu0
    %v6435 = vadd.f32 %v6366, %v6434
    %v6436 = vpop.f32.mrf.mxu0
    %6437 = vdwg.mxu0
    %vm6438 = vcmask 9216
    %6439 = vst.msk [vmem:[#allocation3] sm:$0x3] %vm6438, %v6435
    // Predicated region
    $region46: #{debd_forward.1} parent=1 // pred_check
      _
    $region47: #{debd_forward.1} parent=1 // pred_check_branch
      %6441 = sbr.rel (0) target = $region49
    $region48: #{debd_forward.1} parent=1 // pred_region
      %s6443 = ssub.s32 32, 32
      %6444 = vsyncadd [#allocation4], %s6443
      %s6446 = sshll.u32 [#allocation3], 4
      %s6447 = int_to_ptr.vmem [resolvable:$true] %s6446
      %6449 = dma.vmem_to_hbm [thread:$0]  %s6447, 32, %s11, [#allocation4]
    $region49: #{debd_forward.1} parent=1 // pred_fallthru
      _
    // Predicated region
    $region50: #{debd_forward.1} parent=1 // pred_check
      _
    $region51: #{debd_forward.1} parent=1 // pred_check_branch
      %6451 = sbr.rel (0) target = $region53
    $region52: #{debd_forward.1} parent=1 // pred_region
      %6452 = dma.done [#allocation4], 32
    $region53: #{debd_forward.1} parent=1 // pred_fallthru
      _
    %6453 = vsyncpa [#allocation4], 1

</llo_original>
